<compile_context>
chip_gen: v6e
topology: v6e:2x2x1
jax: 0.10.0
libtpu: 0.0.40
codegen_flags: <defaults>
</compile_context>

<pallas_src>
import math

import numpy as np
import jax
import jax.numpy as jnp
from jax.experimental import pallas as pl
from jax.experimental.pallas import tpu as pltpu


def _gelu_tanh(x):
    # matches torch.nn.GELU(approximate='tanh')
    return jax.nn.gelu(x, approximate=True)


# ----------------------------- Pallas kernel ------------------------------ #
def cfm_kernel(ts_ref, mel_ref, noi_ref, enc_ref, f0_ref, step_ref,
               wpre_ref, bpre_ref, we1_ref, be1_ref, we2_ref, be2_ref,
               wf1_ref, bf1_ref, wf2_ref, bf2_ref,
               wp1_ref, bp1_ref, wp2_ref, bp2_ref,
               flow_ref, pred_ref):
    b = pl.program_id(0)                  # batch index of this grid step
    t = ts_ref[b]                         # per-batch timestep, scalar from SMEM

    mel = mel_ref[0]                      # [M, Tt] f32  (time on the lane axis)
    noise = noi_ref[0]                    # [M, Tt] f32

    noised = t * mel + (1.0 - t) * noise
    flow_ref[0] = mel - noise             # lane-dense, full-width f32 store

    bf16 = jnp.bfloat16

    # prenet: Conv1d(M -> S, k=1) + GELU
    h = _gelu_tanh(
        jnp.dot(wpre_ref[...], noised.astype(bf16),
                preferred_element_type=jnp.float32) + bpre_ref[...])       # [S, Tt]

    # encoding_ffn: Conv1d(M -> 4S) + GELU + Conv1d(4S -> S)
    # (encodings already streamed in bf16)
    e = _gelu_tanh(
        jnp.dot(we1_ref[...], enc_ref[0],
                preferred_element_type=jnp.float32) + be1_ref[...])        # [4S, Tt]
    e = jnp.dot(we2_ref[...], e.astype(bf16),
                preferred_element_type=jnp.float32) + be2_ref[...]         # [S, Tt]

    # f0_ffn: Linear(1 -> 4S) is an outer product -> broadcast multiply (f32, VPU)
    f = _gelu_tanh(wf1_ref[...] * f0_ref[0] + bf1_ref[...])                # [4S, Tt]
    f = jnp.dot(wf2_ref[...], f.astype(bf16),
                preferred_element_type=jnp.float32) + bf2_ref[...]         # [S, Tt]

    # sum of branches; per-batch step embedding broadcast over time
    x = h + e + f + step_ref[b]                                            # [S, Tt]

    # TODO(synk): FFT_Block transformer stack (self/cross attention, layernorm)
    # is not defined in the provided reference source, so it is omitted here.

    # projection: Conv1d(S -> S) + GELU + Conv1d(S -> M, zero-initialized)
    y = _gelu_tanh(
        jnp.dot(wp1_ref[...], x.astype(bf16),
                preferred_element_type=jnp.float32) + bp1_ref[...])
    y = jnp.dot(wp2_ref[...], y.astype(bf16),
                preferred_element_type=jnp.float32) + bp2_ref[...]
    pred_ref[0] = y


# ------------------------------ JAX wrapper ------------------------------- #
def _step_ffn(params, timesteps):
    """Step_Embedding + step MLP. Tiny per-batch work -> plain-JAX glue."""
    S = params["W_s2"].shape[1]
    half = S // 2
    div_term = jnp.exp(jnp.arange(half, dtype=jnp.float32)
                       * -(math.log(10000.0) / (half - 1)))
    se = timesteps[:, None] * div_term[None]
    se = jnp.concatenate([jnp.sin(se), jnp.cos(se)], axis=1)          # [B, S]
    sv = _gelu_tanh(se @ params["W_s1"] + params["b_s1"])
    sv = sv @ params["W_s2"] + params["b_s2"]                          # [B, S]
    return sv


def _vmem_capacity_bytes():
    """Physical VMEM of the local chip (fallback: assume v7x's 64 MiB)."""
    try:
        return int(pltpu.get_tpu_info().vmem_capacity_bytes)
    except Exception:
        return 64 * 2**20


def _need_bytes(tile_t, M, S, w_bytes):
    """Rough VMEM footprint for one grid step (double-buffered streams)."""
    stream = (3 * M * tile_t * 4          # mel, noise in (f32) + f0 ~negligible
              + M * tile_t * 2            # encodings (bf16)
              + tile_t * 4                # f0 (f32)
              + 2 * M * tile_t * 4)       # flows + prediction outputs (f32)
    inter = (M + 13 * S) * tile_t * 4     # live f32 intermediates (with slack)
    return 2 * stream + 2 * w_bytes + (3 * inter) // 2


def cfm_forward(params, encodings, f0s, mels, timesteps, noises, *, tile_t=2048):
    """encodings/mels/noises: [B, M, T] (NCW).  f0s: [B, T].  timesteps: [B]."""
    B, M, T = mels.shape
    S = params["W_p1"].shape[0]

    f32, bf16 = jnp.float32, jnp.bfloat16
    mels = mels.astype(f32)
    noises = noises.astype(f32)
    encodings = encodings.astype(bf16)          # streamed as bf16 (dot input only)
    f0_3d = f0s.astype(f32)[:, None, :]         # [B, 1, T]
    ts = timesteps.astype(f32)                  # [B]
    step_vec = _step_ffn(params, ts)[:, :, None].astype(f32)   # [B, S, 1]

    # matmul weights in bf16; biases / elementwise-only weights stay f32
    weights = [
        params["W_pre"].astype(bf16), params["b_pre"],
        params["W_e1"].astype(bf16), params["b_e1"],
        params["W_e2"].astype(bf16), params["b_e2"],
        params["W_f1"], params["b_f1"],
        params["W_f2"].astype(bf16), params["b_f2"],
        params["W_p1"].astype(bf16), params["b_p1"],
        params["W_p2"].astype(bf16), params["b_p2"],
    ]
    w_bytes = (sum(int(np.prod(w.shape)) * w.dtype.itemsize for w in weights)
               + int(np.prod(step_vec.shape)) * 4)

    # --- generation-aware tile / VMEM budget ------------------------------- #
    vmem_cap = int(0.75 * _vmem_capacity_bytes())   # 48 MiB v7x, ~96 MiB v5e/v6e
    tile_t = min(tile_t, T)
    # candidate tile widths: divisors of T that are lane-aligned (or full T)
    cands = sorted({c for c in range(128, T + 1, 128) if T % c == 0} | {T},
                   reverse=True)
    chosen = None
    for c in cands:
        if c <= tile_t and _need_bytes(c, M, S, w_bytes) <= vmem_cap:
            chosen = c
            break
    if chosen is None:
        chosen = cands[-1]
    tile_t = chosen
    assert T % tile_t == 0 and (tile_t % 128 == 0 or tile_t == T)
    nt = T // tile_t

    need = _need_bytes(tile_t, M, S, w_bytes)
    vmem_limit = int(min(vmem_cap, max(32 * 2**20, 2 * need)))

    # --- block specs -------------------------------------------------------- #
    def data_map(b, i):
        return (b, 0, i)

    def full_spec(arr):
        nd = arr.ndim
        return pl.BlockSpec(arr.shape, lambda b, i, _nd=nd: (0,) * _nd)

    in_specs = [
        pl.BlockSpec(memory_space=pltpu.MemorySpace.SMEM),     # timesteps [B]
        pl.BlockSpec((1, M, tile_t), data_map),                # mels (f32)
        pl.BlockSpec((1, M, tile_t), data_map),                # noises (f32)
        pl.BlockSpec((1, M, tile_t), data_map),                # encodings (bf16)
        pl.BlockSpec((1, 1, tile_t), data_map),                # f0 (f32)
        full_spec(step_vec),                                   # step emb [B,S,1], fetched once
    ] + [full_spec(w) for w in weights]

    out_specs = [
        pl.BlockSpec((1, M, tile_t), data_map),                # flows
        pl.BlockSpec((1, M, tile_t), data_map),                # prediction flows
    ]

    flows, preds = pl.pallas_call(
        cfm_kernel,
        out_shape=(jax.ShapeDtypeStruct((B, M, T), f32),
                   jax.ShapeDtypeStruct((B, M, T), f32)),
        grid_spec=pltpu.PrefetchScalarGridSpec(
            num_scalar_prefetch=0,
            grid=(B, nt),
            in_specs=in_specs,
            out_specs=out_specs,
        ),
        compiler_params=pltpu.CompilerParams(
            dimension_semantics=("parallel", "parallel"),
            vmem_limit_bytes=vmem_limit),
    )(ts, mels, noises, encodings, f0_3d, step_vec, *weights)

    # already in PyTorch NCW layout [B, Mel_d, T] — no output transpose
    return flows, preds


# --------------------------- pure-JAX reference --------------------------- #
def cfm_reference(params, encodings, f0s, mels, timesteps, noises):
    bf16 = jnp.bfloat16

    def mm(w, x):   # w: [O, I] (conv1d k=1 weight), x: [B, I, T] -> [B, O, T]
        return jnp.einsum("oi,bit->bot", w.astype(bf16), x.astype(bf16),
                          preferred_element_type=jnp.float32)

    t = timesteps[:, None, None]
    noised = t * mels + (1.0 - t) * noises
    flows = mels - noises
    h = _gelu_tanh(mm(params["W_pre"], noised) + params["b_pre"][None])
    e = _gelu_tanh(mm(params["W_e1"], encodings) + params["b_e1"][None])
    e = mm(params["W_e2"], e) + params["b_e2"][None]
    f = _gelu_tanh(params["W_f1"][None] * f0s[:, None, :] + params["b_f1"][None])
    f = mm(params["W_f2"], f) + params["b_f2"][None]
    sv = _step_ffn(params, timesteps)[:, :, None]
    x = h + e + f + sv
    y = _gelu_tanh(mm(params["W_p1"], x) + params["b_p1"][None])
    y = mm(params["W_p2"], y) + params["b_p2"][None]
    return flows, y


# ----------------------------- params / main ------------------------------ #
def init_params(key, n_mel, size):
    H = 4 * size
    ks = jax.random.split(key, 20)

    def w(i, out_c, in_c):   # Conv1d(k=1) / Linear weight in [out, in] layout
        return jax.random.normal(ks[i], (out_c, in_c), jnp.float32) / math.sqrt(in_c)

    def b(i, out_c):
        return 0.01 * jax.random.normal(ks[i], (out_c, 1), jnp.float32)

    return {
        "W_pre": w(0, size, n_mel), "b_pre": b(1, size),
        "W_e1": w(2, H, n_mel), "b_e1": b(3, H),
        "W_e2": w(4, size, H), "b_e2": b(5, size),
        "W_f1": w(6, H, 1), "b_f1": b(7, H),
        "W_f2": w(8, size, H), "b_f2": b(9, size),
        # step MLP (wrapper-side, channels-last) in [in, out] layout
        "W_s1": jax.random.normal(ks[10], (size, H), jnp.float32) / math.sqrt(size),
        "b_s1": 0.01 * jax.random.normal(ks[11], (H,), jnp.float32),
        "W_s2": jax.random.normal(ks[12], (H, size), jnp.float32) / math.sqrt(H),
        "b_s2": 0.01 * jax.random.normal(ks[13], (size,), jnp.float32),
        "W_p1": w(14, size, size), "b_p1": b(15, size),
        # final projection uses w_init_gain='zero' in the module -> zeros
        "W_p2": jnp.zeros((n_mel, size), jnp.float32),
        "b_p2": jnp.zeros((n_mel, 1), jnp.float32),
    }


if __name__ == "__main__":
    B, N_MEL, T, SIZE = 2, 16, 512, 32   # Enc_d == N_Mel (encoding_ffn in_channels)

    key = jax.random.PRNGKey(0)
    keys = jax.random.split(key, 8)
    encodings = jax.random.normal(keys[0], (B, N_MEL, T), jnp.float32)
    mels = jax.random.normal(keys[1], (B, N_MEL, T), jnp.float32)
    f0s = 200.0 * jax.random.uniform(keys[2], (B, T), jnp.float32)
    noises = jax.random.normal(keys[3], (B, N_MEL, T), jnp.float32)    # randn_like(mels)
    timesteps = jax.random.uniform(keys[4], (B,), jnp.float32)         # 'Uniform' scheduler
    params = init_params(keys[5], N_MEL, SIZE)

    flows, pred_flows = cfm_forward(params, encodings, f0s, mels, timesteps, noises)
    jax.block_until_ready((flows, pred_flows))

    # correctness check against a pure-JAX reference (zero-initialized output
    # projection makes preds trivially zero, so also validate once with a
    # non-zero W_p2 to exercise the full matmul path numerically).
    rf, rp = cfm_reference(params, encodings, f0s, mels, timesteps, noises)
    params_chk = dict(params)
    params_chk["W_p2"] = (jax.random.normal(keys[6], (N_MEL, SIZE), jnp.float32)
                          / math.sqrt(SIZE))
    f2, p2 = cfm_forward(params_chk, encodings, f0s, mels, timesteps, noises)
    rf2, rp2 = cfm_reference(params_chk, encodings, f0s, mels, timesteps, noises)
    jax.block_until_ready((f2, p2))

    assert flows.shape == (B, N_MEL, T) and pred_flows.shape == (B, N_MEL, T)
    assert np.allclose(np.asarray(flows), np.asarray(rf), atol=2e-2, rtol=2e-2)
    assert np.allclose(np.asarray(pred_flows), np.asarray(rp), atol=2e-2, rtol=2e-2)
    assert np.allclose(np.asarray(f2), np.asarray(rf2), atol=2e-2, rtol=2e-2)
    assert np.allclose(np.asarray(p2), np.asarray(rp2), atol=2e-2, rtol=2e-2)

    print("KERNEL_OK")
</pallas_src>

<mosaic_0001>
module attributes {stable_mosaic.version = 11 : i64} {
  func.func @cfm_kernel(%arg0: i32, %arg1: i32, %arg2: memref<2xf32, #tpu.memory_space<smem>>, %arg3: memref<1x16x512xf32, #tpu.memory_space<vmem>>, %arg4: memref<1x16x512xf32, #tpu.memory_space<vmem>>, %arg5: memref<1x16x512xbf16, #tpu.memory_space<vmem>>, %arg6: memref<1x1x512xf32, #tpu.memory_space<vmem>>, %arg7: memref<2x32x1xf32, #tpu.memory_space<vmem>>, %arg8: memref<32x16xbf16, #tpu.memory_space<vmem>>, %arg9: memref<32x1xf32, #tpu.memory_space<vmem>>, %arg10: memref<128x16xbf16, #tpu.memory_space<vmem>>, %arg11: memref<128x1xf32, #tpu.memory_space<vmem>>, %arg12: memref<32x128xbf16, #tpu.memory_space<vmem>>, %arg13: memref<32x1xf32, #tpu.memory_space<vmem>>, %arg14: memref<128x1xf32, #tpu.memory_space<vmem>>, %arg15: memref<128x1xf32, #tpu.memory_space<vmem>>, %arg16: memref<32x128xbf16, #tpu.memory_space<vmem>>, %arg17: memref<32x1xf32, #tpu.memory_space<vmem>>, %arg18: memref<32x32xbf16, #tpu.memory_space<vmem>>, %arg19: memref<32x1xf32, #tpu.memory_space<vmem>>, %arg20: memref<16x32xbf16, #tpu.memory_space<vmem>>, %arg21: memref<16x1xf32, #tpu.memory_space<vmem>>, %arg22: memref<1x16x512xf32, #tpu.memory_space<vmem>>, %arg23: memref<1x16x512xf32, #tpu.memory_space<vmem>>) attributes {dimension_semantics = [#tpu.dimension_semantics<parallel>, #tpu.dimension_semantics<parallel>], iteration_bounds = array<i64: 2, 1>, scalar_prefetch = 0 : i64, scratch_operands = 0 : i64, tpu.core_type = #tpu.core_type<tc>, window_params = [{transform_indices = @transform_0, window_bounds = array<i64: 2>}, {transform_indices = @transform_1, window_bounds = array<i64: 1, 16, 512>}, {transform_indices = @transform_2, window_bounds = array<i64: 1, 16, 512>}, {transform_indices = @transform_3, window_bounds = array<i64: 1, 16, 512>}, {transform_indices = @transform_4, window_bounds = array<i64: 1, 1, 512>}, {pipeline_mode = #tpu.pipeline_mode<synchronous>, transform_indices = @transform_5, window_bounds = array<i64: 2, 32, 1>}, {pipeline_mode = #tpu.pipeline_mode<synchronous>, transform_indices = @transform_6, window_bounds = array<i64: 32, 16>}, {pipeline_mode = #tpu.pipeline_mode<synchronous>, transform_indices = @transform_7, window_bounds = array<i64: 32, 1>}, {pipeline_mode = #tpu.pipeline_mode<synchronous>, transform_indices = @transform_8, window_bounds = array<i64: 128, 16>}, {pipeline_mode = #tpu.pipeline_mode<synchronous>, transform_indices = @transform_9, window_bounds = array<i64: 128, 1>}, {pipeline_mode = #tpu.pipeline_mode<synchronous>, transform_indices = @transform_10, window_bounds = array<i64: 32, 128>}, {pipeline_mode = #tpu.pipeline_mode<synchronous>, transform_indices = @transform_11, window_bounds = array<i64: 32, 1>}, {pipeline_mode = #tpu.pipeline_mode<synchronous>, transform_indices = @transform_12, window_bounds = array<i64: 128, 1>}, {pipeline_mode = #tpu.pipeline_mode<synchronous>, transform_indices = @transform_13, window_bounds = array<i64: 128, 1>}, {pipeline_mode = #tpu.pipeline_mode<synchronous>, transform_indices = @transform_14, window_bounds = array<i64: 32, 128>}, {pipeline_mode = #tpu.pipeline_mode<synchronous>, transform_indices = @transform_15, window_bounds = array<i64: 32, 1>}, {pipeline_mode = #tpu.pipeline_mode<synchronous>, transform_indices = @transform_16, window_bounds = array<i64: 32, 32>}, {pipeline_mode = #tpu.pipeline_mode<synchronous>, transform_indices = @transform_17, window_bounds = array<i64: 32, 1>}, {pipeline_mode = #tpu.pipeline_mode<synchronous>, transform_indices = @transform_18, window_bounds = array<i64: 16, 32>}, {pipeline_mode = #tpu.pipeline_mode<synchronous>, transform_indices = @transform_19, window_bounds = array<i64: 16, 1>}, {transform_indices = @transform_20, window_bounds = array<i64: 1, 16, 512>}, {transform_indices = @transform_21, window_bounds = array<i64: 1, 16, 512>}]} {
    %0 = arith.index_cast %arg0 : i32 to index
    %1 = memref.load %arg2[%0] : memref<2xf32, #tpu.memory_space<smem>>
    %c0 = arith.constant 0 : index
    %c0_0 = arith.constant 0 : index
    %c0_1 = arith.constant 0 : index
    %2 = vector.load %arg3[%c0, %c0_0, %c0_1] : memref<1x16x512xf32, #tpu.memory_space<vmem>>, vector<1x16x512xf32>
    %3 = vector.shape_cast %2 : vector<1x16x512xf32> to vector<16x512xf32>
    %c0_2 = arith.constant 0 : index
    %c0_3 = arith.constant 0 : index
    %c0_4 = arith.constant 0 : index
    %4 = vector.load %arg4[%c0_2, %c0_3, %c0_4] : memref<1x16x512xf32, #tpu.memory_space<vmem>>, vector<1x16x512xf32>
    %5 = vector.shape_cast %4 : vector<1x16x512xf32> to vector<16x512xf32>
    %6 = vector.broadcast %1 : f32 to vector<16x512xf32>
    %7 = arith.mulf %6, %3 : vector<16x512xf32>
    %cst = arith.constant 1.000000e+00 : f32
    %8 = arith.subf %cst, %1 : f32
    %9 = vector.broadcast %8 : f32 to vector<16x512xf32>
    %10 = arith.mulf %9, %5 : vector<16x512xf32>
    %11 = arith.addf %7, %10 : vector<16x512xf32>
    %12 = arith.subf %3, %5 : vector<16x512xf32>
    %c0_5 = arith.constant 0 : index
    %c0_6 = arith.constant 0 : index
    %c0_7 = arith.constant 0 : index
    %13 = vector.load %arg22[%c0_5, %c0_6, %c0_7] : memref<1x16x512xf32, #tpu.memory_space<vmem>>, vector<1x16x512xf32>
    %14 = vector.shape_cast %13 : vector<1x16x512xf32> to vector<16x512xf32>
    %15 = vector.shape_cast %12 : vector<16x512xf32> to vector<1x16x512xf32>
    tpu.vector_store %arg22[%c0_5, %c0_6, %c0_7], %15 {strides = array<i32>} : memref<1x16x512xf32, #tpu.memory_space<vmem>>, vector<1x16x512xf32>,
    %c0_8 = arith.constant 0 : index
    %c0_9 = arith.constant 0 : index
    %16 = vector.load %arg8[%c0_8, %c0_9] : memref<32x16xbf16, #tpu.memory_space<vmem>>, vector<32x16xbf16>
    %17 = arith.truncf %11 : vector<16x512xf32> to vector<16x512xbf16>
    %cst_10 = arith.constant dense<0.000000e+00> : vector<32x512xf32>
    %18 = tpu.matmul %16, %17, %cst_10 {dimension_numbers = #tpu.dot_dimension_numbers<[1], [0], [0], [1], [0, 0, 1, 1], [], []>} : vector<32x16xbf16>, vector<16x512xbf16>, vector<32x512xf32> -> vector<32x512xf32>
    %c0_11 = arith.constant 0 : index
    %c0_12 = arith.constant 0 : index
    %19 = vector.load %arg9[%c0_11, %c0_12] : memref<32x1xf32, #tpu.memory_space<vmem>>, vector<32x1xf32>
    %20 = vector.broadcast %19 : vector<32x1xf32> to vector<32x512xf32>
    %21 = arith.addf %18, %20 : vector<32x512xf32>
    %22 = arith.mulf %21, %21 : vector<32x512xf32>
    %23 = arith.mulf %21, %22 : vector<32x512xf32>
    %cst_13 = arith.constant 4.471500e-02 : f32
    %24 = vector.broadcast %cst_13 : f32 to vector<32x512xf32>
    %25 = arith.mulf %24, %23 : vector<32x512xf32>
    %26 = arith.addf %21, %25 : vector<32x512xf32>
    %cst_14 = arith.constant 0.797884583 : f32
    %27 = vector.broadcast %cst_14 : f32 to vector<32x512xf32>
    %28 = arith.mulf %27, %26 : vector<32x512xf32>
    %29 = math.tanh %28 : vector<32x512xf32>
    %cst_15 = arith.constant 1.000000e+00 : f32
    %30 = vector.broadcast %cst_15 : f32 to vector<32x512xf32>
    %31 = arith.addf %30, %29 : vector<32x512xf32>
    %cst_16 = arith.constant 5.000000e-01 : f32
    %32 = vector.broadcast %cst_16 : f32 to vector<32x512xf32>
    %33 = arith.mulf %32, %31 : vector<32x512xf32>
    %34 = arith.mulf %21, %33 : vector<32x512xf32>
    %c0_17 = arith.constant 0 : index
    %c0_18 = arith.constant 0 : index
    %35 = vector.load %arg10[%c0_17, %c0_18] : memref<128x16xbf16, #tpu.memory_space<vmem>>, vector<128x16xbf16>
    %c0_19 = arith.constant 0 : index
    %c0_20 = arith.constant 0 : index
    %c0_21 = arith.constant 0 : index
    %36 = vector.load %arg5[%c0_19, %c0_20, %c0_21] : memref<1x16x512xbf16, #tpu.memory_space<vmem>>, vector<1x16x512xbf16>
    %37 = vector.shape_cast %36 : vector<1x16x512xbf16> to vector<16x512xbf16>
    %cst_22 = arith.constant dense<0.000000e+00> : vector<128x512xf32>
    %38 = tpu.matmul %35, %37, %cst_22 {dimension_numbers = #tpu.dot_dimension_numbers<[1], [0], [0], [1], [0, 0, 1, 1], [], []>} : vector<128x16xbf16>, vector<16x512xbf16>, vector<128x512xf32> -> vector<128x512xf32>
    %c0_23 = arith.constant 0 : index
    %c0_24 = arith.constant 0 : index
    %39 = vector.load %arg11[%c0_23, %c0_24] : memref<128x1xf32, #tpu.memory_space<vmem>>, vector<128x1xf32>
    %40 = vector.broadcast %39 : vector<128x1xf32> to vector<128x512xf32>
    %41 = arith.addf %38, %40 : vector<128x512xf32>
    %42 = arith.mulf %41, %41 : vector<128x512xf32>
    %43 = arith.mulf %41, %42 : vector<128x512xf32>
    %cst_25 = arith.constant 4.471500e-02 : f32
    %44 = vector.broadcast %cst_25 : f32 to vector<128x512xf32>
    %45 = arith.mulf %44, %43 : vector<128x512xf32>
    %46 = arith.addf %41, %45 : vector<128x512xf32>
    %cst_26 = arith.constant 0.797884583 : f32
    %47 = vector.broadcast %cst_26 : f32 to vector<128x512xf32>
    %48 = arith.mulf %47, %46 : vector<128x512xf32>
    %49 = math.tanh %48 : vector<128x512xf32>
    %cst_27 = arith.constant 1.000000e+00 : f32
    %50 = vector.broadcast %cst_27 : f32 to vector<128x512xf32>
    %51 = arith.addf %50, %49 : vector<128x512xf32>
    %cst_28 = arith.constant 5.000000e-01 : f32
    %52 = vector.broadcast %cst_28 : f32 to vector<128x512xf32>
    %53 = arith.mulf %52, %51 : vector<128x512xf32>
    %54 = arith.mulf %41, %53 : vector<128x512xf32>
    %c0_29 = arith.constant 0 : index
    %c0_30 = arith.constant 0 : index
    %55 = vector.load %arg12[%c0_29, %c0_30] : memref<32x128xbf16, #tpu.memory_space<vmem>>, vector<32x128xbf16>
    %56 = arith.truncf %54 : vector<128x512xf32> to vector<128x512xbf16>
    %cst_31 = arith.constant dense<0.000000e+00> : vector<32x512xf32>
    %57 = tpu.matmul %55, %56, %cst_31 {dimension_numbers = #tpu.dot_dimension_numbers<[1], [0], [0], [1], [0, 0, 1, 1], [], []>} : vector<32x128xbf16>, vector<128x512xbf16>, vector<32x512xf32> -> vector<32x512xf32>
    %c0_32 = arith.constant 0 : index
    %c0_33 = arith.constant 0 : index
    %58 = vector.load %arg13[%c0_32, %c0_33] : memref<32x1xf32, #tpu.memory_space<vmem>>, vector<32x1xf32>
    %59 = vector.broadcast %58 : vector<32x1xf32> to vector<32x512xf32>
    %60 = arith.addf %57, %59 : vector<32x512xf32>
    %c0_34 = arith.constant 0 : index
    %c0_35 = arith.constant 0 : index
    %61 = vector.load %arg14[%c0_34, %c0_35] : memref<128x1xf32, #tpu.memory_space<vmem>>, vector<128x1xf32>
    %c0_36 = arith.constant 0 : index
    %c0_37 = arith.constant 0 : index
    %c0_38 = arith.constant 0 : index
    %62 = vector.load %arg6[%c0_36, %c0_37, %c0_38] : memref<1x1x512xf32, #tpu.memory_space<vmem>>, vector<1x1x512xf32>
    %63 = vector.shape_cast %62 : vector<1x1x512xf32> to vector<1x512xf32>
    %64 = vector.broadcast %61 : vector<128x1xf32> to vector<128x512xf32>
    %65 = vector.broadcast %63 : vector<1x512xf32> to vector<128x512xf32>
    %66 = arith.mulf %64, %65 : vector<128x512xf32>
    %c0_39 = arith.constant 0 : index
    %c0_40 = arith.constant 0 : index
    %67 = vector.load %arg15[%c0_39, %c0_40] : memref<128x1xf32, #tpu.memory_space<vmem>>, vector<128x1xf32>
    %68 = vector.broadcast %67 : vector<128x1xf32> to vector<128x512xf32>
    %69 = arith.addf %66, %68 : vector<128x512xf32>
    %70 = arith.mulf %69, %69 : vector<128x512xf32>
    %71 = arith.mulf %69, %70 : vector<128x512xf32>
    %cst_41 = arith.constant 4.471500e-02 : f32
    %72 = vector.broadcast %cst_41 : f32 to vector<128x512xf32>
    %73 = arith.mulf %72, %71 : vector<128x512xf32>
    %74 = arith.addf %69, %73 : vector<128x512xf32>
    %cst_42 = arith.constant 0.797884583 : f32
    %75 = vector.broadcast %cst_42 : f32 to vector<128x512xf32>
    %76 = arith.mulf %75, %74 : vector<128x512xf32>
    %77 = math.tanh %76 : vector<128x512xf32>
    %cst_43 = arith.constant 1.000000e+00 : f32
    %78 = vector.broadcast %cst_43 : f32 to vector<128x512xf32>
    %79 = arith.addf %78, %77 : vector<128x512xf32>
    %cst_44 = arith.constant 5.000000e-01 : f32
    %80 = vector.broadcast %cst_44 : f32 to vector<128x512xf32>
    %81 = arith.mulf %80, %79 : vector<128x512xf32>
    %82 = arith.mulf %69, %81 : vector<128x512xf32>
    %c0_45 = arith.constant 0 : index
    %c0_46 = arith.constant 0 : index
    %83 = vector.load %arg16[%c0_45, %c0_46] : memref<32x128xbf16, #tpu.memory_space<vmem>>, vector<32x128xbf16>
    %84 = arith.truncf %82 : vector<128x512xf32> to vector<128x512xbf16>
    %cst_47 = arith.constant dense<0.000000e+00> : vector<32x512xf32>
    %85 = tpu.matmul %83, %84, %cst_47 {dimension_numbers = #tpu.dot_dimension_numbers<[1], [0], [0], [1], [0, 0, 1, 1], [], []>} : vector<32x128xbf16>, vector<128x512xbf16>, vector<32x512xf32> -> vector<32x512xf32>
    %c0_48 = arith.constant 0 : index
    %c0_49 = arith.constant 0 : index
    %86 = vector.load %arg17[%c0_48, %c0_49] : memref<32x1xf32, #tpu.memory_space<vmem>>, vector<32x1xf32>
    %87 = vector.broadcast %86 : vector<32x1xf32> to vector<32x512xf32>
    %88 = arith.addf %85, %87 : vector<32x512xf32>
    %89 = arith.addf %34, %60 : vector<32x512xf32>
    %90 = arith.addf %89, %88 : vector<32x512xf32>
    %91 = arith.index_cast %arg0 : i32 to index
    %c0_50 = arith.constant 0 : index
    %c0_51 = arith.constant 0 : index
    %92 = vector.load %arg7[%91, %c0_50, %c0_51] : memref<2x32x1xf32, #tpu.memory_space<vmem>>, vector<1x32x1xf32>
    %93 = vector.shape_cast %92 : vector<1x32x1xf32> to vector<32x1xf32>
    %94 = vector.broadcast %93 : vector<32x1xf32> to vector<32x512xf32>
    %95 = arith.addf %90, %94 : vector<32x512xf32>
    %c0_52 = arith.constant 0 : index
    %c0_53 = arith.constant 0 : index
    %96 = vector.load %arg18[%c0_52, %c0_53] : memref<32x32xbf16, #tpu.memory_space<vmem>>, vector<32x32xbf16>
    %97 = arith.truncf %95 : vector<32x512xf32> to vector<32x512xbf16>
    %cst_54 = arith.constant dense<0.000000e+00> : vector<32x512xf32>
    %98 = tpu.matmul %96, %97, %cst_54 {dimension_numbers = #tpu.dot_dimension_numbers<[1], [0], [0], [1], [0, 0, 1, 1], [], []>} : vector<32x32xbf16>, vector<32x512xbf16>, vector<32x512xf32> -> vector<32x512xf32>
    %c0_55 = arith.constant 0 : index
    %c0_56 = arith.constant 0 : index
    %99 = vector.load %arg19[%c0_55, %c0_56] : memref<32x1xf32, #tpu.memory_space<vmem>>, vector<32x1xf32>
    %100 = vector.broadcast %99 : vector<32x1xf32> to vector<32x512xf32>
    %101 = arith.addf %98, %100 : vector<32x512xf32>
    %102 = arith.mulf %101, %101 : vector<32x512xf32>
    %103 = arith.mulf %101, %102 : vector<32x512xf32>
    %cst_57 = arith.constant 4.471500e-02 : f32
    %104 = vector.broadcast %cst_57 : f32 to vector<32x512xf32>
    %105 = arith.mulf %104, %103 : vector<32x512xf32>
    %106 = arith.addf %101, %105 : vector<32x512xf32>
    %cst_58 = arith.constant 0.797884583 : f32
    %107 = vector.broadcast %cst_58 : f32 to vector<32x512xf32>
    %108 = arith.mulf %107, %106 : vector<32x512xf32>
    %109 = math.tanh %108 : vector<32x512xf32>
    %cst_59 = arith.constant 1.000000e+00 : f32
    %110 = vector.broadcast %cst_59 : f32 to vector<32x512xf32>
    %111 = arith.addf %110, %109 : vector<32x512xf32>
    %cst_60 = arith.constant 5.000000e-01 : f32
    %112 = vector.broadcast %cst_60 : f32 to vector<32x512xf32>
    %113 = arith.mulf %112, %111 : vector<32x512xf32>
    %114 = arith.mulf %101, %113 : vector<32x512xf32>
    %c0_61 = arith.constant 0 : index
    %c0_62 = arith.constant 0 : index
    %115 = vector.load %arg20[%c0_61, %c0_62] : memref<16x32xbf16, #tpu.memory_space<vmem>>, vector<16x32xbf16>
    %116 = arith.truncf %114 : vector<32x512xf32> to vector<32x512xbf16>
    %cst_63 = arith.constant dense<0.000000e+00> : vector<16x512xf32>
    %117 = tpu.matmul %115, %116, %cst_63 {dimension_numbers = #tpu.dot_dimension_numbers<[1], [0], [0], [1], [0, 0, 1, 1], [], []>} : vector<16x32xbf16>, vector<32x512xbf16>, vector<16x512xf32> -> vector<16x512xf32>
    %c0_64 = arith.constant 0 : index
    %c0_65 = arith.constant 0 : index
    %118 = vector.load %arg21[%c0_64, %c0_65] : memref<16x1xf32, #tpu.memory_space<vmem>>, vector<16x1xf32>
    %119 = vector.broadcast %118 : vector<16x1xf32> to vector<16x512xf32>
    %120 = arith.addf %117, %119 : vector<16x512xf32>
    %c0_66 = arith.constant 0 : index
    %c0_67 = arith.constant 0 : index
    %c0_68 = arith.constant 0 : index
    %121 = vector.load %arg23[%c0_66, %c0_67, %c0_68] : memref<1x16x512xf32, #tpu.memory_space<vmem>>, vector<1x16x512xf32>
    %122 = vector.shape_cast %121 : vector<1x16x512xf32> to vector<16x512xf32>
    %123 = vector.shape_cast %120 : vector<16x512xf32> to vector<1x16x512xf32>
    tpu.vector_store %arg23[%c0_66, %c0_67, %c0_68], %123 {strides = array<i32>} : memref<1x16x512xf32, #tpu.memory_space<vmem>>, vector<1x16x512xf32>,
    return
  }
  func.func @transform_0(%arg0: i32, %arg1: i32) -> i32 {
    %c0_i32 = arith.constant 0 : i32
    %c0_i32_0 = arith.constant 0 : i32
    return %c0_i32 : i32
  }
  func.func @transform_1(%arg0: i32, %arg1: i32) -> (i32, i32, i32) {
    %c0_i32 = arith.constant 0 : i32
    %c0_i32_0 = arith.constant 0 : i32
    return %arg0, %c0_i32, %arg1 : i32, i32, i32
  }
  func.func @transform_2(%arg0: i32, %arg1: i32) -> (i32, i32, i32) {
    %c0_i32 = arith.constant 0 : i32
    %c0_i32_0 = arith.constant 0 : i32
    return %arg0, %c0_i32, %arg1 : i32, i32, i32
  }
  func.func @transform_3(%arg0: i32, %arg1: i32) -> (i32, i32, i32) {
    %c0_i32 = arith.constant 0 : i32
    %c0_i32_0 = arith.constant 0 : i32
    return %arg0, %c0_i32, %arg1 : i32, i32, i32
  }
  func.func @transform_4(%arg0: i32, %arg1: i32) -> (i32, i32, i32) {
    %c0_i32 = arith.constant 0 : i32
    %c0_i32_0 = arith.constant 0 : i32
    return %arg0, %c0_i32, %arg1 : i32, i32, i32
  }
  func.func @transform_5(%arg0: i32, %arg1: i32) -> (i32, i32, i32) {
    %c0_i32 = arith.constant 0 : i32
    %c0_i32_0 = arith.constant 0 : i32
    %c0_i32_1 = arith.constant 0 : i32
    %c0_i32_2 = arith.constant 0 : i32
    return %c0_i32, %c0_i32_0, %c0_i32_1 : i32, i32, i32
  }
  func.func @transform_6(%arg0: i32, %arg1: i32) -> (i32, i32) {
    %c0_i32 = arith.constant 0 : i32
    %c0_i32_0 = arith.constant 0 : i32
    %c0_i32_1 = arith.constant 0 : i32
    return %c0_i32, %c0_i32_0 : i32, i32
  }
  func.func @transform_7(%arg0: i32, %arg1: i32) -> (i32, i32) {
    %c0_i32 = arith.constant 0 : i32
    %c0_i32_0 = arith.constant 0 : i32
    %c0_i32_1 = arith.constant 0 : i32
    return %c0_i32, %c0_i32_0 : i32, i32
  }
  func.func @transform_8(%arg0: i32, %arg1: i32) -> (i32, i32) {
    %c0_i32 = arith.constant 0 : i32
    %c0_i32_0 = arith.constant 0 : i32
    %c0_i32_1 = arith.constant 0 : i32
    return %c0_i32, %c0_i32_0 : i32, i32
  }
  func.func @transform_9(%arg0: i32, %arg1: i32) -> (i32, i32) {
    %c0_i32 = arith.constant 0 : i32
    %c0_i32_0 = arith.constant 0 : i32
    %c0_i32_1 = arith.constant 0 : i32
    return %c0_i32, %c0_i32_0 : i32, i32
  }
  func.func @transform_10(%arg0: i32, %arg1: i32) -> (i32, i32) {
    %c0_i32 = arith.constant 0 : i32
    %c0_i32_0 = arith.constant 0 : i32
    %c0_i32_1 = arith.constant 0 : i32
    return %c0_i32, %c0_i32_0 : i32, i32
  }
  func.func @transform_11(%arg0: i32, %arg1: i32) -> (i32, i32) {
    %c0_i32 = arith.constant 0 : i32
    %c0_i32_0 = arith.constant 0 : i32
    %c0_i32_1 = arith.constant 0 : i32
    return %c0_i32, %c0_i32_0 : i32, i32
  }
  func.func @transform_12(%arg0: i32, %arg1: i32) -> (i32, i32) {
    %c0_i32 = arith.constant 0 : i32
    %c0_i32_0 = arith.constant 0 : i32
    %c0_i32_1 = arith.constant 0 : i32
    return %c0_i32, %c0_i32_0 : i32, i32
  }
  func.func @transform_13(%arg0: i32, %arg1: i32) -> (i32, i32) {
    %c0_i32 = arith.constant 0 : i32
    %c0_i32_0 = arith.constant 0 : i32
    %c0_i32_1 = arith.constant 0 : i32
    return %c0_i32, %c0_i32_0 : i32, i32
  }
  func.func @transform_14(%arg0: i32, %arg1: i32) -> (i32, i32) {
    %c0_i32 = arith.constant 0 : i32
    %c0_i32_0 = arith.constant 0 : i32
    %c0_i32_1 = arith.constant 0 : i32
    return %c0_i32, %c0_i32_0 : i32, i32
  }
  func.func @transform_15(%arg0: i32, %arg1: i32) -> (i32, i32) {
    %c0_i32 = arith.constant 0 : i32
    %c0_i32_0 = arith.constant 0 : i32
    %c0_i32_1 = arith.constant 0 : i32
    return %c0_i32, %c0_i32_0 : i32, i32
  }
  func.func @transform_16(%arg0: i32, %arg1: i32) -> (i32, i32) {
    %c0_i32 = arith.constant 0 : i32
    %c0_i32_0 = arith.constant 0 : i32
    %c0_i32_1 = arith.constant 0 : i32
    return %c0_i32, %c0_i32_0 : i32, i32
  }
  func.func @transform_17(%arg0: i32, %arg1: i32) -> (i32, i32) {
    %c0_i32 = arith.constant 0 : i32
    %c0_i32_0 = arith.constant 0 : i32
    %c0_i32_1 = arith.constant 0 : i32
    return %c0_i32, %c0_i32_0 : i32, i32
  }
  func.func @transform_18(%arg0: i32, %arg1: i32) -> (i32, i32) {
    %c0_i32 = arith.constant 0 : i32
    %c0_i32_0 = arith.constant 0 : i32
    %c0_i32_1 = arith.constant 0 : i32
    return %c0_i32, %c0_i32_0 : i32, i32
  }
  func.func @transform_19(%arg0: i32, %arg1: i32) -> (i32, i32) {
    %c0_i32 = arith.constant 0 : i32
    %c0_i32_0 = arith.constant 0 : i32
    %c0_i32_1 = arith.constant 0 : i32
    return %c0_i32, %c0_i32_0 : i32, i32
  }
  func.func @transform_20(%arg0: i32, %arg1: i32) -> (i32, i32, i32) {
    %c0_i32 = arith.constant 0 : i32
    %c0_i32_0 = arith.constant 0 : i32
    return %arg0, %c0_i32, %arg1 : i32, i32, i32
  }
  func.func @transform_21(%arg0: i32, %arg1: i32) -> (i32, i32, i32) {
    %c0_i32 = arith.constant 0 : i32
    %c0_i32_0 = arith.constant 0 : i32
    return %arg0, %c0_i32, %arg1 : i32, i32, i32
  }
}

</mosaic_0001>

<llo_original>
// kernel: tpu_custom_call.1
$region0: #{tpu_custom_call.1}
  #allocation0 [shape = 'u32[]', space=smem, size = 0x4, offset = 0x4, fixed_abs, tag = 'smem constant byte address 0x4 - core index']
  #allocation1 [shape = 'u32[144,128]{1,0:T(1,128)}', space=vmem, size = 0x12000, scoped, tag = 'internal scratch']
  %s0 = inlined_call_operand.vmem [shape: f32[2], index: 0, kind: input, shape index: {}]
  %s1 = inlined_call_operand.vmem [shape: f32[2,16,512], index: 1, kind: input, shape index: {}]
  %s2 = inlined_call_operand.vmem [shape: f32[2,16,512], index: 2, kind: input, shape index: {}]
  %s3 = inlined_call_operand.vmem [shape: bf16[2,16,512], index: 3, kind: input, shape index: {}]
  %s4 = inlined_call_operand.vmem [shape: f32[2,1,512], index: 4, kind: input, shape index: {}]
  %s5 = inlined_call_operand.vmem [shape: f32[2,32,1], index: 5, kind: input, shape index: {}]
  %s6 = inlined_call_operand.vmem [shape: bf16[32,16], index: 6, kind: input, shape index: {}]
  %s7 = inlined_call_operand.vmem [shape: f32[32,1], index: 7, kind: input, shape index: {}]
  %s8 = inlined_call_operand.vmem [shape: bf16[128,16], index: 8, kind: input, shape index: {}]
  %s9 = inlined_call_operand.vmem [shape: f32[128,1], index: 9, kind: input, shape index: {}]
  %s10 = inlined_call_operand.vmem [shape: bf16[32,128], index: 10, kind: input, shape index: {}]
  %s11 = inlined_call_operand.vmem [shape: f32[32,1], index: 11, kind: input, shape index: {}]
  %s12 = inlined_call_operand.vmem [shape: f32[128,1], index: 12, kind: input, shape index: {}]
  %s13 = inlined_call_operand.vmem [shape: f32[128,1], index: 13, kind: input, shape index: {}]
  %s14 = inlined_call_operand.vmem [shape: bf16[32,128], index: 14, kind: input, shape index: {}]
  %s15 = inlined_call_operand.vmem [shape: f32[32,1], index: 15, kind: input, shape index: {}]
  %s16 = inlined_call_operand.vmem [shape: bf16[32,32], index: 16, kind: input, shape index: {}]
  %s17 = inlined_call_operand.vmem [shape: f32[32,1], index: 17, kind: input, shape index: {}]
  %s18 = inlined_call_operand.vmem [shape: bf16[16,32], index: 18, kind: input, shape index: {}]
  %s19 = inlined_call_operand.vmem [shape: f32[16,1], index: 19, kind: input, shape index: {}]
  %s20 = inlined_call_operand.hbm [shape: f32[2,16,512], index: 20, kind: output, shape index: {0}]
  %s21 = inlined_call_operand.hbm [shape: f32[2,16,512], index: 21, kind: output, shape index: {1}]
  %22 = xla_tuple %s20, %s21
  %s23 = sld [smem:[#allocation0]]
  $region125: #{tpu_custom_call.1} parent=0
    _
  %s25 = ssub.s32 1, %s23
  %s26 = scalar_select 0, %s25, %s23
  $region1: #{tpu_custom_call.1} parent=0
    #allocation2 [shape = 'u8[512]{0}', space=smem, size = 0x200, scoped, tag = 'input window, operand 0, single buffered']
    #allocation3 [shape = 's32[2]{0}', space=sflag, size = 0x8, scoped, tag = 'scoped memory for tpu_custom_call.1']
    #allocation4 [shape = 's32[2]{0}', space=sflag, size = 0x8, scoped, tag = 'scoped memory for tpu_custom_call.1']
    #allocation5 [shape = 'u8[65536]{0}', space=vmem, size = 0x10000, scoped, tag = 'output window, operand 0']
    #allocation6 [shape = 'u8[65536]{0}', space=vmem, size = 0x10000, scoped, tag = 'output window, operand 1']
    #allocation7 [shape = 's32[2]{0}', space=sflag, size = 0x8, scoped, tag = 'scoped memory for tpu_custom_call.1']
    %27 = vsyncpa [#allocation4], 0
    %28 = vsyncpa [#allocation3], 0
    %s29 = scalar_lea.sflag [#allocation3], 1
    %30 = vsyncpa %s29, 0
    %31 = vsyncpa [#allocation7], 0
    %s32 = scalar_lea.sflag [#allocation7], 1
    %33 = vsyncpa %s32, 0
    loop: start=0, step=1, limit=4
    $region2: #{tpu_custom_call.1} parent=1 // loop_pre_header
      _
    $region3: #{tpu_custom_call.1} parent=1 // loop_header
      %s35 = sphi 0, %s39
      %p36 = scmp.ge.s32.totalorder %s35, 4
      %s42 = sphi 0, %s54
      %s43 = sphi 0, %s50
      %s44 = sphi 0, %s42
      %s45 = sphi 0, %s43
      %s46 = sphi 0, %s44
      %s47 = sphi 0, %s45
      %s55 = sphi 0, %s55
      %s57 = sphi 0, %s55
      %s58 = sphi 0, %s57
      %s72 = sphi 0, %s58
      %s80 = sphi 0, %s82
      %s83 = sphi 0, %s80
      %s84 = sphi 0, %s83
      %s100 = sphi 0, %s84
      %s108 = sphi 0, %s110
      %s111 = sphi 0, %s108
      %s112 = sphi 0, %s111
      %s128 = sphi 0, %s112
      %s136 = sphi 0, %s138
      %s139 = sphi 0, %s136
      %s140 = sphi 0, %s139
      %s156 = sphi 0, %s140
      %s164 = sphi 0, %s166
      %s167 = sphi 0, %s164
      %s168 = sphi 0, %s167
      %s184 = sphi 0, %s168
      %s188 = sphi 0, %s188
      %s190 = sphi 0, %s188
      %s191 = sphi 0, %s190
      %s205 = sphi 0, %s191
      %s209 = sphi 0, %s209
      %s211 = sphi 0, %s209
      %s212 = sphi 0, %s211
      %s226 = sphi 0, %s212
      %s230 = sphi 0, %s230
      %s232 = sphi 0, %s230
      %s233 = sphi 0, %s232
      %s247 = sphi 0, %s233
      %s251 = sphi 0, %s251
      %s253 = sphi 0, %s251
      %s254 = sphi 0, %s253
      %s268 = sphi 0, %s254
      %s272 = sphi 0, %s272
      %s274 = sphi 0, %s272
      %s275 = sphi 0, %s274
      %s289 = sphi 0, %s275
      %s293 = sphi 0, %s293
      %s295 = sphi 0, %s293
      %s296 = sphi 0, %s295
      %s310 = sphi 0, %s296
      %s314 = sphi 0, %s314
      %s316 = sphi 0, %s314
      %s317 = sphi 0, %s316
      %s331 = sphi 0, %s317
      %s335 = sphi 0, %s335
      %s337 = sphi 0, %s335
      %s338 = sphi 0, %s337
      %s352 = sphi 0, %s338
      %s356 = sphi 0, %s356
      %s358 = sphi 0, %s356
      %s359 = sphi 0, %s358
      %s373 = sphi 0, %s359
      %s377 = sphi 0, %s377
      %s379 = sphi 0, %s377
      %s380 = sphi 0, %s379
      %s394 = sphi 0, %s380
      %s398 = sphi 0, %s398
      %s400 = sphi 0, %s398
      %s401 = sphi 0, %s400
      %s415 = sphi 0, %s401
      %s419 = sphi 0, %s419
      %s421 = sphi 0, %s419
      %s422 = sphi 0, %s421
      %s436 = sphi 0, %s422
      %s440 = sphi 0, %s440
      %s442 = sphi 0, %s440
      %s443 = sphi 0, %s442
      %s457 = sphi 0, %s443
      %s461 = sphi 0, %s461
      %s463 = sphi 0, %s461
      %s464 = sphi 0, %s463
      %s478 = sphi 0, %s464
      %s482 = sphi 0, %s482
      %s484 = sphi 0, %s482
      %s485 = sphi 0, %s484
      %s499 = sphi 0, %s485
      %s507 = sphi 0, %s509
      %s510 = sphi 0, %s507
      %s511 = sphi 0, %s510
      %s527 = sphi 0, %s511
      %s535 = sphi 0, %s537
      %s538 = sphi 0, %s535
      %s539 = sphi 0, %s538
      %s555 = sphi 0, %s539
    $region4: #{tpu_custom_call.1} parent=1 // loop_header_branch
      %38 = sbr.rel (%p36) target = $region8
    $region5: #{tpu_custom_call.1} parent=1 // loop_body
      %s40 = ssub.s32 %s35, 1
      %s41 = ssub.s32 %s35, 2
      %s48 = sadd.s32 1, %s43
      %p49 = scmp.ge.s32.totalorder %s48, 1
      %s50 = scalar_select %p49, 0, %s48
      %s51 = sadd.s32 1, %s42
      %s52 = scalar_select %p49, %s51, %s42
      %p53 = scmp.ge.s32.totalorder %s52, 2
      %s54 = scalar_select %p53, 0, %s52
      %s56 = sadd.s32 %s55, 1
      %p59 = scmp.eq.s32.totalorder %s35, 1
      %p60 = scmp.ne.s32.totalorder %s55, %s57
      %p61 = scmp.eq.s32.totalorder %s35, 0
      %p62 = por %p60, %p61
      %p63 = scmp.ne.s32.totalorder %s55, %s57
      %p64 = scmp.eq.s32.totalorder %s40, 1
      %p65 = por %p63, %p64
      %p66 = scmp.ne.s32.totalorder %s57, %s58
      %p67 = scmp.eq.s32.totalorder %s40, 0
      %p68 = por %p66, %p67
      %p69 = scmp.ne.s32.totalorder %s57, %s58
      %p70 = scmp.eq.s32.totalorder %s41, 1
      %p71 = por %p69, %p70
      %p73 = scmp.ne.s32.totalorder %s58, %s72
      %p74 = scmp.eq.s32.totalorder %s41, 0
      %p75 = por %p73, %p74
      %s76 = ssub.s32 %s42, %s54
      %s77 = ssub.s32 %s43, %s50
      %s78 = sor.u32 %s76, %s77
      %p79 = scmp.eq.s32.totalorder %s78, 0
      %s81 = sadd.s32 %s80, 1
      %s82 = scalar_select %p79, %s80, %s81
      %p85 = pneg %p79
      %p86 = scmp.eq.s32.totalorder %s35, 1
      %p87 = por %p85, %p86
      %p88 = scmp.ne.s32.totalorder %s80, %s83
      %p89 = scmp.eq.s32.totalorder %s35, 0
      %p90 = por %p88, %p89
      %p91 = scmp.ne.s32.totalorder %s80, %s83
      %p92 = scmp.eq.s32.totalorder %s40, 1
      %p93 = por %p91, %p92
      %p94 = scmp.ne.s32.totalorder %s83, %s84
      %p95 = scmp.eq.s32.totalorder %s40, 0
      %p96 = por %p94, %p95
      %p97 = scmp.ne.s32.totalorder %s83, %s84
      %p98 = scmp.eq.s32.totalorder %s41, 1
      %p99 = por %p97, %p98
      %p101 = scmp.ne.s32.totalorder %s84, %s100
      %p102 = scmp.eq.s32.totalorder %s41, 0
      %p103 = por %p101, %p102
      %s104 = ssub.s32 %s42, %s54
      %s105 = ssub.s32 %s43, %s50
      %s106 = sor.u32 %s104, %s105
      %p107 = scmp.eq.s32.totalorder %s106, 0
      %s109 = sadd.s32 %s108, 1
      %s110 = scalar_select %p107, %s108, %s109
      %p113 = pneg %p107
      %p114 = scmp.eq.s32.totalorder %s35, 1
      %p115 = por %p113, %p114
      %p116 = scmp.ne.s32.totalorder %s108, %s111
      %p117 = scmp.eq.s32.totalorder %s35, 0
      %p118 = por %p116, %p117
      %p119 = scmp.ne.s32.totalorder %s108, %s111
      %p120 = scmp.eq.s32.totalorder %s40, 1
      %p121 = por %p119, %p120
      %p122 = scmp.ne.s32.totalorder %s111, %s112
      %p123 = scmp.eq.s32.totalorder %s40, 0
      %p124 = por %p122, %p123
      %p125 = scmp.ne.s32.totalorder %s111, %s112
      %p126 = scmp.eq.s32.totalorder %s41, 1
      %p127 = por %p125, %p126
      %p129 = scmp.ne.s32.totalorder %s112, %s128
      %p130 = scmp.eq.s32.totalorder %s41, 0
      %p131 = por %p129, %p130
      %s132 = ssub.s32 %s42, %s54
      %s133 = ssub.s32 %s43, %s50
      %s134 = sor.u32 %s132, %s133
      %p135 = scmp.eq.s32.totalorder %s134, 0
      %s137 = sadd.s32 %s136, 1
      %s138 = scalar_select %p135, %s136, %s137
      %p141 = pneg %p135
      %p142 = scmp.eq.s32.totalorder %s35, 1
      %p143 = por %p141, %p142
      %p144 = scmp.ne.s32.totalorder %s136, %s139
      %p145 = scmp.eq.s32.totalorder %s35, 0
      %p146 = por %p144, %p145
      %p147 = scmp.ne.s32.totalorder %s136, %s139
      %p148 = scmp.eq.s32.totalorder %s40, 1
      %p149 = por %p147, %p148
      %p150 = scmp.ne.s32.totalorder %s139, %s140
      %p151 = scmp.eq.s32.totalorder %s40, 0
      %p152 = por %p150, %p151
      %p153 = scmp.ne.s32.totalorder %s139, %s140
      %p154 = scmp.eq.s32.totalorder %s41, 1
      %p155 = por %p153, %p154
      %p157 = scmp.ne.s32.totalorder %s140, %s156
      %p158 = scmp.eq.s32.totalorder %s41, 0
      %p159 = por %p157, %p158
      %s160 = ssub.s32 %s42, %s54
      %s161 = ssub.s32 %s43, %s50
      %s162 = sor.u32 %s160, %s161
      %p163 = scmp.eq.s32.totalorder %s162, 0
      %s165 = sadd.s32 %s164, 1
      %s166 = scalar_select %p163, %s164, %s165
      %p169 = pneg %p163
      %p170 = scmp.eq.s32.totalorder %s35, 1
      %p171 = por %p169, %p170
      %p172 = scmp.ne.s32.totalorder %s164, %s167
      %p173 = scmp.eq.s32.totalorder %s35, 0
      %p174 = por %p172, %p173
      %p175 = scmp.ne.s32.totalorder %s164, %s167
      %p176 = scmp.eq.s32.totalorder %s40, 1
      %p177 = por %p175, %p176
      %p178 = scmp.ne.s32.totalorder %s167, %s168
      %p179 = scmp.eq.s32.totalorder %s40, 0
      %p180 = por %p178, %p179
      %p181 = scmp.ne.s32.totalorder %s167, %s168
      %p182 = scmp.eq.s32.totalorder %s41, 1
      %p183 = por %p181, %p182
      %p185 = scmp.ne.s32.totalorder %s168, %s184
      %p186 = scmp.eq.s32.totalorder %s41, 0
      %p187 = por %p185, %p186
      %s189 = sadd.s32 %s188, 1
      %p192 = scmp.eq.s32.totalorder %s35, 1
      %p193 = scmp.ne.s32.totalorder %s188, %s190
      %p194 = scmp.eq.s32.totalorder %s35, 0
      %p195 = por %p193, %p194
      %p196 = scmp.ne.s32.totalorder %s188, %s190
      %p197 = scmp.eq.s32.totalorder %s40, 1
      %p198 = por %p196, %p197
      %p199 = scmp.ne.s32.totalorder %s190, %s191
      %p200 = scmp.eq.s32.totalorder %s40, 0
      %p201 = por %p199, %p200
      %p202 = scmp.ne.s32.totalorder %s190, %s191
      %p203 = scmp.eq.s32.totalorder %s41, 1
      %p204 = por %p202, %p203
      %p206 = scmp.ne.s32.totalorder %s191, %s205
      %p207 = scmp.eq.s32.totalorder %s41, 0
      %p208 = por %p206, %p207
      %s210 = sadd.s32 %s209, 1
      %p213 = scmp.eq.s32.totalorder %s35, 1
      %p214 = scmp.ne.s32.totalorder %s209, %s211
      %p215 = scmp.eq.s32.totalorder %s35, 0
      %p216 = por %p214, %p215
      %p217 = scmp.ne.s32.totalorder %s209, %s211
      %p218 = scmp.eq.s32.totalorder %s40, 1
      %p219 = por %p217, %p218
      %p220 = scmp.ne.s32.totalorder %s211, %s212
      %p221 = scmp.eq.s32.totalorder %s40, 0
      %p222 = por %p220, %p221
      %p223 = scmp.ne.s32.totalorder %s211, %s212
      %p224 = scmp.eq.s32.totalorder %s41, 1
      %p225 = por %p223, %p224
      %p227 = scmp.ne.s32.totalorder %s212, %s226
      %p228 = scmp.eq.s32.totalorder %s41, 0
      %p229 = por %p227, %p228
      %s231 = sadd.s32 %s230, 1
      %p234 = scmp.eq.s32.totalorder %s35, 1
      %p235 = scmp.ne.s32.totalorder %s230, %s232
      %p236 = scmp.eq.s32.totalorder %s35, 0
      %p237 = por %p235, %p236
      %p238 = scmp.ne.s32.totalorder %s230, %s232
      %p239 = scmp.eq.s32.totalorder %s40, 1
      %p240 = por %p238, %p239
      %p241 = scmp.ne.s32.totalorder %s232, %s233
      %p242 = scmp.eq.s32.totalorder %s40, 0
      %p243 = por %p241, %p242
      %p244 = scmp.ne.s32.totalorder %s232, %s233
      %p245 = scmp.eq.s32.totalorder %s41, 1
      %p246 = por %p244, %p245
      %p248 = scmp.ne.s32.totalorder %s233, %s247
      %p249 = scmp.eq.s32.totalorder %s41, 0
      %p250 = por %p248, %p249
      %s252 = sadd.s32 %s251, 1
      %p255 = scmp.eq.s32.totalorder %s35, 1
      %p256 = scmp.ne.s32.totalorder %s251, %s253
      %p257 = scmp.eq.s32.totalorder %s35, 0
      %p258 = por %p256, %p257
      %p259 = scmp.ne.s32.totalorder %s251, %s253
      %p260 = scmp.eq.s32.totalorder %s40, 1
      %p261 = por %p259, %p260
      %p262 = scmp.ne.s32.totalorder %s253, %s254
      %p263 = scmp.eq.s32.totalorder %s40, 0
      %p264 = por %p262, %p263
      %p265 = scmp.ne.s32.totalorder %s253, %s254
      %p266 = scmp.eq.s32.totalorder %s41, 1
      %p267 = por %p265, %p266
      %p269 = scmp.ne.s32.totalorder %s254, %s268
      %p270 = scmp.eq.s32.totalorder %s41, 0
      %p271 = por %p269, %p270
      %s273 = sadd.s32 %s272, 1
      %p276 = scmp.eq.s32.totalorder %s35, 1
      %p277 = scmp.ne.s32.totalorder %s272, %s274
      %p278 = scmp.eq.s32.totalorder %s35, 0
      %p279 = por %p277, %p278
      %p280 = scmp.ne.s32.totalorder %s272, %s274
      %p281 = scmp.eq.s32.totalorder %s40, 1
      %p282 = por %p280, %p281
      %p283 = scmp.ne.s32.totalorder %s274, %s275
      %p284 = scmp.eq.s32.totalorder %s40, 0
      %p285 = por %p283, %p284
      %p286 = scmp.ne.s32.totalorder %s274, %s275
      %p287 = scmp.eq.s32.totalorder %s41, 1
      %p288 = por %p286, %p287
      %p290 = scmp.ne.s32.totalorder %s275, %s289
      %p291 = scmp.eq.s32.totalorder %s41, 0
      %p292 = por %p290, %p291
      %s294 = sadd.s32 %s293, 1
      %p297 = scmp.eq.s32.totalorder %s35, 1
      %p298 = scmp.ne.s32.totalorder %s293, %s295
      %p299 = scmp.eq.s32.totalorder %s35, 0
      %p300 = por %p298, %p299
      %p301 = scmp.ne.s32.totalorder %s293, %s295
      %p302 = scmp.eq.s32.totalorder %s40, 1
      %p303 = por %p301, %p302
      %p304 = scmp.ne.s32.totalorder %s295, %s296
      %p305 = scmp.eq.s32.totalorder %s40, 0
      %p306 = por %p304, %p305
      %p307 = scmp.ne.s32.totalorder %s295, %s296
      %p308 = scmp.eq.s32.totalorder %s41, 1
      %p309 = por %p307, %p308
      %p311 = scmp.ne.s32.totalorder %s296, %s310
      %p312 = scmp.eq.s32.totalorder %s41, 0
      %p313 = por %p311, %p312
      %s315 = sadd.s32 %s314, 1
      %p318 = scmp.eq.s32.totalorder %s35, 1
      %p319 = scmp.ne.s32.totalorder %s314, %s316
      %p320 = scmp.eq.s32.totalorder %s35, 0
      %p321 = por %p319, %p320
      %p322 = scmp.ne.s32.totalorder %s314, %s316
      %p323 = scmp.eq.s32.totalorder %s40, 1
      %p324 = por %p322, %p323
      %p325 = scmp.ne.s32.totalorder %s316, %s317
      %p326 = scmp.eq.s32.totalorder %s40, 0
      %p327 = por %p325, %p326
      %p328 = scmp.ne.s32.totalorder %s316, %s317
      %p329 = scmp.eq.s32.totalorder %s41, 1
      %p330 = por %p328, %p329
      %p332 = scmp.ne.s32.totalorder %s317, %s331
      %p333 = scmp.eq.s32.totalorder %s41, 0
      %p334 = por %p332, %p333
      %s336 = sadd.s32 %s335, 1
      %p339 = scmp.eq.s32.totalorder %s35, 1
      %p340 = scmp.ne.s32.totalorder %s335, %s337
      %p341 = scmp.eq.s32.totalorder %s35, 0
      %p342 = por %p340, %p341
      %p343 = scmp.ne.s32.totalorder %s335, %s337
      %p344 = scmp.eq.s32.totalorder %s40, 1
      %p345 = por %p343, %p344
      %p346 = scmp.ne.s32.totalorder %s337, %s338
      %p347 = scmp.eq.s32.totalorder %s40, 0
      %p348 = por %p346, %p347
      %p349 = scmp.ne.s32.totalorder %s337, %s338
      %p350 = scmp.eq.s32.totalorder %s41, 1
      %p351 = por %p349, %p350
      %p353 = scmp.ne.s32.totalorder %s338, %s352
      %p354 = scmp.eq.s32.totalorder %s41, 0
      %p355 = por %p353, %p354
      %s357 = sadd.s32 %s356, 1
      %p360 = scmp.eq.s32.totalorder %s35, 1
      %p361 = scmp.ne.s32.totalorder %s356, %s358
      %p362 = scmp.eq.s32.totalorder %s35, 0
      %p363 = por %p361, %p362
      %p364 = scmp.ne.s32.totalorder %s356, %s358
      %p365 = scmp.eq.s32.totalorder %s40, 1
      %p366 = por %p364, %p365
      %p367 = scmp.ne.s32.totalorder %s358, %s359
      %p368 = scmp.eq.s32.totalorder %s40, 0
      %p369 = por %p367, %p368
      %p370 = scmp.ne.s32.totalorder %s358, %s359
      %p371 = scmp.eq.s32.totalorder %s41, 1
      %p372 = por %p370, %p371
      %p374 = scmp.ne.s32.totalorder %s359, %s373
      %p375 = scmp.eq.s32.totalorder %s41, 0
      %p376 = por %p374, %p375
      %s378 = sadd.s32 %s377, 1
      %p381 = scmp.eq.s32.totalorder %s35, 1
      %p382 = scmp.ne.s32.totalorder %s377, %s379
      %p383 = scmp.eq.s32.totalorder %s35, 0
      %p384 = por %p382, %p383
      %p385 = scmp.ne.s32.totalorder %s377, %s379
      %p386 = scmp.eq.s32.totalorder %s40, 1
      %p387 = por %p385, %p386
      %p388 = scmp.ne.s32.totalorder %s379, %s380
      %p389 = scmp.eq.s32.totalorder %s40, 0
      %p390 = por %p388, %p389
      %p391 = scmp.ne.s32.totalorder %s379, %s380
      %p392 = scmp.eq.s32.totalorder %s41, 1
      %p393 = por %p391, %p392
      %p395 = scmp.ne.s32.totalorder %s380, %s394
      %p396 = scmp.eq.s32.totalorder %s41, 0
      %p397 = por %p395, %p396
      %s399 = sadd.s32 %s398, 1
      %p402 = scmp.eq.s32.totalorder %s35, 1
      %p403 = scmp.ne.s32.totalorder %s398, %s400
      %p404 = scmp.eq.s32.totalorder %s35, 0
      %p405 = por %p403, %p404
      %p406 = scmp.ne.s32.totalorder %s398, %s400
      %p407 = scmp.eq.s32.totalorder %s40, 1
      %p408 = por %p406, %p407
      %p409 = scmp.ne.s32.totalorder %s400, %s401
      %p410 = scmp.eq.s32.totalorder %s40, 0
      %p411 = por %p409, %p410
      %p412 = scmp.ne.s32.totalorder %s400, %s401
      %p413 = scmp.eq.s32.totalorder %s41, 1
      %p414 = por %p412, %p413
      %p416 = scmp.ne.s32.totalorder %s401, %s415
      %p417 = scmp.eq.s32.totalorder %s41, 0
      %p418 = por %p416, %p417
      %s420 = sadd.s32 %s419, 1
      %p423 = scmp.eq.s32.totalorder %s35, 1
      %p424 = scmp.ne.s32.totalorder %s419, %s421
      %p425 = scmp.eq.s32.totalorder %s35, 0
      %p426 = por %p424, %p425
      %p427 = scmp.ne.s32.totalorder %s419, %s421
      %p428 = scmp.eq.s32.totalorder %s40, 1
      %p429 = por %p427, %p428
      %p430 = scmp.ne.s32.totalorder %s421, %s422
      %p431 = scmp.eq.s32.totalorder %s40, 0
      %p432 = por %p430, %p431
      %p433 = scmp.ne.s32.totalorder %s421, %s422
      %p434 = scmp.eq.s32.totalorder %s41, 1
      %p435 = por %p433, %p434
      %p437 = scmp.ne.s32.totalorder %s422, %s436
      %p438 = scmp.eq.s32.totalorder %s41, 0
      %p439 = por %p437, %p438
      %s441 = sadd.s32 %s440, 1
      %p444 = scmp.eq.s32.totalorder %s35, 1
      %p445 = scmp.ne.s32.totalorder %s440, %s442
      %p446 = scmp.eq.s32.totalorder %s35, 0
      %p447 = por %p445, %p446
      %p448 = scmp.ne.s32.totalorder %s440, %s442
      %p449 = scmp.eq.s32.totalorder %s40, 1
      %p450 = por %p448, %p449
      %p451 = scmp.ne.s32.totalorder %s442, %s443
      %p452 = scmp.eq.s32.totalorder %s40, 0
      %p453 = por %p451, %p452
      %p454 = scmp.ne.s32.totalorder %s442, %s443
      %p455 = scmp.eq.s32.totalorder %s41, 1
      %p456 = por %p454, %p455
      %p458 = scmp.ne.s32.totalorder %s443, %s457
      %p459 = scmp.eq.s32.totalorder %s41, 0
      %p460 = por %p458, %p459
      %s462 = sadd.s32 %s461, 1
      %p465 = scmp.eq.s32.totalorder %s35, 1
      %p466 = scmp.ne.s32.totalorder %s461, %s463
      %p467 = scmp.eq.s32.totalorder %s35, 0
      %p468 = por %p466, %p467
      %p469 = scmp.ne.s32.totalorder %s461, %s463
      %p470 = scmp.eq.s32.totalorder %s40, 1
      %p471 = por %p469, %p470
      %p472 = scmp.ne.s32.totalorder %s463, %s464
      %p473 = scmp.eq.s32.totalorder %s40, 0
      %p474 = por %p472, %p473
      %p475 = scmp.ne.s32.totalorder %s463, %s464
      %p476 = scmp.eq.s32.totalorder %s41, 1
      %p477 = por %p475, %p476
      %p479 = scmp.ne.s32.totalorder %s464, %s478
      %p480 = scmp.eq.s32.totalorder %s41, 0
      %p481 = por %p479, %p480
      %s483 = sadd.s32 %s482, 1
      %p486 = scmp.eq.s32.totalorder %s35, 1
      %p487 = scmp.ne.s32.totalorder %s482, %s484
      %p488 = scmp.eq.s32.totalorder %s35, 0
      %p489 = por %p487, %p488
      %p490 = scmp.ne.s32.totalorder %s482, %s484
      %p491 = scmp.eq.s32.totalorder %s40, 1
      %p492 = por %p490, %p491
      %p493 = scmp.ne.s32.totalorder %s484, %s485
      %p494 = scmp.eq.s32.totalorder %s40, 0
      %p495 = por %p493, %p494
      %p496 = scmp.ne.s32.totalorder %s484, %s485
      %p497 = scmp.eq.s32.totalorder %s41, 1
      %p498 = por %p496, %p497
      %p500 = scmp.ne.s32.totalorder %s485, %s499
      %p501 = scmp.eq.s32.totalorder %s41, 0
      %p502 = por %p500, %p501
      %s503 = ssub.s32 %s42, %s54
      %s504 = ssub.s32 %s43, %s50
      %s505 = sor.u32 %s503, %s504
      %p506 = scmp.eq.s32.totalorder %s505, 0
      %s508 = sadd.s32 %s507, 1
      %s509 = scalar_select %p506, %s507, %s508
      %p512 = pneg %p506
      %p513 = scmp.eq.s32.totalorder %s35, 1
      %p514 = por %p512, %p513
      %p515 = scmp.ne.s32.totalorder %s507, %s510
      %p516 = scmp.eq.s32.totalorder %s35, 0
      %p517 = por %p515, %p516
      %p518 = scmp.ne.s32.totalorder %s507, %s510
      %p519 = scmp.eq.s32.totalorder %s40, 1
      %p520 = por %p518, %p519
      %p521 = scmp.ne.s32.totalorder %s510, %s511
      %p522 = scmp.eq.s32.totalorder %s40, 0
      %p523 = por %p521, %p522
      %p524 = scmp.ne.s32.totalorder %s510, %s511
      %p525 = scmp.eq.s32.totalorder %s41, 1
      %p526 = por %p524, %p525
      %p528 = scmp.ne.s32.totalorder %s511, %s527
      %p529 = scmp.eq.s32.totalorder %s41, 0
      %p530 = por %p528, %p529
      %s531 = ssub.s32 %s42, %s54
      %s532 = ssub.s32 %s43, %s50
      %s533 = sor.u32 %s531, %s532
      %p534 = scmp.eq.s32.totalorder %s533, 0
      %s536 = sadd.s32 %s535, 1
      %s537 = scalar_select %p534, %s535, %s536
      %p540 = pneg %p534
      %p541 = scmp.eq.s32.totalorder %s35, 1
      %p542 = por %p540, %p541
      %p543 = scmp.ne.s32.totalorder %s535, %s538
      %p544 = scmp.eq.s32.totalorder %s35, 0
      %p545 = por %p543, %p544
      %p546 = scmp.ne.s32.totalorder %s535, %s538
      %p547 = scmp.eq.s32.totalorder %s40, 1
      %p548 = por %p546, %p547
      %p549 = scmp.ne.s32.totalorder %s538, %s539
      %p550 = scmp.eq.s32.totalorder %s40, 0
      %p551 = por %p549, %p550
      %p552 = scmp.ne.s32.totalorder %s538, %s539
      %p553 = scmp.eq.s32.totalorder %s41, 1
      %p554 = por %p552, %p553
      %p556 = scmp.ne.s32.totalorder %s539, %s555
      %p557 = scmp.eq.s32.totalorder %s41, 0
      %p558 = por %p556, %p557
      %p559 = scmp.le.s32.totalorder 1, %s35
      %p560 = scmp.lt.s32.totalorder %s35, 3
      %p561 = pnand %p559, %p560
      %p562 = pneg %p561
      // Predicated region
      $region9: #{tpu_custom_call.1} parent=5 // pred_check
        _
      $region10: #{tpu_custom_call.1} parent=5 // pred_check_branch
        %564 = sbr.rel (%p561) target = $region12
      $region11: #{tpu_custom_call.1} parent=5 // pred_region
        %s565 = ssub.s32 %s35, 1
        // Predicated region
        $region13: #{tpu_custom_call.1} parent=11 // pred_check
          %p566 = pneg %p68
        $region14: #{tpu_custom_call.1} parent=11 // pred_check_branch
          %568 = sbr.rel (%p566) target = $region16
        $region15: #{tpu_custom_call.1} parent=11 // pred_region
          %s570 = ssub.s32 16, 16
          %571 = vsyncadd [#allocation4], %s570
          %s573 = sshll.u32 %s0, 4
          %s574 = int_to_ptr.vmem [resolvable:$true] %s573
          %576 = dma.vmem_to_smem %s574, 16, [#allocation2], [#allocation4]
        $region16: #{tpu_custom_call.1} parent=11 // pred_fallthru
          _
        // Predicated region
        $region17: #{tpu_custom_call.1} parent=11 // pred_check
          %p577 = pneg %p201
        $region18: #{tpu_custom_call.1} parent=11 // pred_check_branch
          %579 = sbr.rel (%p577) target = $region20
        $region19: #{tpu_custom_call.1} parent=11 // pred_region
          _
        $region20: #{tpu_custom_call.1} parent=11 // pred_fallthru
          _
        // Predicated region
        $region21: #{tpu_custom_call.1} parent=11 // pred_check
          %p580 = pneg %p222
        $region22: #{tpu_custom_call.1} parent=11 // pred_check_branch
          %582 = sbr.rel (%p580) target = $region24
        $region23: #{tpu_custom_call.1} parent=11 // pred_region
          _
        $region24: #{tpu_custom_call.1} parent=11 // pred_fallthru
          _
        // Predicated region
        $region25: #{tpu_custom_call.1} parent=11 // pred_check
          %p583 = pneg %p243
        $region26: #{tpu_custom_call.1} parent=11 // pred_check_branch
          %585 = sbr.rel (%p583) target = $region28
        $region27: #{tpu_custom_call.1} parent=11 // pred_region
          _
        $region28: #{tpu_custom_call.1} parent=11 // pred_fallthru
          _
        // Predicated region
        $region29: #{tpu_custom_call.1} parent=11 // pred_check
          %p586 = pneg %p264
        $region30: #{tpu_custom_call.1} parent=11 // pred_check_branch
          %588 = sbr.rel (%p586) target = $region32
        $region31: #{tpu_custom_call.1} parent=11 // pred_region
          _
        $region32: #{tpu_custom_call.1} parent=11 // pred_fallthru
          _
        // Predicated region
        $region33: #{tpu_custom_call.1} parent=11 // pred_check
          %p589 = pneg %p285
        $region34: #{tpu_custom_call.1} parent=11 // pred_check_branch
          %591 = sbr.rel (%p589) target = $region36
        $region35: #{tpu_custom_call.1} parent=11 // pred_region
          _
        $region36: #{tpu_custom_call.1} parent=11 // pred_fallthru
          _
        // Predicated region
        $region37: #{tpu_custom_call.1} parent=11 // pred_check
          %p592 = pneg %p306
        $region38: #{tpu_custom_call.1} parent=11 // pred_check_branch
          %594 = sbr.rel (%p592) target = $region40
        $region39: #{tpu_custom_call.1} parent=11 // pred_region
          _
        $region40: #{tpu_custom_call.1} parent=11 // pred_fallthru
          _
        // Predicated region
        $region41: #{tpu_custom_call.1} parent=11 // pred_check
          %p595 = pneg %p327
        $region42: #{tpu_custom_call.1} parent=11 // pred_check_branch
          %597 = sbr.rel (%p595) target = $region44
        $region43: #{tpu_custom_call.1} parent=11 // pred_region
          _
        $region44: #{tpu_custom_call.1} parent=11 // pred_fallthru
          _
        // Predicated region
        $region45: #{tpu_custom_call.1} parent=11 // pred_check
          %p598 = pneg %p348
        $region46: #{tpu_custom_call.1} parent=11 // pred_check_branch
          %600 = sbr.rel (%p598) target = $region48
        $region47: #{tpu_custom_call.1} parent=11 // pred_region
          _
        $region48: #{tpu_custom_call.1} parent=11 // pred_fallthru
          _
        // Predicated region
        $region49: #{tpu_custom_call.1} parent=11 // pred_check
          %p601 = pneg %p369
        $region50: #{tpu_custom_call.1} parent=11 // pred_check_branch
          %603 = sbr.rel (%p601) target = $region52
        $region51: #{tpu_custom_call.1} parent=11 // pred_region
          _
        $region52: #{tpu_custom_call.1} parent=11 // pred_fallthru
          _
        // Predicated region
        $region53: #{tpu_custom_call.1} parent=11 // pred_check
          %p604 = pneg %p390
        $region54: #{tpu_custom_call.1} parent=11 // pred_check_branch
          %606 = sbr.rel (%p604) target = $region56
        $region55: #{tpu_custom_call.1} parent=11 // pred_region
          _
        $region56: #{tpu_custom_call.1} parent=11 // pred_fallthru
          _
        // Predicated region
        $region57: #{tpu_custom_call.1} parent=11 // pred_check
          %p607 = pneg %p411
        $region58: #{tpu_custom_call.1} parent=11 // pred_check_branch
          %609 = sbr.rel (%p607) target = $region60
        $region59: #{tpu_custom_call.1} parent=11 // pred_region
          _
        $region60: #{tpu_custom_call.1} parent=11 // pred_fallthru
          _
        // Predicated region
        $region61: #{tpu_custom_call.1} parent=11 // pred_check
          %p610 = pneg %p432
        $region62: #{tpu_custom_call.1} parent=11 // pred_check_branch
          %612 = sbr.rel (%p610) target = $region64
        $region63: #{tpu_custom_call.1} parent=11 // pred_region
          _
        $region64: #{tpu_custom_call.1} parent=11 // pred_fallthru
          _
        // Predicated region
        $region65: #{tpu_custom_call.1} parent=11 // pred_check
          %p613 = pneg %p453
        $region66: #{tpu_custom_call.1} parent=11 // pred_check_branch
          %615 = sbr.rel (%p613) target = $region68
        $region67: #{tpu_custom_call.1} parent=11 // pred_region
          _
        $region68: #{tpu_custom_call.1} parent=11 // pred_fallthru
          _
        // Predicated region
        $region69: #{tpu_custom_call.1} parent=11 // pred_check
          %p616 = pneg %p474
        $region70: #{tpu_custom_call.1} parent=11 // pred_check_branch
          %618 = sbr.rel (%p616) target = $region72
        $region71: #{tpu_custom_call.1} parent=11 // pred_region
          _
        $region72: #{tpu_custom_call.1} parent=11 // pred_fallthru
          _
        // Predicated region
        $region73: #{tpu_custom_call.1} parent=11 // pred_check
          %p619 = pneg %p495
        $region74: #{tpu_custom_call.1} parent=11 // pred_check_branch
          %621 = sbr.rel (%p619) target = $region76
        $region75: #{tpu_custom_call.1} parent=11 // pred_region
          _
        $region76: #{tpu_custom_call.1} parent=11 // pred_fallthru
          _
      $region12: #{tpu_custom_call.1} parent=5 // pred_fallthru
        _
      %p622 = scmp.lt.s32.totalorder %s35, 2
      // Predicated region
      $region77: #{tpu_custom_call.1} parent=5 // pred_check
        %p623 = pneg %p622
      $region78: #{tpu_custom_call.1} parent=5 // pred_check_branch
        %625 = sbr.rel (%p623) target = $region80
      $region79: #{tpu_custom_call.1} parent=5 // pred_region
        // Predicated region
        $region81: #{tpu_custom_call.1} parent=79 // pred_check
          %p626 = pneg %p90
        $region82: #{tpu_custom_call.1} parent=79 // pred_check_branch
          %628 = sbr.rel (%p626) target = $region84
        $region83: #{tpu_custom_call.1} parent=79 // pred_region
          %s629 = smul.u32 4, %s43
          %p630 = scmp.lt.s32.totalorder %s42, 1
          %s631 = scalar_select %p630, %s42, 1
          %p632 = scmp.lt.s32.totalorder %s629, 3
          %s633 = scalar_select %p632, %s629, 3
          %s634 = smul.addr %s631, 8
          %s635 = sadd.s32 %s633, %s634
          %s636 = smul.addr %s635, 8
          %s637 = scalar_lea.vmem %s1, %s636
          %s638 = smul.u32 4, %s43
        $region84: #{tpu_custom_call.1} parent=79 // pred_fallthru
          _
        // Predicated region
        $region85: #{tpu_custom_call.1} parent=79 // pred_check
          %p639 = pneg %p118
        $region86: #{tpu_custom_call.1} parent=79 // pred_check_branch
          %641 = sbr.rel (%p639) target = $region88
        $region87: #{tpu_custom_call.1} parent=79 // pred_region
          %s642 = smul.u32 4, %s43
          %p643 = scmp.lt.s32.totalorder %s42, 1
          %s644 = scalar_select %p643, %s42, 1
          %p645 = scmp.lt.s32.totalorder %s642, 3
          %s646 = scalar_select %p645, %s642, 3
          %s647 = smul.addr %s644, 8
          %s648 = sadd.s32 %s646, %s647
          %s649 = smul.addr %s648, 8
          %s650 = scalar_lea.vmem %s2, %s649
          %s651 = smul.u32 4, %s43
        $region88: #{tpu_custom_call.1} parent=79 // pred_fallthru
          _
        // Predicated region
        $region89: #{tpu_custom_call.1} parent=79 // pred_check
          %p652 = pneg %p146
        $region90: #{tpu_custom_call.1} parent=79 // pred_check_branch
          %654 = sbr.rel (%p652) target = $region92
        $region91: #{tpu_custom_call.1} parent=79 // pred_region
          %s655 = smul.u32 4, %s43
          %p656 = scmp.lt.s32.totalorder %s42, 1
          %s657 = scalar_select %p656, %s42, 1
          %p658 = scmp.lt.s32.totalorder %s655, 3
          %s659 = scalar_select %p658, %s655, 3
          %s660 = smul.addr %s657, 8
          %s661 = sadd.s32 %s659, %s660
          %s662 = smul.addr %s661, 4
          %s663 = scalar_lea.vmem %s3, %s662
          %s664 = smul.u32 4, %s43
        $region92: #{tpu_custom_call.1} parent=79 // pred_fallthru
          _
        // Predicated region
        $region93: #{tpu_custom_call.1} parent=79 // pred_check
          %p665 = pneg %p174
        $region94: #{tpu_custom_call.1} parent=79 // pred_check_branch
          %667 = sbr.rel (%p665) target = $region96
        $region95: #{tpu_custom_call.1} parent=79 // pred_region
          %s668 = smul.u32 4, %s43
          %p669 = scmp.lt.s32.totalorder %s42, 1
          %s670 = scalar_select %p669, %s42, 1
          %p671 = scmp.lt.s32.totalorder %s668, 3
          %s672 = scalar_select %p671, %s668, 3
          %s673 = smul.addr %s670, 4
          %s674 = sadd.s32 %s672, %s673
          %s675 = scalar_lea.vmem %s4, %s674
          %s676 = smul.u32 4, %s43
        $region96: #{tpu_custom_call.1} parent=79 // pred_fallthru
          _
      $region80: #{tpu_custom_call.1} parent=5 // pred_fallthru
        _
      %p677 = scmp.le.s32.totalorder 1, %s35
      %p678 = scmp.lt.s32.totalorder %s35, 3
      %p679 = pnand %p677, %p678
      %p680 = pneg %p679
      // Predicated region
      $region97: #{tpu_custom_call.1} parent=5 // pred_check
        _
      $region98: #{tpu_custom_call.1} parent=5 // pred_check_branch
        %682 = sbr.rel (%p679) target = $region100
      $region99: #{tpu_custom_call.1} parent=5 // pred_region
        %s683 = ssub.s32 %s35, 1
        // Predicated region
        $region101: #{tpu_custom_call.1} parent=99 // pred_check
          %p684 = pneg %p68
        $region102: #{tpu_custom_call.1} parent=99 // pred_check_branch
          %686 = sbr.rel (%p684) target = $region104
        $region103: #{tpu_custom_call.1} parent=99 // pred_region
          %687 = dma.done [#allocation4], 16
        $region104: #{tpu_custom_call.1} parent=99 // pred_fallthru
          _
        %688 = sfence
        %p689 = pneg %p68
        %p690 = pneg %p65
        %s691 = smul.u32 4, %s45
        %p692 = scmp.lt.s32.totalorder %s44, 1
        %s693 = scalar_select %p692, %s44, 1
        %p694 = scmp.lt.s32.totalorder %s691, 3
        %s695 = scalar_select %p694, %s691, 3
        %s696 = smul.addr %s693, 8
        %s697 = sadd.s32 %s695, %s696
        %s698 = smul.addr %s697, 8
        %s699 = scalar_lea.vmem %s1, %s698
        %p700 = pneg %p96
        %p701 = pneg %p93
        %s702 = smul.u32 4, %s45
        %p703 = scmp.lt.s32.totalorder %s44, 1
        %s704 = scalar_select %p703, %s44, 1
        %p705 = scmp.lt.s32.totalorder %s702, 3
        %s706 = scalar_select %p705, %s702, 3
        %s707 = smul.addr %s704, 8
        %s708 = sadd.s32 %s706, %s707
        %s709 = smul.addr %s708, 8
        %s710 = scalar_lea.vmem %s2, %s709
        %p711 = pneg %p124
        %p712 = pneg %p121
        %s713 = smul.u32 4, %s45
        %p714 = scmp.lt.s32.totalorder %s44, 1
        %s715 = scalar_select %p714, %s44, 1
        %p716 = scmp.lt.s32.totalorder %s713, 3
        %s717 = scalar_select %p716, %s713, 3
        %s718 = smul.addr %s715, 8
        %s719 = sadd.s32 %s717, %s718
        %s720 = smul.addr %s719, 4
        %s721 = scalar_lea.vmem %s3, %s720
        %p722 = pneg %p152
        %p723 = pneg %p149
        %s724 = smul.u32 4, %s45
        %p725 = scmp.lt.s32.totalorder %s44, 1
        %s726 = scalar_select %p725, %s44, 1
        %p727 = scmp.lt.s32.totalorder %s724, 3
        %s728 = scalar_select %p727, %s724, 3
        %s729 = smul.addr %s726, 4
        %s730 = sadd.s32 %s728, %s729
        %s731 = scalar_lea.vmem %s4, %s730
        %p732 = pneg %p180
        %p733 = pneg %p177
        %p734 = pneg %p201
        %p735 = pneg %p198
        %p736 = pneg %p222
        %p737 = pneg %p219
        %p738 = pneg %p243
        %p739 = pneg %p240
        %p740 = pneg %p264
        %p741 = pneg %p261
        %p742 = pneg %p285
        %p743 = pneg %p282
        %p744 = pneg %p306
        %p745 = pneg %p303
        %p746 = pneg %p327
        %p747 = pneg %p324
        %p748 = pneg %p348
        %p749 = pneg %p345
        %p750 = pneg %p369
        %p751 = pneg %p366
        %p752 = pneg %p390
        %p753 = pneg %p387
        %p754 = pneg %p411
        %p755 = pneg %p408
        %p756 = pneg %p432
        %p757 = pneg %p429
        %p758 = pneg %p453
        %p759 = pneg %p450
        %p760 = pneg %p474
        %p761 = pneg %p471
        %p762 = pneg %p495
        %p763 = pneg %p492
        %p764 = pneg %p523
        %p765 = pneg %p520
        %s766 = sand.u32 %s510, 1
        %s767 = scalar_lea.sflag [#allocation3], %s766
        %s768 = sand.u32 %s510, 1
        %s769 = smul.addr %s768, 64
        %s770 = scalar_lea.vmem [#allocation5], %s769
        %p771 = pneg %p551
        %p772 = pneg %p548
        %s773 = sand.u32 %s538, 1
        %s774 = scalar_lea.sflag [#allocation7], %s773
        %s775 = sand.u32 %s538, 1
        %s776 = smul.addr %s775, 64
        %s777 = scalar_lea.vmem [#allocation6], %s776
        %s778 = smul.u32 4, %s45
        %p779 = scmp.lt.s32.totalorder %s44, 1
        %s780 = scalar_select %p779, %s44, 1
        %p781 = scmp.lt.s32.totalorder %s778, 3
        %s782 = scalar_select %p781, %s778, 3
        %s783 = smul.addr %s780, 8
        %s784 = sadd.s32 %s782, %s783
        %s785 = smul.addr %s784, 8
        %s786 = scalar_lea.vmem %s1, %s785
        %s787 = smul.u32 4, %s45
        %s788 = smul.u32 4, %s45
        %p789 = scmp.lt.s32.totalorder %s44, 1
        %s790 = scalar_select %p789, %s44, 1
        %p791 = scmp.lt.s32.totalorder %s788, 3
        %s792 = scalar_select %p791, %s788, 3
        %s793 = smul.addr %s790, 8
        %s794 = sadd.s32 %s792, %s793
        %s795 = smul.addr %s794, 8
        %s796 = scalar_lea.vmem %s2, %s795
        %s797 = smul.u32 4, %s45
        %s798 = smul.u32 4, %s45
        %p799 = scmp.lt.s32.totalorder %s44, 1
        %s800 = scalar_select %p799, %s44, 1
        %p801 = scmp.lt.s32.totalorder %s798, 3
        %s802 = scalar_select %p801, %s798, 3
        %s803 = smul.addr %s800, 8
        %s804 = sadd.s32 %s802, %s803
        %s805 = smul.addr %s804, 4
        %s806 = scalar_lea.vmem %s3, %s805
        %s807 = smul.u32 4, %s45
        %s808 = smul.u32 4, %s45
        %p809 = scmp.lt.s32.totalorder %s44, 1
        %s810 = scalar_select %p809, %s44, 1
        %p811 = scmp.lt.s32.totalorder %s808, 3
        %s812 = scalar_select %p811, %s808, 3
        %s813 = smul.addr %s810, 4
        %s814 = sadd.s32 %s812, %s813
        %s815 = scalar_lea.vmem %s4, %s814
        %s816 = smul.u32 4, %s45
        %s817 = smul.u32 4, %s45
        %s818 = smul.u32 4, %s45
        %s820 = sld [smem:[#allocation2 + %s44]]
        %v821 = vld [vmem:[%s786] sm:$0xff]
        %v822 = vld [vmem:[%s786 + $0x8] sm:$0xff]
        %v823 = vld [vmem:[%s786 + $0x10] sm:$0xff]
        %v824 = vld [vmem:[%s786 + $0x18] sm:$0xff]
        %v825 = vld [vmem:[%s786 + $0x20] sm:$0xff]
        %v826 = vld [vmem:[%s786 + $0x28] sm:$0xff]
        %v827 = vld [vmem:[%s786 + $0x30] sm:$0xff]
        %v828 = vld [vmem:[%s786 + $0x38] sm:$0xff]
        %v829 = vld [vmem:[%s796] sm:$0xff]
        %v830 = vld [vmem:[%s796 + $0x8] sm:$0xff]
        %v831 = vld [vmem:[%s796 + $0x10] sm:$0xff]
        %v832 = vld [vmem:[%s796 + $0x18] sm:$0xff]
        %v833 = vld [vmem:[%s796 + $0x20] sm:$0xff]
        %v834 = vld [vmem:[%s796 + $0x28] sm:$0xff]
        %v835 = vld [vmem:[%s796 + $0x30] sm:$0xff]
        %v836 = vld [vmem:[%s796 + $0x38] sm:$0xff]
        %v837 = vstv %s820
        %v838 = vmul.f32 %v837, %v821
        %v839 = vmul.f32 %v837, %v822
        %v840 = vmul.f32 %v837, %v823
        %v841 = vmul.f32 %v837, %v824
        %v842 = vmul.f32 %v837, %v825
        %v843 = vmul.f32 %v837, %v826
        %v844 = vmul.f32 %v837, %v827
        %v845 = vmul.f32 %v837, %v828
        %s846 = ssub.f32 1.0, %s820
        %v847 = vstv %s846
        %v848 = vmul.f32 %v847, %v829
        %v849 = vmul.f32 %v847, %v830
        %v850 = vmul.f32 %v847, %v831
        %v851 = vmul.f32 %v847, %v832
        %v852 = vmul.f32 %v847, %v833
        %v853 = vmul.f32 %v847, %v834
        %v854 = vmul.f32 %v847, %v835
        %v855 = vmul.f32 %v847, %v836
        %v856 = vadd.f32 %v838, %v848
        %v857 = vadd.f32 %v839, %v849
        %v858 = vadd.f32 %v840, %v850
        %v859 = vadd.f32 %v841, %v851
        %v860 = vadd.f32 %v842, %v852
        %v861 = vadd.f32 %v843, %v853
        %v862 = vadd.f32 %v844, %v854
        %v863 = vadd.f32 %v845, %v855
        %v864 = vsub.f32 %v821, %v829
        %v865 = vsub.f32 %v822, %v830
        %v866 = vsub.f32 %v823, %v831
        %v867 = vsub.f32 %v824, %v832
        %v868 = vsub.f32 %v825, %v833
        %v869 = vsub.f32 %v826, %v834
        %v870 = vsub.f32 %v827, %v835
        %v871 = vsub.f32 %v828, %v836
        %872 = vst [vmem:[%s770] sm:$0xff] %v864
        %873 = vst [vmem:[%s770 + $0x8] sm:$0xff] %v865
        %874 = vst [vmem:[%s770 + $0x10] sm:$0xff] %v866
        %875 = vst [vmem:[%s770 + $0x18] sm:$0xff] %v867
        %876 = vst [vmem:[%s770 + $0x20] sm:$0xff] %v868
        %877 = vst [vmem:[%s770 + $0x28] sm:$0xff] %v869
        %878 = vst [vmem:[%s770 + $0x30] sm:$0xff] %v870
        %879 = vst [vmem:[%s770 + $0x38] sm:$0xff] %v871
        %v880 = vld [vmem:[%s6] sm:$0xf]
        %v881 = vld [vmem:[%s6 + $0x4] sm:$0xf]
        %v882 = vld [vmem:[%s6 + $0x8] sm:$0xf]
        %v883 = vld [vmem:[%s6 + $0xc] sm:$0xf]
        %v884 = vpack.c.bf16 %v860, %v856
        %v885 = vpack.c.bf16 %v861, %v857
        %v886 = vpack.c.bf16 %v862, %v858
        %v887 = vpack.c.bf16 %v863, %v859
        %v888 = vld [vmem:[%s7] sm:$0xff]
        %v889 = vld [vmem:[%s7 + $0x8] sm:$0xff]
        %v890 = vld [vmem:[%s7 + $0x10] sm:$0xff]
        %v891 = vld [vmem:[%s7 + $0x18] sm:$0xff]
        %893 = vset.pattern.permute.xlu0 0
        %894 = vperm.xlu0 %893, %v888
        %v895 = vpop.permute.xlu0 %894
        %898 = vset.pattern.permute.xlu0 0
        %899 = vperm.xlu0 %898, %v889
        %v900 = vpop.permute.xlu0 %899
        %903 = vset.pattern.permute.xlu0 0
        %904 = vperm.xlu0 %903, %v890
        %v905 = vpop.permute.xlu0 %904
        %908 = vset.pattern.permute.xlu0 0
        %909 = vperm.xlu0 %908, %v891
        %v910 = vpop.permute.xlu0 %909
        %v916 = vunpack.c.l.b16 %v880
        %v917 = vunpack.c.l.b16 %v881
        %v918 = vunpack.c.l.b16 %v882
        %v919 = vunpack.c.l.b16 %v883
        %v920 = vpack.c.b16 %v917, %v916
        %v921 = vpack.c.b16 %v919, %v918
        %vm922 = vcmask 130048
        %v924 = vsel %vm922, %v920, 0
        %v927 = vsel %vm922, %v921, 0
        %929 = vmatprep.subr.bf16.mxu0 0
        %930 = vmatpush1.bf16.msra.mxu0 0
        %931 = vmatprep.subr.bf16.mxu0 0
        %932 = vmatpush1.bf16.msra.mxu0 0
        %933 = vmatprep.subr.bf16.mxu0 0
        %934 = vmatpush1.bf16.msra.mxu0 0
        %935 = vmatprep.subr.bf16.mxu0 0
        %936 = vmatpush1.bf16.msra.mxu0 0
        %937 = vmatprep.subr.bf16.mxu0 0
        %938 = vmatpush1.bf16.msra.mxu0 0
        %939 = vmatprep.subr.bf16.mxu0 0
        %940 = vmatpush1.bf16.msra.mxu0 0
        %941 = vmatprep.subr.bf16.mxu0 0
        %942 = vmatpush1.bf16.msra.mxu0 0
        %943 = vmatprep.subr.bf16.mxu0 %v885
        %944 = vmatpush1.bf16.msra.mxu0 %v884
        %945 = vmatprep.subr.bf16.mxu0 0
        %946 = vmatpush2.bf16.msra.mxu0 0
        %947 = vmatprep.subr.bf16.mxu0 0
        %948 = vmatpush2.bf16.msra.mxu0 0
        %949 = vmatprep.subr.bf16.mxu0 0
        %950 = vmatpush2.bf16.msra.mxu0 0
        %951 = vmatprep.subr.bf16.mxu0 0
        %952 = vmatpush2.bf16.msra.mxu0 0
        %953 = vmatprep.subr.bf16.mxu0 0
        %954 = vmatpush2.bf16.msra.mxu0 0
        %955 = vmatprep.subr.bf16.mxu0 0
        %956 = vmatpush2.bf16.msra.mxu0 0
        %957 = vmatprep.subr.bf16.mxu0 0
        %958 = vmatpush2.bf16.msra.mxu0 0
        %959 = vmatprep.subr.bf16.mxu0 0
        %960 = vmatpush2.bf16.msra.mxu0 0
        %961 = vmatprep.mubr.bf16.mxu0 0
        %962 = vmatmul.mubr.bf16.gmra.mxu0 %v924
        %v963 = vpop.f32.mrf.mxu0
        %v964 = vadd.f32 %v895, %v963
        %v965 = vpop.f32.mrf.mxu0
        %v966 = vadd.f32 %v895, %v965
        %v967 = vpop.f32.mrf.mxu0
        %v968 = vadd.f32 %v900, %v967
        %v969 = vpop.f32.mrf.mxu0
        %v970 = vadd.f32 %v900, %v969
        %971 = vmatprep.mubr.bf16.mxu0 0
        %972 = vmatmul.mubr.bf16.gmra.mxu0 %v927
        %v973 = vpop.f32.mrf.mxu0
        %v974 = vadd.f32 %v905, %v973
        %v975 = vpop.f32.mrf.mxu0
        %v976 = vadd.f32 %v905, %v975
        %v977 = vpop.f32.mrf.mxu0
        %v978 = vadd.f32 %v910, %v977
        %v979 = vpop.f32.mrf.mxu0
        %v980 = vadd.f32 %v910, %v979
        %981 = vdwg.mxu0
        %982 = vmatprep.subr.bf16.mxu0 0
        %983 = vmatpush1.bf16.msra.mxu0 0
        %984 = vmatprep.subr.bf16.mxu0 0
        %985 = vmatpush1.bf16.msra.mxu0 0
        %986 = vmatprep.subr.bf16.mxu0 0
        %987 = vmatpush1.bf16.msra.mxu0 0
        %988 = vmatprep.subr.bf16.mxu0 0
        %989 = vmatpush1.bf16.msra.mxu0 0
        %990 = vmatprep.subr.bf16.mxu0 0
        %991 = vmatpush1.bf16.msra.mxu0 0
        %992 = vmatprep.subr.bf16.mxu0 0
        %993 = vmatpush1.bf16.msra.mxu0 0
        %994 = vmatprep.subr.bf16.mxu0 0
        %995 = vmatpush1.bf16.msra.mxu0 0
        %996 = vmatprep.subr.bf16.mxu0 %v887
        %997 = vmatpush1.bf16.msra.mxu0 %v886
        %998 = vmatprep.subr.bf16.mxu0 0
        %999 = vmatpush2.bf16.msra.mxu0 0
        %1000 = vmatprep.subr.bf16.mxu0 0
        %1001 = vmatpush2.bf16.msra.mxu0 0
        %1002 = vmatprep.subr.bf16.mxu0 0
        %1003 = vmatpush2.bf16.msra.mxu0 0
        %1004 = vmatprep.subr.bf16.mxu0 0
        %1005 = vmatpush2.bf16.msra.mxu0 0
        %1006 = vmatprep.subr.bf16.mxu0 0
        %1007 = vmatpush2.bf16.msra.mxu0 0
        %1008 = vmatprep.subr.bf16.mxu0 0
        %1009 = vmatpush2.bf16.msra.mxu0 0
        %1010 = vmatprep.subr.bf16.mxu0 0
        %1011 = vmatpush2.bf16.msra.mxu0 0
        %1012 = vmatprep.subr.bf16.mxu0 0
        %1013 = vmatpush2.bf16.msra.mxu0 0
        %1014 = vmatprep.mubr.bf16.mxu0 0
        %1015 = vmatmul.mubr.bf16.gmra.mxu0 %v924
        %v1016 = vpop.f32.mrf.mxu0
        %v1017 = vadd.f32 %v895, %v1016
        %v1018 = vpop.f32.mrf.mxu0
        %v1019 = vadd.f32 %v895, %v1018
        %v1020 = vpop.f32.mrf.mxu0
        %v1021 = vadd.f32 %v900, %v1020
        %v1022 = vpop.f32.mrf.mxu0
        %v1023 = vadd.f32 %v900, %v1022
        %1024 = vmatprep.mubr.bf16.mxu0 0
        %1025 = vmatmul.mubr.bf16.gmra.mxu0 %v927
        %v1026 = vpop.f32.mrf.mxu0
        %v1027 = vadd.f32 %v905, %v1026
        %v1028 = vpop.f32.mrf.mxu0
        %v1029 = vadd.f32 %v905, %v1028
        %v1030 = vpop.f32.mrf.mxu0
        %v1031 = vadd.f32 %v910, %v1030
        %v1032 = vpop.f32.mrf.mxu0
        %v1033 = vadd.f32 %v910, %v1032
        %1034 = vdwg.mxu0
        %v1035 = vmul.f32 %v964, %v964
        %v1036 = vmul.f32 %v966, %v966
        %v1037 = vmul.f32 %v1017, %v1017
        %v1038 = vmul.f32 %v1019, %v1019
        %v1039 = vmul.f32 %v968, %v968
        %v1040 = vmul.f32 %v970, %v970
        %v1041 = vmul.f32 %v1021, %v1021
        %v1042 = vmul.f32 %v1023, %v1023
        %v1043 = vmul.f32 %v974, %v974
        %v1044 = vmul.f32 %v976, %v976
        %v1045 = vmul.f32 %v1027, %v1027
        %v1046 = vmul.f32 %v1029, %v1029
        %v1047 = vmul.f32 %v978, %v978
        %v1048 = vmul.f32 %v980, %v980
        %v1049 = vmul.f32 %v1031, %v1031
        %v1050 = vmul.f32 %v1033, %v1033
        %v1051 = vmul.f32 %v964, %v1035
        %v1052 = vmul.f32 %v966, %v1036
        %v1053 = vmul.f32 %v1017, %v1037
        %v1054 = vmul.f32 %v1019, %v1038
        %v1055 = vmul.f32 %v968, %v1039
        %v1056 = vmul.f32 %v970, %v1040
        %v1057 = vmul.f32 %v1021, %v1041
        %v1058 = vmul.f32 %v1023, %v1042
        %v1059 = vmul.f32 %v974, %v1043
        %v1060 = vmul.f32 %v976, %v1044
        %v1061 = vmul.f32 %v1027, %v1045
        %v1062 = vmul.f32 %v1029, %v1046
        %v1063 = vmul.f32 %v978, %v1047
        %v1064 = vmul.f32 %v980, %v1048
        %v1065 = vmul.f32 %v1031, %v1049
        %v1066 = vmul.f32 %v1033, %v1050
        %v1067 = vmul.f32 %v1051, 0.044715
        %v1068 = vmul.f32 %v1052, 0.044715
        %v1069 = vmul.f32 %v1053, 0.044715
        %v1070 = vmul.f32 %v1054, 0.044715
        %v1071 = vmul.f32 %v1055, 0.044715
        %v1072 = vmul.f32 %v1056, 0.044715
        %v1073 = vmul.f32 %v1057, 0.044715
        %v1074 = vmul.f32 %v1058, 0.044715
        %v1075 = vmul.f32 %v1059, 0.044715
        %v1076 = vmul.f32 %v1060, 0.044715
        %v1077 = vmul.f32 %v1061, 0.044715
        %v1078 = vmul.f32 %v1062, 0.044715
        %v1079 = vmul.f32 %v1063, 0.044715
        %v1080 = vmul.f32 %v1064, 0.044715
        %v1081 = vmul.f32 %v1065, 0.044715
        %v1082 = vmul.f32 %v1066, 0.044715
        %v1083 = vadd.f32 %v964, %v1067
        %v1084 = vadd.f32 %v966, %v1068
        %v1085 = vadd.f32 %v1017, %v1069
        %v1086 = vadd.f32 %v1019, %v1070
        %v1087 = vadd.f32 %v968, %v1071
        %v1088 = vadd.f32 %v970, %v1072
        %v1089 = vadd.f32 %v1021, %v1073
        %v1090 = vadd.f32 %v1023, %v1074
        %v1091 = vadd.f32 %v974, %v1075
        %v1092 = vadd.f32 %v976, %v1076
        %v1093 = vadd.f32 %v1027, %v1077
        %v1094 = vadd.f32 %v1029, %v1078
        %v1095 = vadd.f32 %v978, %v1079
        %v1096 = vadd.f32 %v980, %v1080
        %v1097 = vadd.f32 %v1031, %v1081
        %v1098 = vadd.f32 %v1033, %v1082
        %v1099 = vmul.f32 %v1083, 0.7978846
        %v1100 = vmul.f32 %v1084, 0.7978846
        %v1101 = vmul.f32 %v1085, 0.7978846
        %v1102 = vmul.f32 %v1086, 0.7978846
        %v1103 = vmul.f32 %v1087, 0.7978846
        %v1104 = vmul.f32 %v1088, 0.7978846
        %v1105 = vmul.f32 %v1089, 0.7978846
        %v1106 = vmul.f32 %v1090, 0.7978846
        %v1107 = vmul.f32 %v1091, 0.7978846
        %v1108 = vmul.f32 %v1092, 0.7978846
        %v1109 = vmul.f32 %v1093, 0.7978846
        %v1110 = vmul.f32 %v1094, 0.7978846
        %v1111 = vmul.f32 %v1095, 0.7978846
        %v1112 = vmul.f32 %v1096, 0.7978846
        %v1113 = vmul.f32 %v1097, 0.7978846
        %v1114 = vmul.f32 %v1098, 0.7978846
        %v1115 = vtanh.pop %v1099
        %v1116 = vtanh.pop %v1100
        %v1117 = vtanh.pop %v1101
        %v1118 = vtanh.pop %v1102
        %v1119 = vtanh.pop %v1103
        %v1120 = vtanh.pop %v1104
        %v1121 = vtanh.pop %v1105
        %v1122 = vtanh.pop %v1106
        %v1123 = vtanh.pop %v1107
        %v1124 = vtanh.pop %v1108
        %v1125 = vtanh.pop %v1109
        %v1126 = vtanh.pop %v1110
        %v1127 = vtanh.pop %v1111
        %v1128 = vtanh.pop %v1112
        %v1129 = vtanh.pop %v1113
        %v1130 = vtanh.pop %v1114
        %v1131 = vadd.f32 %v1115, 1.0
        %v1132 = vadd.f32 %v1116, 1.0
        %v1133 = vadd.f32 %v1117, 1.0
        %v1134 = vadd.f32 %v1118, 1.0
        %v1135 = vadd.f32 %v1119, 1.0
        %v1136 = vadd.f32 %v1120, 1.0
        %v1137 = vadd.f32 %v1121, 1.0
        %v1138 = vadd.f32 %v1122, 1.0
        %v1139 = vadd.f32 %v1123, 1.0
        %v1140 = vadd.f32 %v1124, 1.0
        %v1141 = vadd.f32 %v1125, 1.0
        %v1142 = vadd.f32 %v1126, 1.0
        %v1143 = vadd.f32 %v1127, 1.0
        %v1144 = vadd.f32 %v1128, 1.0
        %v1145 = vadd.f32 %v1129, 1.0
        %v1146 = vadd.f32 %v1130, 1.0
        %v1147 = vmul.f32 %v1131, 0.5
        %v1148 = vmul.f32 %v1132, 0.5
        %v1149 = vmul.f32 %v1133, 0.5
        %v1150 = vmul.f32 %v1134, 0.5
        %v1151 = vmul.f32 %v1135, 0.5
        %v1152 = vmul.f32 %v1136, 0.5
        %v1153 = vmul.f32 %v1137, 0.5
        %v1154 = vmul.f32 %v1138, 0.5
        %v1155 = vmul.f32 %v1139, 0.5
        %v1156 = vmul.f32 %v1140, 0.5
        %v1157 = vmul.f32 %v1141, 0.5
        %v1158 = vmul.f32 %v1142, 0.5
        %v1159 = vmul.f32 %v1143, 0.5
        %v1160 = vmul.f32 %v1144, 0.5
        %v1161 = vmul.f32 %v1145, 0.5
        %v1162 = vmul.f32 %v1146, 0.5
        %v1163 = vmul.f32 %v964, %v1147
        %v1164 = vmul.f32 %v966, %v1148
        %v1165 = vmul.f32 %v1017, %v1149
        %v1166 = vmul.f32 %v1019, %v1150
        %v1167 = vmul.f32 %v968, %v1151
        %v1168 = vmul.f32 %v970, %v1152
        %v1169 = vmul.f32 %v1021, %v1153
        %v1170 = vmul.f32 %v1023, %v1154
        %v1171 = vmul.f32 %v974, %v1155
        %v1172 = vmul.f32 %v976, %v1156
        %v1173 = vmul.f32 %v1027, %v1157
        %v1174 = vmul.f32 %v1029, %v1158
        %v1175 = vmul.f32 %v978, %v1159
        %v1176 = vmul.f32 %v980, %v1160
        %v1177 = vmul.f32 %v1031, %v1161
        %v1178 = vmul.f32 %v1033, %v1162
        %v1179 = vld [vmem:[%s8] sm:$0xf]
        %v1180 = vld [vmem:[%s8 + $0x4] sm:$0xf]
        %v1181 = vld [vmem:[%s8 + $0x8] sm:$0xf]
        %v1182 = vld [vmem:[%s8 + $0xc] sm:$0xf]
        %v1183 = vld [vmem:[%s8 + $0x10] sm:$0xf]
        %v1184 = vld [vmem:[%s8 + $0x14] sm:$0xf]
        %v1185 = vld [vmem:[%s8 + $0x18] sm:$0xf]
        %v1186 = vld [vmem:[%s8 + $0x1c] sm:$0xf]
        %v1187 = vld [vmem:[%s8 + $0x20] sm:$0xf]
        %v1188 = vld [vmem:[%s8 + $0x24] sm:$0xf]
        %v1189 = vld [vmem:[%s8 + $0x28] sm:$0xf]
        %v1190 = vld [vmem:[%s8 + $0x2c] sm:$0xf]
        %v1191 = vld [vmem:[%s8 + $0x30] sm:$0xf]
        %v1192 = vld [vmem:[%s8 + $0x34] sm:$0xf]
        %v1193 = vld [vmem:[%s8 + $0x38] sm:$0xf]
        %v1194 = vld [vmem:[%s8 + $0x3c] sm:$0xf]
        %v1195 = vld [vmem:[%s806] sm:$0xff]
        %v1196 = vld [vmem:[%s806 + $0x8] sm:$0xff]
        %v1197 = vld [vmem:[%s806 + $0x10] sm:$0xff]
        %v1198 = vld [vmem:[%s806 + $0x18] sm:$0xff]
        %v1199 = vld [vmem:[%s9] sm:$0xff]
        %v1200 = vld [vmem:[%s9 + $0x8] sm:$0xff]
        %v1201 = vld [vmem:[%s9 + $0x10] sm:$0xff]
        %v1202 = vld [vmem:[%s9 + $0x18] sm:$0xff]
        %v1203 = vld [vmem:[%s9 + $0x20] sm:$0xff]
        %v1204 = vld [vmem:[%s9 + $0x28] sm:$0xff]
        %v1205 = vld [vmem:[%s9 + $0x30] sm:$0xff]
        %v1206 = vld [vmem:[%s9 + $0x38] sm:$0xff]
        %v1207 = vld [vmem:[%s9 + $0x40] sm:$0xff]
        %v1208 = vld [vmem:[%s9 + $0x48] sm:$0xff]
        %v1209 = vld [vmem:[%s9 + $0x50] sm:$0xff]
        %v1210 = vld [vmem:[%s9 + $0x58] sm:$0xff]
        %v1211 = vld [vmem:[%s9 + $0x60] sm:$0xff]
        %v1212 = vld [vmem:[%s9 + $0x68] sm:$0xff]
        %v1213 = vld [vmem:[%s9 + $0x70] sm:$0xff]
        %v1214 = vld [vmem:[%s9 + $0x78] sm:$0xff]
        %1216 = vset.pattern.permute.xlu0 0
        %1217 = vperm.xlu0 %1216, %v1199
        %v1218 = vpop.permute.xlu0 %1217
        %1221 = vset.pattern.permute.xlu0 0
        %1222 = vperm.xlu0 %1221, %v1200
        %v1223 = vpop.permute.xlu0 %1222
        %1226 = vset.pattern.permute.xlu0 0
        %1227 = vperm.xlu0 %1226, %v1201
        %v1228 = vpop.permute.xlu0 %1227
        %1231 = vset.pattern.permute.xlu0 0
        %1232 = vperm.xlu0 %1231, %v1202
        %v1233 = vpop.permute.xlu0 %1232
        %1236 = vset.pattern.permute.xlu0 0
        %1237 = vperm.xlu0 %1236, %v1203
        %v1238 = vpop.permute.xlu0 %1237
        %1241 = vset.pattern.permute.xlu0 0
        %1242 = vperm.xlu0 %1241, %v1204
        %v1243 = vpop.permute.xlu0 %1242
        %1246 = vset.pattern.permute.xlu0 0
        %1247 = vperm.xlu0 %1246, %v1205
        %v1248 = vpop.permute.xlu0 %1247
        %1251 = vset.pattern.permute.xlu0 0
        %1252 = vperm.xlu0 %1251, %v1206
        %v1253 = vpop.permute.xlu0 %1252
        %1256 = vset.pattern.permute.xlu0 0
        %1257 = vperm.xlu0 %1256, %v1207
        %v1258 = vpop.permute.xlu0 %1257
        %1261 = vset.pattern.permute.xlu0 0
        %1262 = vperm.xlu0 %1261, %v1208
        %v1263 = vpop.permute.xlu0 %1262
        %1266 = vset.pattern.permute.xlu0 0
        %1267 = vperm.xlu0 %1266, %v1209
        %v1268 = vpop.permute.xlu0 %1267
        %1271 = vset.pattern.permute.xlu0 0
        %1272 = vperm.xlu0 %1271, %v1210
        %v1273 = vpop.permute.xlu0 %1272
        %1276 = vset.pattern.permute.xlu0 0
        %1277 = vperm.xlu0 %1276, %v1211
        %v1278 = vpop.permute.xlu0 %1277
        %1281 = vset.pattern.permute.xlu0 0
        %1282 = vperm.xlu0 %1281, %v1212
        %v1283 = vpop.permute.xlu0 %1282
        %1286 = vset.pattern.permute.xlu0 0
        %1287 = vperm.xlu0 %1286, %v1213
        %v1288 = vpop.permute.xlu0 %1287
        %1291 = vset.pattern.permute.xlu0 0
        %1292 = vperm.xlu0 %1291, %v1214
        %v1293 = vpop.permute.xlu0 %1292
        %v1311 = vunpack.c.l.b16 %v1179
        %v1312 = vunpack.c.l.b16 %v1180
        %v1313 = vunpack.c.l.b16 %v1181
        %v1314 = vunpack.c.l.b16 %v1182
        %v1315 = vunpack.c.l.b16 %v1183
        %v1316 = vunpack.c.l.b16 %v1184
        %v1317 = vunpack.c.l.b16 %v1185
        %v1318 = vunpack.c.l.b16 %v1186
        %v1319 = vunpack.c.l.b16 %v1187
        %v1320 = vunpack.c.l.b16 %v1188
        %v1321 = vunpack.c.l.b16 %v1189
        %v1322 = vunpack.c.l.b16 %v1190
        %v1323 = vunpack.c.l.b16 %v1191
        %v1324 = vunpack.c.l.b16 %v1192
        %v1325 = vunpack.c.l.b16 %v1193
        %v1326 = vunpack.c.l.b16 %v1194
        %v1327 = vpack.c.b16 %v1312, %v1311
        %v1328 = vpack.c.b16 %v1314, %v1313
        %v1329 = vpack.c.b16 %v1316, %v1315
        %v1330 = vpack.c.b16 %v1318, %v1317
        %v1331 = vpack.c.b16 %v1320, %v1319
        %v1332 = vpack.c.b16 %v1322, %v1321
        %v1333 = vpack.c.b16 %v1324, %v1323
        %v1334 = vpack.c.b16 %v1326, %v1325
        %v1339 = vunpack.c.l.b16 %v1195
        %v1340 = vunpack.c.h.b16 %v1195
        %v1341 = vunpack.c.l.b16 %v1196
        %v1342 = vunpack.c.h.b16 %v1196
        %v1343 = vunpack.c.l.b16 %v1197
        %v1344 = vunpack.c.h.b16 %v1197
        %v1345 = vunpack.c.l.b16 %v1198
        %v1346 = vunpack.c.h.b16 %v1198
        %v1347 = vpack.c.b16 %v1343, %v1339
        %v1348 = vpack.c.b16 %v1344, %v1340
        %v1349 = vpack.c.b16 %v1345, %v1341
        %v1350 = vpack.c.b16 %v1346, %v1342
        %v1356 = vsel %vm922, %v1327, 0
        %v1359 = vsel %vm922, %v1328, 0
        %v1362 = vsel %vm922, %v1329, 0
        %v1365 = vsel %vm922, %v1330, 0
        %v1368 = vsel %vm922, %v1331, 0
        %v1371 = vsel %vm922, %v1332, 0
        %v1374 = vsel %vm922, %v1333, 0
        %v1377 = vsel %vm922, %v1334, 0
        %1379 = vmatprep.subr.bf16.mxu0 0
        %1380 = vmatpush1.bf16.msra.mxu0 0
        %1381 = vmatprep.subr.bf16.mxu0 0
        %1382 = vmatpush1.bf16.msra.mxu0 0
        %1383 = vmatprep.subr.bf16.mxu0 0
        %1384 = vmatpush1.bf16.msra.mxu0 0
        %1385 = vmatprep.subr.bf16.mxu0 0
        %1386 = vmatpush1.bf16.msra.mxu0 0
        %1387 = vmatprep.subr.bf16.mxu0 0
        %1388 = vmatpush1.bf16.msra.mxu0 0
        %1389 = vmatprep.subr.bf16.mxu0 0
        %1390 = vmatpush1.bf16.msra.mxu0 0
        %1391 = vmatprep.subr.bf16.mxu0 0
        %1392 = vmatpush1.bf16.msra.mxu0 0
        %1393 = vmatprep.subr.bf16.mxu0 %v1348
        %1394 = vmatpush1.bf16.msra.mxu0 %v1347
        %1395 = vmatprep.subr.bf16.mxu0 0
        %1396 = vmatpush2.bf16.msra.mxu0 0
        %1397 = vmatprep.subr.bf16.mxu0 0
        %1398 = vmatpush2.bf16.msra.mxu0 0
        %1399 = vmatprep.subr.bf16.mxu0 0
        %1400 = vmatpush2.bf16.msra.mxu0 0
        %1401 = vmatprep.subr.bf16.mxu0 0
        %1402 = vmatpush2.bf16.msra.mxu0 0
        %1403 = vmatprep.subr.bf16.mxu0 0
        %1404 = vmatpush2.bf16.msra.mxu0 0
        %1405 = vmatprep.subr.bf16.mxu0 0
        %1406 = vmatpush2.bf16.msra.mxu0 0
        %1407 = vmatprep.subr.bf16.mxu0 0
        %1408 = vmatpush2.bf16.msra.mxu0 0
        %1409 = vmatprep.subr.bf16.mxu0 0
        %1410 = vmatpush2.bf16.msra.mxu0 0
        %1411 = vmatprep.mubr.bf16.mxu0 0
        %1412 = vmatmul.mubr.bf16.gmra.mxu0 %v1356
        %v1413 = vpop.f32.mrf.mxu0
        %v1414 = vadd.f32 %v1218, %v1413
        %v1415 = vpop.f32.mrf.mxu0
        %v1416 = vadd.f32 %v1218, %v1415
        %v1417 = vpop.f32.mrf.mxu0
        %v1418 = vadd.f32 %v1223, %v1417
        %v1419 = vpop.f32.mrf.mxu0
        %v1420 = vadd.f32 %v1223, %v1419
        %1421 = vmatprep.mubr.bf16.mxu0 0
        %1422 = vmatmul.mubr.bf16.gmra.mxu0 %v1359
        %v1423 = vpop.f32.mrf.mxu0
        %v1424 = vadd.f32 %v1228, %v1423
        %v1425 = vpop.f32.mrf.mxu0
        %v1426 = vadd.f32 %v1228, %v1425
        %v1427 = vpop.f32.mrf.mxu0
        %v1428 = vadd.f32 %v1233, %v1427
        %v1429 = vpop.f32.mrf.mxu0
        %v1430 = vadd.f32 %v1233, %v1429
        %1431 = vmatprep.mubr.bf16.mxu0 0
        %1432 = vmatmul.mubr.bf16.gmra.mxu0 %v1362
        %v1433 = vpop.f32.mrf.mxu0
        %v1434 = vadd.f32 %v1238, %v1433
        %v1435 = vpop.f32.mrf.mxu0
        %v1436 = vadd.f32 %v1238, %v1435
        %v1437 = vpop.f32.mrf.mxu0
        %v1438 = vadd.f32 %v1243, %v1437
        %v1439 = vpop.f32.mrf.mxu0
        %v1440 = vadd.f32 %v1243, %v1439
        %1441 = vmatprep.mubr.bf16.mxu0 0
        %1442 = vmatmul.mubr.bf16.gmra.mxu0 %v1365
        %v1443 = vpop.f32.mrf.mxu0
        %v1444 = vadd.f32 %v1248, %v1443
        %v1445 = vpop.f32.mrf.mxu0
        %v1446 = vadd.f32 %v1248, %v1445
        %v1447 = vpop.f32.mrf.mxu0
        %v1448 = vadd.f32 %v1253, %v1447
        %v1449 = vpop.f32.mrf.mxu0
        %v1450 = vadd.f32 %v1253, %v1449
        %1451 = vmatprep.mubr.bf16.mxu0 0
        %1452 = vmatmul.mubr.bf16.gmra.mxu0 %v1368
        %v1453 = vpop.f32.mrf.mxu0
        %v1454 = vadd.f32 %v1258, %v1453
        %v1455 = vpop.f32.mrf.mxu0
        %v1456 = vadd.f32 %v1258, %v1455
        %v1457 = vpop.f32.mrf.mxu0
        %v1458 = vadd.f32 %v1263, %v1457
        %v1459 = vpop.f32.mrf.mxu0
        %v1460 = vadd.f32 %v1263, %v1459
        %1461 = vmatprep.mubr.bf16.mxu0 0
        %1462 = vmatmul.mubr.bf16.gmra.mxu0 %v1371
        %v1463 = vpop.f32.mrf.mxu0
        %v1464 = vadd.f32 %v1268, %v1463
        %v1465 = vpop.f32.mrf.mxu0
        %v1466 = vadd.f32 %v1268, %v1465
        %v1467 = vpop.f32.mrf.mxu0
        %v1468 = vadd.f32 %v1273, %v1467
        %v1469 = vpop.f32.mrf.mxu0
        %v1470 = vadd.f32 %v1273, %v1469
        %1471 = vmatprep.mubr.bf16.mxu0 0
        %1472 = vmatmul.mubr.bf16.gmra.mxu0 %v1374
        %v1473 = vpop.f32.mrf.mxu0
        %v1474 = vadd.f32 %v1278, %v1473
        %v1475 = vpop.f32.mrf.mxu0
        %v1476 = vadd.f32 %v1278, %v1475
        %v1477 = vpop.f32.mrf.mxu0
        %v1478 = vadd.f32 %v1283, %v1477
        %v1479 = vpop.f32.mrf.mxu0
        %v1480 = vadd.f32 %v1283, %v1479
        %1481 = vmatprep.mubr.bf16.mxu0 0
        %1482 = vmatmul.mubr.bf16.gmra.mxu0 %v1377
        %v1483 = vpop.f32.mrf.mxu0
        %v1484 = vadd.f32 %v1288, %v1483
        %v1485 = vpop.f32.mrf.mxu0
        %v1486 = vadd.f32 %v1288, %v1485
        %v1487 = vpop.f32.mrf.mxu0
        %v1488 = vadd.f32 %v1293, %v1487
        %v1489 = vpop.f32.mrf.mxu0
        %v1490 = vadd.f32 %v1293, %v1489
        %1491 = vdwg.mxu0
        %1492 = vmatprep.subr.bf16.mxu0 0
        %1493 = vmatpush1.bf16.msra.mxu0 0
        %1494 = vmatprep.subr.bf16.mxu0 0
        %1495 = vmatpush1.bf16.msra.mxu0 0
        %1496 = vmatprep.subr.bf16.mxu0 0
        %1497 = vmatpush1.bf16.msra.mxu0 0
        %1498 = vmatprep.subr.bf16.mxu0 0
        %1499 = vmatpush1.bf16.msra.mxu0 0
        %1500 = vmatprep.subr.bf16.mxu0 0
        %1501 = vmatpush1.bf16.msra.mxu0 0
        %1502 = vmatprep.subr.bf16.mxu0 0
        %1503 = vmatpush1.bf16.msra.mxu0 0
        %1504 = vmatprep.subr.bf16.mxu0 0
        %1505 = vmatpush1.bf16.msra.mxu0 0
        %1506 = vmatprep.subr.bf16.mxu0 %v1350
        %1507 = vmatpush1.bf16.msra.mxu0 %v1349
        %1508 = vmatprep.subr.bf16.mxu0 0
        %1509 = vmatpush2.bf16.msra.mxu0 0
        %1510 = vmatprep.subr.bf16.mxu0 0
        %1511 = vmatpush2.bf16.msra.mxu0 0
        %1512 = vmatprep.subr.bf16.mxu0 0
        %1513 = vmatpush2.bf16.msra.mxu0 0
        %1514 = vmatprep.subr.bf16.mxu0 0
        %1515 = vmatpush2.bf16.msra.mxu0 0
        %1516 = vmatprep.subr.bf16.mxu0 0
        %1517 = vmatpush2.bf16.msra.mxu0 0
        %1518 = vmatprep.subr.bf16.mxu0 0
        %1519 = vmatpush2.bf16.msra.mxu0 0
        %1520 = vmatprep.subr.bf16.mxu0 0
        %1521 = vmatpush2.bf16.msra.mxu0 0
        %1522 = vmatprep.subr.bf16.mxu0 0
        %1523 = vmatpush2.bf16.msra.mxu0 0
        %1524 = vmatprep.mubr.bf16.mxu0 0
        %1525 = vmatmul.mubr.bf16.gmra.mxu0 %v1356
        %v1526 = vpop.f32.mrf.mxu0
        %v1527 = vadd.f32 %v1218, %v1526
        %v1528 = vpop.f32.mrf.mxu0
        %v1529 = vadd.f32 %v1218, %v1528
        %v1530 = vpop.f32.mrf.mxu0
        %v1531 = vadd.f32 %v1223, %v1530
        %v1532 = vpop.f32.mrf.mxu0
        %v1533 = vadd.f32 %v1223, %v1532
        %1534 = vmatprep.mubr.bf16.mxu0 0
        %1535 = vmatmul.mubr.bf16.gmra.mxu0 %v1359
        %v1536 = vpop.f32.mrf.mxu0
        %v1537 = vadd.f32 %v1228, %v1536
        %v1538 = vpop.f32.mrf.mxu0
        %v1539 = vadd.f32 %v1228, %v1538
        %v1540 = vpop.f32.mrf.mxu0
        %v1541 = vadd.f32 %v1233, %v1540
        %v1542 = vpop.f32.mrf.mxu0
        %v1543 = vadd.f32 %v1233, %v1542
        %1544 = vmatprep.mubr.bf16.mxu0 0
        %1545 = vmatmul.mubr.bf16.gmra.mxu0 %v1362
        %v1546 = vpop.f32.mrf.mxu0
        %v1547 = vadd.f32 %v1238, %v1546
        %v1548 = vpop.f32.mrf.mxu0
        %v1549 = vadd.f32 %v1238, %v1548
        %v1550 = vpop.f32.mrf.mxu0
        %v1551 = vadd.f32 %v1243, %v1550
        %v1552 = vpop.f32.mrf.mxu0
        %v1553 = vadd.f32 %v1243, %v1552
        %1554 = vmatprep.mubr.bf16.mxu0 0
        %1555 = vmatmul.mubr.bf16.gmra.mxu0 %v1365
        %v1556 = vpop.f32.mrf.mxu0
        %v1557 = vadd.f32 %v1248, %v1556
        %v1558 = vpop.f32.mrf.mxu0
        %v1559 = vadd.f32 %v1248, %v1558
        %v1560 = vpop.f32.mrf.mxu0
        %v1561 = vadd.f32 %v1253, %v1560
        %v1562 = vpop.f32.mrf.mxu0
        %v1563 = vadd.f32 %v1253, %v1562
        %1564 = vmatprep.mubr.bf16.mxu0 0
        %1565 = vmatmul.mubr.bf16.gmra.mxu0 %v1368
        %v1566 = vpop.f32.mrf.mxu0
        %v1567 = vadd.f32 %v1258, %v1566
        %v1568 = vpop.f32.mrf.mxu0
        %v1569 = vadd.f32 %v1258, %v1568
        %v1570 = vpop.f32.mrf.mxu0
        %v1571 = vadd.f32 %v1263, %v1570
        %v1572 = vpop.f32.mrf.mxu0
        %v1573 = vadd.f32 %v1263, %v1572
        %1574 = vmatprep.mubr.bf16.mxu0 0
        %1575 = vmatmul.mubr.bf16.gmra.mxu0 %v1371
        %v1576 = vpop.f32.mrf.mxu0
        %v1577 = vadd.f32 %v1268, %v1576
        %v1578 = vpop.f32.mrf.mxu0
        %v1579 = vadd.f32 %v1268, %v1578
        %v1580 = vpop.f32.mrf.mxu0
        %v1581 = vadd.f32 %v1273, %v1580
        %v1582 = vpop.f32.mrf.mxu0
        %v1583 = vadd.f32 %v1273, %v1582
        %1584 = vmatprep.mubr.bf16.mxu0 0
        %1585 = vmatmul.mubr.bf16.gmra.mxu0 %v1374
        %v1586 = vpop.f32.mrf.mxu0
        %v1587 = vadd.f32 %v1278, %v1586
        %v1588 = vpop.f32.mrf.mxu0
        %v1589 = vadd.f32 %v1278, %v1588
        %v1590 = vpop.f32.mrf.mxu0
        %v1591 = vadd.f32 %v1283, %v1590
        %v1592 = vpop.f32.mrf.mxu0
        %v1593 = vadd.f32 %v1283, %v1592
        %1594 = vmatprep.mubr.bf16.mxu0 0
        %1595 = vmatmul.mubr.bf16.gmra.mxu0 %v1377
        %v1596 = vpop.f32.mrf.mxu0
        %v1597 = vadd.f32 %v1288, %v1596
        %v1598 = vpop.f32.mrf.mxu0
        %v1599 = vadd.f32 %v1288, %v1598
        %v1600 = vpop.f32.mrf.mxu0
        %v1601 = vadd.f32 %v1293, %v1600
        %v1602 = vpop.f32.mrf.mxu0
        %v1603 = vadd.f32 %v1293, %v1602
        %1604 = vdwg.mxu0
        %v1605 = vmul.f32 %v1414, %v1414
        %v1606 = vmul.f32 %v1416, %v1416
        %v1607 = vmul.f32 %v1527, %v1527
        %v1608 = vmul.f32 %v1529, %v1529
        %v1609 = vmul.f32 %v1418, %v1418
        %v1610 = vmul.f32 %v1420, %v1420
        %v1611 = vmul.f32 %v1531, %v1531
        %v1612 = vmul.f32 %v1533, %v1533
        %v1613 = vmul.f32 %v1424, %v1424
        %v1614 = vmul.f32 %v1426, %v1426
        %v1615 = vmul.f32 %v1537, %v1537
        %v1616 = vmul.f32 %v1539, %v1539
        %v1617 = vmul.f32 %v1428, %v1428
        %v1618 = vmul.f32 %v1430, %v1430
        %v1619 = vmul.f32 %v1541, %v1541
        %v1620 = vmul.f32 %v1543, %v1543
        %v1621 = vmul.f32 %v1434, %v1434
        %v1622 = vmul.f32 %v1436, %v1436
        %v1623 = vmul.f32 %v1547, %v1547
        %v1624 = vmul.f32 %v1549, %v1549
        %v1625 = vmul.f32 %v1438, %v1438
        %v1626 = vmul.f32 %v1440, %v1440
        %v1627 = vmul.f32 %v1551, %v1551
        %v1628 = vmul.f32 %v1553, %v1553
        %v1629 = vmul.f32 %v1444, %v1444
        %v1630 = vmul.f32 %v1446, %v1446
        %v1631 = vmul.f32 %v1557, %v1557
        %v1632 = vmul.f32 %v1559, %v1559
        %v1633 = vmul.f32 %v1448, %v1448
        %v1634 = vmul.f32 %v1450, %v1450
        %v1635 = vmul.f32 %v1561, %v1561
        %v1636 = vmul.f32 %v1563, %v1563
        %v1637 = vmul.f32 %v1454, %v1454
        %v1638 = vmul.f32 %v1456, %v1456
        %v1639 = vmul.f32 %v1567, %v1567
        %v1640 = vmul.f32 %v1569, %v1569
        %v1641 = vmul.f32 %v1458, %v1458
        %v1642 = vmul.f32 %v1460, %v1460
        %v1643 = vmul.f32 %v1571, %v1571
        %v1644 = vmul.f32 %v1573, %v1573
        %v1645 = vmul.f32 %v1464, %v1464
        %v1646 = vmul.f32 %v1466, %v1466
        %v1647 = vmul.f32 %v1577, %v1577
        %v1648 = vmul.f32 %v1579, %v1579
        %v1649 = vmul.f32 %v1468, %v1468
        %v1650 = vmul.f32 %v1470, %v1470
        %v1651 = vmul.f32 %v1581, %v1581
        %v1652 = vmul.f32 %v1583, %v1583
        %v1653 = vmul.f32 %v1474, %v1474
        %v1654 = vmul.f32 %v1476, %v1476
        %v1655 = vmul.f32 %v1587, %v1587
        %v1656 = vmul.f32 %v1589, %v1589
        %v1657 = vmul.f32 %v1478, %v1478
        %v1658 = vmul.f32 %v1480, %v1480
        %v1659 = vmul.f32 %v1591, %v1591
        %v1660 = vmul.f32 %v1593, %v1593
        %v1661 = vmul.f32 %v1484, %v1484
        %v1662 = vmul.f32 %v1486, %v1486
        %v1663 = vmul.f32 %v1597, %v1597
        %v1664 = vmul.f32 %v1599, %v1599
        %v1665 = vmul.f32 %v1488, %v1488
        %v1666 = vmul.f32 %v1490, %v1490
        %v1667 = vmul.f32 %v1601, %v1601
        %v1668 = vmul.f32 %v1603, %v1603
        %v1669 = vmul.f32 %v1414, %v1605
        %v1670 = vmul.f32 %v1416, %v1606
        %v1671 = vmul.f32 %v1527, %v1607
        %v1672 = vmul.f32 %v1529, %v1608
        %v1673 = vmul.f32 %v1418, %v1609
        %v1674 = vmul.f32 %v1420, %v1610
        %v1675 = vmul.f32 %v1531, %v1611
        %v1676 = vmul.f32 %v1533, %v1612
        %v1677 = vmul.f32 %v1424, %v1613
        %v1678 = vmul.f32 %v1426, %v1614
        %v1679 = vmul.f32 %v1537, %v1615
        %v1680 = vmul.f32 %v1539, %v1616
        %v1681 = vmul.f32 %v1428, %v1617
        %v1682 = vmul.f32 %v1430, %v1618
        %v1683 = vmul.f32 %v1541, %v1619
        %v1684 = vmul.f32 %v1543, %v1620
        %v1685 = vmul.f32 %v1434, %v1621
        %v1686 = vmul.f32 %v1436, %v1622
        %v1687 = vmul.f32 %v1547, %v1623
        %v1688 = vmul.f32 %v1549, %v1624
        %v1689 = vmul.f32 %v1438, %v1625
        %v1690 = vmul.f32 %v1440, %v1626
        %v1691 = vmul.f32 %v1551, %v1627
        %v1692 = vmul.f32 %v1553, %v1628
        %v1693 = vmul.f32 %v1444, %v1629
        %v1694 = vmul.f32 %v1446, %v1630
        %v1695 = vmul.f32 %v1557, %v1631
        %v1696 = vmul.f32 %v1559, %v1632
        %v1697 = vmul.f32 %v1448, %v1633
        %v1698 = vmul.f32 %v1450, %v1634
        %v1699 = vmul.f32 %v1561, %v1635
        %v1700 = vmul.f32 %v1563, %v1636
        %v1701 = vmul.f32 %v1454, %v1637
        %v1702 = vmul.f32 %v1456, %v1638
        %v1703 = vmul.f32 %v1567, %v1639
        %v1704 = vmul.f32 %v1569, %v1640
        %v1705 = vmul.f32 %v1458, %v1641
        %v1706 = vmul.f32 %v1460, %v1642
        %v1707 = vmul.f32 %v1571, %v1643
        %v1708 = vmul.f32 %v1573, %v1644
        %v1709 = vmul.f32 %v1464, %v1645
        %v1710 = vmul.f32 %v1466, %v1646
        %v1711 = vmul.f32 %v1577, %v1647
        %v1712 = vmul.f32 %v1579, %v1648
        %v1713 = vmul.f32 %v1468, %v1649
        %v1714 = vmul.f32 %v1470, %v1650
        %v1715 = vmul.f32 %v1581, %v1651
        %v1716 = vmul.f32 %v1583, %v1652
        %v1717 = vmul.f32 %v1474, %v1653
        %v1718 = vmul.f32 %v1476, %v1654
        %v1719 = vmul.f32 %v1587, %v1655
        %v1720 = vmul.f32 %v1589, %v1656
        %v1721 = vmul.f32 %v1478, %v1657
        %v1722 = vmul.f32 %v1480, %v1658
        %v1723 = vmul.f32 %v1591, %v1659
        %v1724 = vmul.f32 %v1593, %v1660
        %v1725 = vmul.f32 %v1484, %v1661
        %v1726 = vmul.f32 %v1486, %v1662
        %v1727 = vmul.f32 %v1597, %v1663
        %v1728 = vmul.f32 %v1599, %v1664
        %v1729 = vmul.f32 %v1488, %v1665
        %v1730 = vmul.f32 %v1490, %v1666
        %v1731 = vmul.f32 %v1601, %v1667
        %v1732 = vmul.f32 %v1603, %v1668
        %v1733 = vmul.f32 %v1669, 0.044715
        %v1734 = vmul.f32 %v1670, 0.044715
        %v1735 = vmul.f32 %v1671, 0.044715
        %v1736 = vmul.f32 %v1672, 0.044715
        %v1737 = vmul.f32 %v1673, 0.044715
        %v1738 = vmul.f32 %v1674, 0.044715
        %v1739 = vmul.f32 %v1675, 0.044715
        %v1740 = vmul.f32 %v1676, 0.044715
        %v1741 = vmul.f32 %v1677, 0.044715
        %v1742 = vmul.f32 %v1678, 0.044715
        %v1743 = vmul.f32 %v1679, 0.044715
        %v1744 = vmul.f32 %v1680, 0.044715
        %v1745 = vmul.f32 %v1681, 0.044715
        %v1746 = vmul.f32 %v1682, 0.044715
        %v1747 = vmul.f32 %v1683, 0.044715
        %v1748 = vmul.f32 %v1684, 0.044715
        %v1749 = vmul.f32 %v1685, 0.044715
        %v1750 = vmul.f32 %v1686, 0.044715
        %v1751 = vmul.f32 %v1687, 0.044715
        %v1752 = vmul.f32 %v1688, 0.044715
        %v1753 = vmul.f32 %v1689, 0.044715
        %v1754 = vmul.f32 %v1690, 0.044715
        %v1755 = vmul.f32 %v1691, 0.044715
        %v1756 = vmul.f32 %v1692, 0.044715
        %v1757 = vmul.f32 %v1693, 0.044715
        %v1758 = vmul.f32 %v1694, 0.044715
        %v1759 = vmul.f32 %v1695, 0.044715
        %v1760 = vmul.f32 %v1696, 0.044715
        %v1761 = vmul.f32 %v1697, 0.044715
        %v1762 = vmul.f32 %v1698, 0.044715
        %v1763 = vmul.f32 %v1699, 0.044715
        %v1764 = vmul.f32 %v1700, 0.044715
        %v1765 = vmul.f32 %v1701, 0.044715
        %v1766 = vmul.f32 %v1702, 0.044715
        %v1767 = vmul.f32 %v1703, 0.044715
        %v1768 = vmul.f32 %v1704, 0.044715
        %v1769 = vmul.f32 %v1705, 0.044715
        %v1770 = vmul.f32 %v1706, 0.044715
        %v1771 = vmul.f32 %v1707, 0.044715
        %v1772 = vmul.f32 %v1708, 0.044715
        %v1773 = vmul.f32 %v1709, 0.044715
        %v1774 = vmul.f32 %v1710, 0.044715
        %v1775 = vmul.f32 %v1711, 0.044715
        %v1776 = vmul.f32 %v1712, 0.044715
        %v1777 = vmul.f32 %v1713, 0.044715
        %v1778 = vmul.f32 %v1714, 0.044715
        %v1779 = vmul.f32 %v1715, 0.044715
        %v1780 = vmul.f32 %v1716, 0.044715
        %v1781 = vmul.f32 %v1717, 0.044715
        %v1782 = vmul.f32 %v1718, 0.044715
        %v1783 = vmul.f32 %v1719, 0.044715
        %v1784 = vmul.f32 %v1720, 0.044715
        %v1785 = vmul.f32 %v1721, 0.044715
        %v1786 = vmul.f32 %v1722, 0.044715
        %v1787 = vmul.f32 %v1723, 0.044715
        %v1788 = vmul.f32 %v1724, 0.044715
        %v1789 = vmul.f32 %v1725, 0.044715
        %v1790 = vmul.f32 %v1726, 0.044715
        %v1791 = vmul.f32 %v1727, 0.044715
        %v1792 = vmul.f32 %v1728, 0.044715
        %v1793 = vmul.f32 %v1729, 0.044715
        %v1794 = vmul.f32 %v1730, 0.044715
        %v1795 = vmul.f32 %v1731, 0.044715
        %v1796 = vmul.f32 %v1732, 0.044715
        %v1797 = vadd.f32 %v1414, %v1733
        %v1798 = vadd.f32 %v1416, %v1734
        %v1799 = vadd.f32 %v1527, %v1735
        %v1800 = vadd.f32 %v1529, %v1736
        %v1801 = vadd.f32 %v1418, %v1737
        %v1802 = vadd.f32 %v1420, %v1738
        %v1803 = vadd.f32 %v1531, %v1739
        %v1804 = vadd.f32 %v1533, %v1740
        %v1805 = vadd.f32 %v1424, %v1741
        %v1806 = vadd.f32 %v1426, %v1742
        %v1807 = vadd.f32 %v1537, %v1743
        %v1808 = vadd.f32 %v1539, %v1744
        %v1809 = vadd.f32 %v1428, %v1745
        %v1810 = vadd.f32 %v1430, %v1746
        %v1811 = vadd.f32 %v1541, %v1747
        %v1812 = vadd.f32 %v1543, %v1748
        %v1813 = vadd.f32 %v1434, %v1749
        %v1814 = vadd.f32 %v1436, %v1750
        %v1815 = vadd.f32 %v1547, %v1751
        %v1816 = vadd.f32 %v1549, %v1752
        %v1817 = vadd.f32 %v1438, %v1753
        %v1818 = vadd.f32 %v1440, %v1754
        %v1819 = vadd.f32 %v1551, %v1755
        %v1820 = vadd.f32 %v1553, %v1756
        %v1821 = vadd.f32 %v1444, %v1757
        %v1822 = vadd.f32 %v1446, %v1758
        %v1823 = vadd.f32 %v1557, %v1759
        %v1824 = vadd.f32 %v1559, %v1760
        %v1825 = vadd.f32 %v1448, %v1761
        %v1826 = vadd.f32 %v1450, %v1762
        %v1827 = vadd.f32 %v1561, %v1763
        %v1828 = vadd.f32 %v1563, %v1764
        %v1829 = vadd.f32 %v1454, %v1765
        %v1830 = vadd.f32 %v1456, %v1766
        %v1831 = vadd.f32 %v1567, %v1767
        %v1832 = vadd.f32 %v1569, %v1768
        %v1833 = vadd.f32 %v1458, %v1769
        %v1834 = vadd.f32 %v1460, %v1770
        %v1835 = vadd.f32 %v1571, %v1771
        %v1836 = vadd.f32 %v1573, %v1772
        %v1837 = vadd.f32 %v1464, %v1773
        %v1838 = vadd.f32 %v1466, %v1774
        %v1839 = vadd.f32 %v1577, %v1775
        %v1840 = vadd.f32 %v1579, %v1776
        %v1841 = vadd.f32 %v1468, %v1777
        %v1842 = vadd.f32 %v1470, %v1778
        %v1843 = vadd.f32 %v1581, %v1779
        %v1844 = vadd.f32 %v1583, %v1780
        %v1845 = vadd.f32 %v1474, %v1781
        %v1846 = vadd.f32 %v1476, %v1782
        %v1847 = vadd.f32 %v1587, %v1783
        %v1848 = vadd.f32 %v1589, %v1784
        %v1849 = vadd.f32 %v1478, %v1785
        %v1850 = vadd.f32 %v1480, %v1786
        %v1851 = vadd.f32 %v1591, %v1787
        %v1852 = vadd.f32 %v1593, %v1788
        %v1853 = vadd.f32 %v1484, %v1789
        %v1854 = vadd.f32 %v1486, %v1790
        %v1855 = vadd.f32 %v1597, %v1791
        %v1856 = vadd.f32 %v1599, %v1792
        %v1857 = vadd.f32 %v1488, %v1793
        %v1858 = vadd.f32 %v1490, %v1794
        %v1859 = vadd.f32 %v1601, %v1795
        %v1860 = vadd.f32 %v1603, %v1796
        %v1861 = vmul.f32 %v1797, 0.7978846
        %v1862 = vmul.f32 %v1798, 0.7978846
        %v1863 = vmul.f32 %v1799, 0.7978846
        %v1864 = vmul.f32 %v1800, 0.7978846
        %v1865 = vmul.f32 %v1801, 0.7978846
        %v1866 = vmul.f32 %v1802, 0.7978846
        %v1867 = vmul.f32 %v1803, 0.7978846
        %v1868 = vmul.f32 %v1804, 0.7978846
        %v1869 = vmul.f32 %v1805, 0.7978846
        %v1870 = vmul.f32 %v1806, 0.7978846
        %v1871 = vmul.f32 %v1807, 0.7978846
        %v1872 = vmul.f32 %v1808, 0.7978846
        %v1873 = vmul.f32 %v1809, 0.7978846
        %v1874 = vmul.f32 %v1810, 0.7978846
        %v1875 = vmul.f32 %v1811, 0.7978846
        %v1876 = vmul.f32 %v1812, 0.7978846
        %v1877 = vmul.f32 %v1813, 0.7978846
        %v1878 = vmul.f32 %v1814, 0.7978846
        %v1879 = vmul.f32 %v1815, 0.7978846
        %v1880 = vmul.f32 %v1816, 0.7978846
        %v1881 = vmul.f32 %v1817, 0.7978846
        %v1882 = vmul.f32 %v1818, 0.7978846
        %v1883 = vmul.f32 %v1819, 0.7978846
        %v1884 = vmul.f32 %v1820, 0.7978846
        %v1885 = vmul.f32 %v1821, 0.7978846
        %v1886 = vmul.f32 %v1822, 0.7978846
        %v1887 = vmul.f32 %v1823, 0.7978846
        %v1888 = vmul.f32 %v1824, 0.7978846
        %v1889 = vmul.f32 %v1825, 0.7978846
        %v1890 = vmul.f32 %v1826, 0.7978846
        %v1891 = vmul.f32 %v1827, 0.7978846
        %v1892 = vmul.f32 %v1828, 0.7978846
        %v1893 = vmul.f32 %v1829, 0.7978846
        %v1894 = vmul.f32 %v1830, 0.7978846
        %v1895 = vmul.f32 %v1831, 0.7978846
        %v1896 = vmul.f32 %v1832, 0.7978846
        %v1897 = vmul.f32 %v1833, 0.7978846
        %v1898 = vmul.f32 %v1834, 0.7978846
        %v1899 = vmul.f32 %v1835, 0.7978846
        %v1900 = vmul.f32 %v1836, 0.7978846
        %v1901 = vmul.f32 %v1837, 0.7978846
        %v1902 = vmul.f32 %v1838, 0.7978846
        %v1903 = vmul.f32 %v1839, 0.7978846
        %v1904 = vmul.f32 %v1840, 0.7978846
        %v1905 = vmul.f32 %v1841, 0.7978846
        %v1906 = vmul.f32 %v1842, 0.7978846
        %v1907 = vmul.f32 %v1843, 0.7978846
        %v1908 = vmul.f32 %v1844, 0.7978846
        %v1909 = vmul.f32 %v1845, 0.7978846
        %v1910 = vmul.f32 %v1846, 0.7978846
        %v1911 = vmul.f32 %v1847, 0.7978846
        %v1912 = vmul.f32 %v1848, 0.7978846
        %v1913 = vmul.f32 %v1849, 0.7978846
        %v1914 = vmul.f32 %v1850, 0.7978846
        %v1915 = vmul.f32 %v1851, 0.7978846
        %v1916 = vmul.f32 %v1852, 0.7978846
        %v1917 = vmul.f32 %v1853, 0.7978846
        %v1918 = vmul.f32 %v1854, 0.7978846
        %v1919 = vmul.f32 %v1855, 0.7978846
        %v1920 = vmul.f32 %v1856, 0.7978846
        %v1921 = vmul.f32 %v1857, 0.7978846
        %v1922 = vmul.f32 %v1858, 0.7978846
        %v1923 = vmul.f32 %v1859, 0.7978846
        %v1924 = vmul.f32 %v1860, 0.7978846
        %v1925 = vtanh.pop %v1861
        %v1926 = vtanh.pop %v1862
        %v1927 = vtanh.pop %v1863
        %v1928 = vtanh.pop %v1864
        %v1929 = vtanh.pop %v1865
        %v1930 = vtanh.pop %v1866
        %v1931 = vtanh.pop %v1867
        %v1932 = vtanh.pop %v1868
        %v1933 = vtanh.pop %v1869
        %v1934 = vtanh.pop %v1870
        %v1935 = vtanh.pop %v1871
        %v1936 = vtanh.pop %v1872
        %v1937 = vtanh.pop %v1873
        %v1938 = vtanh.pop %v1874
        %v1939 = vtanh.pop %v1875
        %v1940 = vtanh.pop %v1876
        %v1941 = vtanh.pop %v1877
        %v1942 = vtanh.pop %v1878
        %v1943 = vtanh.pop %v1879
        %v1944 = vtanh.pop %v1880
        %v1945 = vtanh.pop %v1881
        %v1946 = vtanh.pop %v1882
        %v1947 = vtanh.pop %v1883
        %v1948 = vtanh.pop %v1884
        %v1949 = vtanh.pop %v1885
        %v1950 = vtanh.pop %v1886
        %v1951 = vtanh.pop %v1887
        %v1952 = vtanh.pop %v1888
        %v1953 = vtanh.pop %v1889
        %v1954 = vtanh.pop %v1890
        %v1955 = vtanh.pop %v1891
        %v1956 = vtanh.pop %v1892
        %v1957 = vtanh.pop %v1893
        %v1958 = vtanh.pop %v1894
        %v1959 = vtanh.pop %v1895
        %v1960 = vtanh.pop %v1896
        %v1961 = vtanh.pop %v1897
        %v1962 = vtanh.pop %v1898
        %v1963 = vtanh.pop %v1899
        %v1964 = vtanh.pop %v1900
        %v1965 = vtanh.pop %v1901
        %v1966 = vtanh.pop %v1902
        %v1967 = vtanh.pop %v1903
        %v1968 = vtanh.pop %v1904
        %v1969 = vtanh.pop %v1905
        %v1970 = vtanh.pop %v1906
        %v1971 = vtanh.pop %v1907
        %v1972 = vtanh.pop %v1908
        %v1973 = vtanh.pop %v1909
        %v1974 = vtanh.pop %v1910
        %v1975 = vtanh.pop %v1911
        %v1976 = vtanh.pop %v1912
        %v1977 = vtanh.pop %v1913
        %v1978 = vtanh.pop %v1914
        %v1979 = vtanh.pop %v1915
        %v1980 = vtanh.pop %v1916
        %v1981 = vtanh.pop %v1917
        %v1982 = vtanh.pop %v1918
        %v1983 = vtanh.pop %v1919
        %v1984 = vtanh.pop %v1920
        %v1985 = vtanh.pop %v1921
        %v1986 = vtanh.pop %v1922
        %v1987 = vtanh.pop %v1923
        %v1988 = vtanh.pop %v1924
        %v1989 = vadd.f32 %v1925, 1.0
        %v1990 = vadd.f32 %v1926, 1.0
        %v1991 = vadd.f32 %v1927, 1.0
        %v1992 = vadd.f32 %v1928, 1.0
        %v1993 = vadd.f32 %v1929, 1.0
        %v1994 = vadd.f32 %v1930, 1.0
        %v1995 = vadd.f32 %v1931, 1.0
        %v1996 = vadd.f32 %v1932, 1.0
        %v1997 = vadd.f32 %v1933, 1.0
        %v1998 = vadd.f32 %v1934, 1.0
        %v1999 = vadd.f32 %v1935, 1.0
        %v2000 = vadd.f32 %v1936, 1.0
        %v2001 = vadd.f32 %v1937, 1.0
        %v2002 = vadd.f32 %v1938, 1.0
        %v2003 = vadd.f32 %v1939, 1.0
        %v2004 = vadd.f32 %v1940, 1.0
        %v2005 = vadd.f32 %v1941, 1.0
        %v2006 = vadd.f32 %v1942, 1.0
        %v2007 = vadd.f32 %v1943, 1.0
        %v2008 = vadd.f32 %v1944, 1.0
        %v2009 = vadd.f32 %v1945, 1.0
        %v2010 = vadd.f32 %v1946, 1.0
        %v2011 = vadd.f32 %v1947, 1.0
        %v2012 = vadd.f32 %v1948, 1.0
        %v2013 = vadd.f32 %v1949, 1.0
        %v2014 = vadd.f32 %v1950, 1.0
        %v2015 = vadd.f32 %v1951, 1.0
        %v2016 = vadd.f32 %v1952, 1.0
        %v2017 = vadd.f32 %v1953, 1.0
        %v2018 = vadd.f32 %v1954, 1.0
        %v2019 = vadd.f32 %v1955, 1.0
        %v2020 = vadd.f32 %v1956, 1.0
        %v2021 = vadd.f32 %v1957, 1.0
        %v2022 = vadd.f32 %v1958, 1.0
        %v2023 = vadd.f32 %v1959, 1.0
        %v2024 = vadd.f32 %v1960, 1.0
        %v2025 = vadd.f32 %v1961, 1.0
        %v2026 = vadd.f32 %v1962, 1.0
        %v2027 = vadd.f32 %v1963, 1.0
        %v2028 = vadd.f32 %v1964, 1.0
        %v2029 = vadd.f32 %v1965, 1.0
        %v2030 = vadd.f32 %v1966, 1.0
        %v2031 = vadd.f32 %v1967, 1.0
        %v2032 = vadd.f32 %v1968, 1.0
        %v2033 = vadd.f32 %v1969, 1.0
        %v2034 = vadd.f32 %v1970, 1.0
        %v2035 = vadd.f32 %v1971, 1.0
        %v2036 = vadd.f32 %v1972, 1.0
        %v2037 = vadd.f32 %v1973, 1.0
        %v2038 = vadd.f32 %v1974, 1.0
        %v2039 = vadd.f32 %v1975, 1.0
        %v2040 = vadd.f32 %v1976, 1.0
        %v2041 = vadd.f32 %v1977, 1.0
        %v2042 = vadd.f32 %v1978, 1.0
        %v2043 = vadd.f32 %v1979, 1.0
        %v2044 = vadd.f32 %v1980, 1.0
        %v2045 = vadd.f32 %v1981, 1.0
        %v2046 = vadd.f32 %v1982, 1.0
        %v2047 = vadd.f32 %v1983, 1.0
        %v2048 = vadd.f32 %v1984, 1.0
        %v2049 = vadd.f32 %v1985, 1.0
        %v2050 = vadd.f32 %v1986, 1.0
        %v2051 = vadd.f32 %v1987, 1.0
        %v2052 = vadd.f32 %v1988, 1.0
        %v2053 = vmul.f32 %v1989, 0.5
        %v2054 = vmul.f32 %v1990, 0.5
        %v2055 = vmul.f32 %v1991, 0.5
        %v2056 = vmul.f32 %v1992, 0.5
        %v2057 = vmul.f32 %v1993, 0.5
        %v2058 = vmul.f32 %v1994, 0.5
        %v2059 = vmul.f32 %v1995, 0.5
        %v2060 = vmul.f32 %v1996, 0.5
        %v2061 = vmul.f32 %v1997, 0.5
        %v2062 = vmul.f32 %v1998, 0.5
        %v2063 = vmul.f32 %v1999, 0.5
        %v2064 = vmul.f32 %v2000, 0.5
        %v2065 = vmul.f32 %v2001, 0.5
        %v2066 = vmul.f32 %v2002, 0.5
        %v2067 = vmul.f32 %v2003, 0.5
        %v2068 = vmul.f32 %v2004, 0.5
        %v2069 = vmul.f32 %v2005, 0.5
        %v2070 = vmul.f32 %v2006, 0.5
        %v2071 = vmul.f32 %v2007, 0.5
        %v2072 = vmul.f32 %v2008, 0.5
        %v2073 = vmul.f32 %v2009, 0.5
        %v2074 = vmul.f32 %v2010, 0.5
        %v2075 = vmul.f32 %v2011, 0.5
        %v2076 = vmul.f32 %v2012, 0.5
        %v2077 = vmul.f32 %v2013, 0.5
        %v2078 = vmul.f32 %v2014, 0.5
        %v2079 = vmul.f32 %v2015, 0.5
        %v2080 = vmul.f32 %v2016, 0.5
        %v2081 = vmul.f32 %v2017, 0.5
        %v2082 = vmul.f32 %v2018, 0.5
        %v2083 = vmul.f32 %v2019, 0.5
        %v2084 = vmul.f32 %v2020, 0.5
        %v2085 = vmul.f32 %v2021, 0.5
        %v2086 = vmul.f32 %v2022, 0.5
        %v2087 = vmul.f32 %v2023, 0.5
        %v2088 = vmul.f32 %v2024, 0.5
        %v2089 = vmul.f32 %v2025, 0.5
        %v2090 = vmul.f32 %v2026, 0.5
        %v2091 = vmul.f32 %v2027, 0.5
        %v2092 = vmul.f32 %v2028, 0.5
        %v2093 = vmul.f32 %v2029, 0.5
        %v2094 = vmul.f32 %v2030, 0.5
        %v2095 = vmul.f32 %v2031, 0.5
        %v2096 = vmul.f32 %v2032, 0.5
        %v2097 = vmul.f32 %v2033, 0.5
        %v2098 = vmul.f32 %v2034, 0.5
        %v2099 = vmul.f32 %v2035, 0.5
        %v2100 = vmul.f32 %v2036, 0.5
        %v2101 = vmul.f32 %v2037, 0.5
        %v2102 = vmul.f32 %v2038, 0.5
        %v2103 = vmul.f32 %v2039, 0.5
        %v2104 = vmul.f32 %v2040, 0.5
        %v2105 = vmul.f32 %v2041, 0.5
        %v2106 = vmul.f32 %v2042, 0.5
        %v2107 = vmul.f32 %v2043, 0.5
        %v2108 = vmul.f32 %v2044, 0.5
        %v2109 = vmul.f32 %v2045, 0.5
        %v2110 = vmul.f32 %v2046, 0.5
        %v2111 = vmul.f32 %v2047, 0.5
        %v2112 = vmul.f32 %v2048, 0.5
        %v2113 = vmul.f32 %v2049, 0.5
        %v2114 = vmul.f32 %v2050, 0.5
        %v2115 = vmul.f32 %v2051, 0.5
        %v2116 = vmul.f32 %v2052, 0.5
        %v2117 = vmul.f32 %v1414, %v2053
        %v2118 = vmul.f32 %v1416, %v2054
        %v2119 = vmul.f32 %v1527, %v2055
        %v2120 = vmul.f32 %v1529, %v2056
        %v2121 = vmul.f32 %v1418, %v2057
        %v2122 = vmul.f32 %v1420, %v2058
        %v2123 = vmul.f32 %v1531, %v2059
        %v2124 = vmul.f32 %v1533, %v2060
        %v2125 = vmul.f32 %v1424, %v2061
        %v2126 = vmul.f32 %v1426, %v2062
        %v2127 = vmul.f32 %v1537, %v2063
        %v2128 = vmul.f32 %v1539, %v2064
        %v2129 = vmul.f32 %v1428, %v2065
        %v2130 = vmul.f32 %v1430, %v2066
        %v2131 = vmul.f32 %v1541, %v2067
        %v2132 = vmul.f32 %v1543, %v2068
        %v2133 = vmul.f32 %v1434, %v2069
        %v2134 = vmul.f32 %v1436, %v2070
        %v2135 = vmul.f32 %v1547, %v2071
        %v2136 = vmul.f32 %v1549, %v2072
        %v2137 = vmul.f32 %v1438, %v2073
        %v2138 = vmul.f32 %v1440, %v2074
        %v2139 = vmul.f32 %v1551, %v2075
        %v2140 = vmul.f32 %v1553, %v2076
        %v2141 = vmul.f32 %v1444, %v2077
        %v2142 = vmul.f32 %v1446, %v2078
        %v2143 = vmul.f32 %v1557, %v2079
        %v2144 = vmul.f32 %v1559, %v2080
        %v2145 = vmul.f32 %v1448, %v2081
        %v2146 = vmul.f32 %v1450, %v2082
        %v2147 = vmul.f32 %v1561, %v2083
        %v2148 = vmul.f32 %v1563, %v2084
        %v2149 = vmul.f32 %v1454, %v2085
        %v2150 = vmul.f32 %v1456, %v2086
        %v2151 = vmul.f32 %v1567, %v2087
        %v2152 = vmul.f32 %v1569, %v2088
        %v2153 = vmul.f32 %v1458, %v2089
        %v2154 = vmul.f32 %v1460, %v2090
        %v2155 = vmul.f32 %v1571, %v2091
        %v2156 = vmul.f32 %v1573, %v2092
        %v2157 = vmul.f32 %v1464, %v2093
        %v2158 = vmul.f32 %v1466, %v2094
        %v2159 = vmul.f32 %v1577, %v2095
        %v2160 = vmul.f32 %v1579, %v2096
        %v2161 = vmul.f32 %v1468, %v2097
        %v2162 = vmul.f32 %v1470, %v2098
        %v2163 = vmul.f32 %v1581, %v2099
        %v2164 = vmul.f32 %v1583, %v2100
        %v2165 = vmul.f32 %v1474, %v2101
        %v2166 = vmul.f32 %v1476, %v2102
        %v2167 = vmul.f32 %v1587, %v2103
        %v2168 = vmul.f32 %v1589, %v2104
        %v2169 = vmul.f32 %v1478, %v2105
        %v2170 = vmul.f32 %v1480, %v2106
        %v2171 = vmul.f32 %v1591, %v2107
        %v2172 = vmul.f32 %v1593, %v2108
        %v2173 = vmul.f32 %v1484, %v2109
        %v2174 = vmul.f32 %v1486, %v2110
        %v2175 = vmul.f32 %v1597, %v2111
        %v2176 = vmul.f32 %v1599, %v2112
        %v2177 = vmul.f32 %v1488, %v2113
        %v2178 = vmul.f32 %v1490, %v2114
        %v2179 = vmul.f32 %v1601, %v2115
        %v2180 = vmul.f32 %v1603, %v2116
        %v2181 = vld [vmem:[%s10] sm:$0xf]
        %v2182 = vld [vmem:[%s10 + $0x4] sm:$0xf]
        %v2183 = vld [vmem:[%s10 + $0x8] sm:$0xf]
        %v2184 = vld [vmem:[%s10 + $0xc] sm:$0xf]
        %v2185 = vpack.c.bf16 %v2121, %v2117
        %v2186 = vpack.c.bf16 %v2122, %v2118
        %v2187 = vpack.c.bf16 %v2123, %v2119
        %v2188 = vpack.c.bf16 %v2124, %v2120
        %v2189 = vpack.c.bf16 %v2129, %v2125
        %v2190 = vpack.c.bf16 %v2130, %v2126
        %v2191 = vpack.c.bf16 %v2131, %v2127
        %v2192 = vpack.c.bf16 %v2132, %v2128
        %v2193 = vpack.c.bf16 %v2137, %v2133
        %v2194 = vpack.c.bf16 %v2138, %v2134
        %v2195 = vpack.c.bf16 %v2139, %v2135
        %v2196 = vpack.c.bf16 %v2140, %v2136
        %v2197 = vpack.c.bf16 %v2145, %v2141
        %v2198 = vpack.c.bf16 %v2146, %v2142
        %v2199 = vpack.c.bf16 %v2147, %v2143
        %v2200 = vpack.c.bf16 %v2148, %v2144
        %v2201 = vpack.c.bf16 %v2153, %v2149
        %v2202 = vpack.c.bf16 %v2154, %v2150
        %v2203 = vpack.c.bf16 %v2155, %v2151
        %v2204 = vpack.c.bf16 %v2156, %v2152
        %v2205 = vpack.c.bf16 %v2161, %v2157
        %v2206 = vpack.c.bf16 %v2162, %v2158
        %v2207 = vpack.c.bf16 %v2163, %v2159
        %v2208 = vpack.c.bf16 %v2164, %v2160
        %v2209 = vpack.c.bf16 %v2169, %v2165
        %v2210 = vpack.c.bf16 %v2170, %v2166
        %v2211 = vpack.c.bf16 %v2171, %v2167
        %v2212 = vpack.c.bf16 %v2172, %v2168
        %v2213 = vpack.c.bf16 %v2177, %v2173
        %v2214 = vpack.c.bf16 %v2178, %v2174
        %v2215 = vpack.c.bf16 %v2179, %v2175
        %v2216 = vpack.c.bf16 %v2180, %v2176
        %v2217 = vld [vmem:[%s11] sm:$0xff]
        %v2218 = vld [vmem:[%s11 + $0x8] sm:$0xff]
        %v2219 = vld [vmem:[%s11 + $0x10] sm:$0xff]
        %v2220 = vld [vmem:[%s11 + $0x18] sm:$0xff]
        %2222 = vset.pattern.permute.xlu0 0
        %2223 = vperm.xlu0 %2222, %v2217
        %v2224 = vpop.permute.xlu0 %2223
        %2227 = vset.pattern.permute.xlu0 0
        %2228 = vperm.xlu0 %2227, %v2218
        %v2229 = vpop.permute.xlu0 %2228
        %2232 = vset.pattern.permute.xlu0 0
        %2233 = vperm.xlu0 %2232, %v2219
        %v2234 = vpop.permute.xlu0 %2233
        %2237 = vset.pattern.permute.xlu0 0
        %2238 = vperm.xlu0 %2237, %v2220
        %v2239 = vpop.permute.xlu0 %2238
        %v2245 = vunpack.c.l.b16 %v2181
        %v2246 = vunpack.c.l.b16 %v2182
        %v2247 = vunpack.c.l.b16 %v2183
        %v2248 = vunpack.c.l.b16 %v2184
        %v2249 = vpack.c.b16 %v2246, %v2245
        %v2250 = vpack.c.b16 %v2248, %v2247
        %2253 = vmatprep.subr.bf16.mxu0 %v2214
        %2254 = vmatpush1.bf16.msra.mxu0 %v2213
        %2255 = vmatprep.subr.bf16.mxu0 %v2210
        %2256 = vmatpush1.bf16.msra.mxu0 %v2209
        %2257 = vmatprep.subr.bf16.mxu0 %v2206
        %2258 = vmatpush1.bf16.msra.mxu0 %v2205
        %2259 = vmatprep.subr.bf16.mxu0 %v2202
        %2260 = vmatpush1.bf16.msra.mxu0 %v2201
        %2261 = vmatprep.subr.bf16.mxu0 %v2198
        %2262 = vmatpush1.bf16.msra.mxu0 %v2197
        %2263 = vmatprep.subr.bf16.mxu0 %v2194
        %2264 = vmatpush1.bf16.msra.mxu0 %v2193
        %2265 = vmatprep.subr.bf16.mxu0 %v2190
        %2266 = vmatpush1.bf16.msra.mxu0 %v2189
        %2267 = vmatprep.subr.bf16.mxu0 %v2186
        %2268 = vmatpush1.bf16.msra.mxu0 %v2185
        %2269 = vmatprep.subr.bf16.mxu0 0
        %2270 = vmatpush2.bf16.msra.mxu0 0
        %2271 = vmatprep.subr.bf16.mxu0 0
        %2272 = vmatpush2.bf16.msra.mxu0 0
        %2273 = vmatprep.subr.bf16.mxu0 0
        %2274 = vmatpush2.bf16.msra.mxu0 0
        %2275 = vmatprep.subr.bf16.mxu0 0
        %2276 = vmatpush2.bf16.msra.mxu0 0
        %2277 = vmatprep.subr.bf16.mxu0 0
        %2278 = vmatpush2.bf16.msra.mxu0 0
        %2279 = vmatprep.subr.bf16.mxu0 0
        %2280 = vmatpush2.bf16.msra.mxu0 0
        %2281 = vmatprep.subr.bf16.mxu0 0
        %2282 = vmatpush2.bf16.msra.mxu0 0
        %2283 = vmatprep.subr.bf16.mxu0 0
        %2284 = vmatpush2.bf16.msra.mxu0 0
        %2285 = vmatprep.mubr.bf16.mxu0 0
        %2286 = vmatmul.mubr.bf16.gmra.mxu0 %v2249
        %v2287 = vpop.f32.mrf.mxu0
        %v2288 = vadd.f32 %v2224, %v2287
        %v2289 = vpop.f32.mrf.mxu0
        %v2290 = vadd.f32 %v2224, %v2289
        %v2291 = vpop.f32.mrf.mxu0
        %v2292 = vadd.f32 %v2229, %v2291
        %v2293 = vpop.f32.mrf.mxu0
        %v2294 = vadd.f32 %v2229, %v2293
        %2295 = vmatprep.mubr.bf16.mxu0 0
        %2296 = vmatmul.mubr.bf16.gmra.mxu0 %v2250
        %v2297 = vpop.f32.mrf.mxu0
        %v2298 = vadd.f32 %v2234, %v2297
        %v2299 = vpop.f32.mrf.mxu0
        %v2300 = vadd.f32 %v2234, %v2299
        %v2301 = vpop.f32.mrf.mxu0
        %v2302 = vadd.f32 %v2239, %v2301
        %v2303 = vpop.f32.mrf.mxu0
        %v2304 = vadd.f32 %v2239, %v2303
        %2305 = vdwg.mxu0
        %2306 = vmatprep.subr.bf16.mxu0 %v2216
        %2307 = vmatpush1.bf16.msra.mxu0 %v2215
        %2308 = vmatprep.subr.bf16.mxu0 %v2212
        %2309 = vmatpush1.bf16.msra.mxu0 %v2211
        %2310 = vmatprep.subr.bf16.mxu0 %v2208
        %2311 = vmatpush1.bf16.msra.mxu0 %v2207
        %2312 = vmatprep.subr.bf16.mxu0 %v2204
        %2313 = vmatpush1.bf16.msra.mxu0 %v2203
        %2314 = vmatprep.subr.bf16.mxu0 %v2200
        %2315 = vmatpush1.bf16.msra.mxu0 %v2199
        %2316 = vmatprep.subr.bf16.mxu0 %v2196
        %2317 = vmatpush1.bf16.msra.mxu0 %v2195
        %2318 = vmatprep.subr.bf16.mxu0 %v2192
        %2319 = vmatpush1.bf16.msra.mxu0 %v2191
        %2320 = vmatprep.subr.bf16.mxu0 %v2188
        %2321 = vmatpush1.bf16.msra.mxu0 %v2187
        %2322 = vmatprep.subr.bf16.mxu0 0
        %2323 = vmatpush2.bf16.msra.mxu0 0
        %2324 = vmatprep.subr.bf16.mxu0 0
        %2325 = vmatpush2.bf16.msra.mxu0 0
        %2326 = vmatprep.subr.bf16.mxu0 0
        %2327 = vmatpush2.bf16.msra.mxu0 0
        %2328 = vmatprep.subr.bf16.mxu0 0
        %2329 = vmatpush2.bf16.msra.mxu0 0
        %2330 = vmatprep.subr.bf16.mxu0 0
        %2331 = vmatpush2.bf16.msra.mxu0 0
        %2332 = vmatprep.subr.bf16.mxu0 0
        %2333 = vmatpush2.bf16.msra.mxu0 0
        %2334 = vmatprep.subr.bf16.mxu0 0
        %2335 = vmatpush2.bf16.msra.mxu0 0
        %2336 = vmatprep.subr.bf16.mxu0 0
        %2337 = vmatpush2.bf16.msra.mxu0 0
        %2338 = vmatprep.mubr.bf16.mxu0 0
        %2339 = vmatmul.mubr.bf16.gmra.mxu0 %v2249
        %v2340 = vpop.f32.mrf.mxu0
        %v2341 = vadd.f32 %v2224, %v2340
        %v2342 = vpop.f32.mrf.mxu0
        %v2343 = vadd.f32 %v2224, %v2342
        %v2344 = vpop.f32.mrf.mxu0
        %v2345 = vadd.f32 %v2229, %v2344
        %v2346 = vpop.f32.mrf.mxu0
        %v2347 = vadd.f32 %v2229, %v2346
        %2348 = vmatprep.mubr.bf16.mxu0 0
        %2349 = vmatmul.mubr.bf16.gmra.mxu0 %v2250
        %v2350 = vpop.f32.mrf.mxu0
        %v2351 = vadd.f32 %v2234, %v2350
        %v2352 = vpop.f32.mrf.mxu0
        %v2353 = vadd.f32 %v2234, %v2352
        %v2354 = vpop.f32.mrf.mxu0
        %v2355 = vadd.f32 %v2239, %v2354
        %v2356 = vpop.f32.mrf.mxu0
        %v2357 = vadd.f32 %v2239, %v2356
        %2358 = vdwg.mxu0
        %v2359 = vld [vmem:[%s12] sm:$0xff]
        %v2360 = vld [vmem:[%s12 + $0x8] sm:$0xff]
        %v2361 = vld [vmem:[%s12 + $0x10] sm:$0xff]
        %v2362 = vld [vmem:[%s12 + $0x18] sm:$0xff]
        %v2363 = vld [vmem:[%s12 + $0x20] sm:$0xff]
        %v2364 = vld [vmem:[%s12 + $0x28] sm:$0xff]
        %v2365 = vld [vmem:[%s12 + $0x30] sm:$0xff]
        %v2366 = vld [vmem:[%s12 + $0x38] sm:$0xff]
        %v2367 = vld [vmem:[%s12 + $0x40] sm:$0xff]
        %v2368 = vld [vmem:[%s12 + $0x48] sm:$0xff]
        %v2369 = vld [vmem:[%s12 + $0x50] sm:$0xff]
        %v2370 = vld [vmem:[%s12 + $0x58] sm:$0xff]
        %v2371 = vld [vmem:[%s12 + $0x60] sm:$0xff]
        %v2372 = vld [vmem:[%s12 + $0x68] sm:$0xff]
        %v2373 = vld [vmem:[%s12 + $0x70] sm:$0xff]
        %v2374 = vld [vmem:[%s12 + $0x78] sm:$0xff]
        %v2375 = vld [vmem:[%s815] sm:$0xf]
        %2377 = vset.pattern.permute.xlu0 0
        %2378 = vperm.xlu0 %2377, %v2359
        %v2379 = vpop.permute.xlu0 %2378
        %2382 = vset.pattern.permute.xlu0 0
        %2383 = vperm.xlu0 %2382, %v2360
        %v2384 = vpop.permute.xlu0 %2383
        %2387 = vset.pattern.permute.xlu0 0
        %2388 = vperm.xlu0 %2387, %v2361
        %v2389 = vpop.permute.xlu0 %2388
        %2392 = vset.pattern.permute.xlu0 0
        %2393 = vperm.xlu0 %2392, %v2362
        %v2394 = vpop.permute.xlu0 %2393
        %2397 = vset.pattern.permute.xlu0 0
        %2398 = vperm.xlu0 %2397, %v2363
        %v2399 = vpop.permute.xlu0 %2398
        %2402 = vset.pattern.permute.xlu0 0
        %2403 = vperm.xlu0 %2402, %v2364
        %v2404 = vpop.permute.xlu0 %2403
        %2407 = vset.pattern.permute.xlu0 0
        %2408 = vperm.xlu0 %2407, %v2365
        %v2409 = vpop.permute.xlu0 %2408
        %2412 = vset.pattern.permute.xlu0 0
        %2413 = vperm.xlu0 %2412, %v2366
        %v2414 = vpop.permute.xlu0 %2413
        %2417 = vset.pattern.permute.xlu0 0
        %2418 = vperm.xlu0 %2417, %v2367
        %v2419 = vpop.permute.xlu0 %2418
        %2422 = vset.pattern.permute.xlu0 0
        %2423 = vperm.xlu0 %2422, %v2368
        %v2424 = vpop.permute.xlu0 %2423
        %2427 = vset.pattern.permute.xlu0 0
        %2428 = vperm.xlu0 %2427, %v2369
        %v2429 = vpop.permute.xlu0 %2428
        %2432 = vset.pattern.permute.xlu0 0
        %2433 = vperm.xlu0 %2432, %v2370
        %v2434 = vpop.permute.xlu0 %2433
        %2437 = vset.pattern.permute.xlu0 0
        %2438 = vperm.xlu0 %2437, %v2371
        %v2439 = vpop.permute.xlu0 %2438
        %2442 = vset.pattern.permute.xlu0 0
        %2443 = vperm.xlu0 %2442, %v2372
        %v2444 = vpop.permute.xlu0 %2443
        %2447 = vset.pattern.permute.xlu0 0
        %2448 = vperm.xlu0 %2447, %v2373
        %v2449 = vpop.permute.xlu0 %2448
        %2452 = vset.pattern.permute.xlu0 0
        %2453 = vperm.xlu0 %2452, %v2374
        %v2454 = vpop.permute.xlu0 %2453
        %v2457 = vlaneseq
        %v2458 = vshrl.u32 %v2457, 7
        %v2459 = vsub.s32 0, %v2458
        %v2460 = vrot.slane %v2375, %v2459
        %v2461 = vlaneseq
        %v2462 = vshrl.u32 %v2461, 7
        %v2463 = vsub.s32 1, %v2462
        %v2464 = vrot.slane %v2375, %v2463
        %v2465 = vlaneseq
        %v2466 = vshrl.u32 %v2465, 7
        %v2467 = vsub.s32 2, %v2466
        %v2468 = vrot.slane %v2375, %v2467
        %v2469 = vlaneseq
        %v2470 = vshrl.u32 %v2469, 7
        %v2471 = vsub.s32 3, %v2470
        %v2472 = vrot.slane %v2375, %v2471
        %v2477 = vmul.f32 %v2379, %v2460
        %v2478 = vmul.f32 %v2379, %v2464
        %v2479 = vmul.f32 %v2379, %v2468
        %v2480 = vmul.f32 %v2379, %v2472
        %v2481 = vmul.f32 %v2384, %v2460
        %v2482 = vmul.f32 %v2384, %v2464
        %v2483 = vmul.f32 %v2384, %v2468
        %v2484 = vmul.f32 %v2384, %v2472
        %v2485 = vmul.f32 %v2389, %v2460
        %v2486 = vmul.f32 %v2389, %v2464
        %v2487 = vmul.f32 %v2389, %v2468
        %v2488 = vmul.f32 %v2389, %v2472
        %v2489 = vmul.f32 %v2394, %v2460
        %v2490 = vmul.f32 %v2394, %v2464
        %v2491 = vmul.f32 %v2394, %v2468
        %v2492 = vmul.f32 %v2394, %v2472
        %v2493 = vmul.f32 %v2399, %v2460
        %v2494 = vmul.f32 %v2399, %v2464
        %v2495 = vmul.f32 %v2399, %v2468
        %v2496 = vmul.f32 %v2399, %v2472
        %v2497 = vmul.f32 %v2404, %v2460
        %v2498 = vmul.f32 %v2404, %v2464
        %v2499 = vmul.f32 %v2404, %v2468
        %v2500 = vmul.f32 %v2404, %v2472
        %v2501 = vmul.f32 %v2409, %v2460
        %v2502 = vmul.f32 %v2409, %v2464
        %v2503 = vmul.f32 %v2409, %v2468
        %v2504 = vmul.f32 %v2409, %v2472
        %v2505 = vmul.f32 %v2414, %v2460
        %v2506 = vmul.f32 %v2414, %v2464
        %v2507 = vmul.f32 %v2414, %v2468
        %v2508 = vmul.f32 %v2414, %v2472
        %v2509 = vmul.f32 %v2419, %v2460
        %v2510 = vmul.f32 %v2419, %v2464
        %v2511 = vmul.f32 %v2419, %v2468
        %v2512 = vmul.f32 %v2419, %v2472
        %v2513 = vmul.f32 %v2424, %v2460
        %v2514 = vmul.f32 %v2424, %v2464
        %v2515 = vmul.f32 %v2424, %v2468
        %v2516 = vmul.f32 %v2424, %v2472
        %v2517 = vmul.f32 %v2429, %v2460
        %v2518 = vmul.f32 %v2429, %v2464
        %v2519 = vmul.f32 %v2429, %v2468
        %v2520 = vmul.f32 %v2429, %v2472
        %v2521 = vmul.f32 %v2434, %v2460
        %v2522 = vmul.f32 %v2434, %v2464
        %v2523 = vmul.f32 %v2434, %v2468
        %v2524 = vmul.f32 %v2434, %v2472
        %v2525 = vmul.f32 %v2439, %v2460
        %v2526 = vmul.f32 %v2439, %v2464
        %v2527 = vmul.f32 %v2439, %v2468
        %v2528 = vmul.f32 %v2439, %v2472
        %v2529 = vmul.f32 %v2444, %v2460
        %v2530 = vmul.f32 %v2444, %v2464
        %v2531 = vmul.f32 %v2444, %v2468
        %v2532 = vmul.f32 %v2444, %v2472
        %v2533 = vmul.f32 %v2449, %v2460
        %v2534 = vmul.f32 %v2449, %v2464
        %v2535 = vmul.f32 %v2449, %v2468
        %v2536 = vmul.f32 %v2449, %v2472
        %v2537 = vmul.f32 %v2454, %v2460
        %v2538 = vmul.f32 %v2454, %v2464
        %v2539 = vmul.f32 %v2454, %v2468
        %v2540 = vmul.f32 %v2454, %v2472
        %v2541 = vld [vmem:[%s13] sm:$0xff]
        %v2542 = vld [vmem:[%s13 + $0x8] sm:$0xff]
        %v2543 = vld [vmem:[%s13 + $0x10] sm:$0xff]
        %v2544 = vld [vmem:[%s13 + $0x18] sm:$0xff]
        %v2545 = vld [vmem:[%s13 + $0x20] sm:$0xff]
        %v2546 = vld [vmem:[%s13 + $0x28] sm:$0xff]
        %v2547 = vld [vmem:[%s13 + $0x30] sm:$0xff]
        %v2548 = vld [vmem:[%s13 + $0x38] sm:$0xff]
        %v2549 = vld [vmem:[%s13 + $0x40] sm:$0xff]
        %v2550 = vld [vmem:[%s13 + $0x48] sm:$0xff]
        %v2551 = vld [vmem:[%s13 + $0x50] sm:$0xff]
        %v2552 = vld [vmem:[%s13 + $0x58] sm:$0xff]
        %v2553 = vld [vmem:[%s13 + $0x60] sm:$0xff]
        %v2554 = vld [vmem:[%s13 + $0x68] sm:$0xff]
        %v2555 = vld [vmem:[%s13 + $0x70] sm:$0xff]
        %v2556 = vld [vmem:[%s13 + $0x78] sm:$0xff]
        %2558 = vset.pattern.permute.xlu0 0
        %2559 = vperm.xlu0 %2558, %v2541
        %v2560 = vpop.permute.xlu0 %2559
        %2563 = vset.pattern.permute.xlu0 0
        %2564 = vperm.xlu0 %2563, %v2542
        %v2565 = vpop.permute.xlu0 %2564
        %2568 = vset.pattern.permute.xlu0 0
        %2569 = vperm.xlu0 %2568, %v2543
        %v2570 = vpop.permute.xlu0 %2569
        %2573 = vset.pattern.permute.xlu0 0
        %2574 = vperm.xlu0 %2573, %v2544
        %v2575 = vpop.permute.xlu0 %2574
        %2578 = vset.pattern.permute.xlu0 0
        %2579 = vperm.xlu0 %2578, %v2545
        %v2580 = vpop.permute.xlu0 %2579
        %2583 = vset.pattern.permute.xlu0 0
        %2584 = vperm.xlu0 %2583, %v2546
        %v2585 = vpop.permute.xlu0 %2584
        %2588 = vset.pattern.permute.xlu0 0
        %2589 = vperm.xlu0 %2588, %v2547
        %v2590 = vpop.permute.xlu0 %2589
        %2593 = vset.pattern.permute.xlu0 0
        %2594 = vperm.xlu0 %2593, %v2548
        %v2595 = vpop.permute.xlu0 %2594
        %2598 = vset.pattern.permute.xlu0 0
        %2599 = vperm.xlu0 %2598, %v2549
        %v2600 = vpop.permute.xlu0 %2599
        %2603 = vset.pattern.permute.xlu0 0
        %2604 = vperm.xlu0 %2603, %v2550
        %v2605 = vpop.permute.xlu0 %2604
        %2608 = vset.pattern.permute.xlu0 0
        %2609 = vperm.xlu0 %2608, %v2551
        %v2610 = vpop.permute.xlu0 %2609
        %2613 = vset.pattern.permute.xlu0 0
        %2614 = vperm.xlu0 %2613, %v2552
        %v2615 = vpop.permute.xlu0 %2614
        %2618 = vset.pattern.permute.xlu0 0
        %2619 = vperm.xlu0 %2618, %v2553
        %v2620 = vpop.permute.xlu0 %2619
        %2623 = vset.pattern.permute.xlu0 0
        %2624 = vperm.xlu0 %2623, %v2554
        %v2625 = vpop.permute.xlu0 %2624
        %2628 = vset.pattern.permute.xlu0 0
        %2629 = vperm.xlu0 %2628, %v2555
        %v2630 = vpop.permute.xlu0 %2629
        %2633 = vset.pattern.permute.xlu0 0
        %2634 = vperm.xlu0 %2633, %v2556
        %v2635 = vpop.permute.xlu0 %2634
        %v2637 = vadd.f32 %v2477, %v2560
        %v2638 = vadd.f32 %v2478, %v2560
        %v2639 = vadd.f32 %v2479, %v2560
        %v2640 = vadd.f32 %v2480, %v2560
        %v2641 = vadd.f32 %v2481, %v2565
        %v2642 = vadd.f32 %v2482, %v2565
        %v2643 = vadd.f32 %v2483, %v2565
        %v2644 = vadd.f32 %v2484, %v2565
        %v2645 = vadd.f32 %v2485, %v2570
        %v2646 = vadd.f32 %v2486, %v2570
        %v2647 = vadd.f32 %v2487, %v2570
        %v2648 = vadd.f32 %v2488, %v2570
        %v2649 = vadd.f32 %v2489, %v2575
        %v2650 = vadd.f32 %v2490, %v2575
        %v2651 = vadd.f32 %v2491, %v2575
        %v2652 = vadd.f32 %v2492, %v2575
        %v2653 = vadd.f32 %v2493, %v2580
        %v2654 = vadd.f32 %v2494, %v2580
        %v2655 = vadd.f32 %v2495, %v2580
        %v2656 = vadd.f32 %v2496, %v2580
        %v2657 = vadd.f32 %v2497, %v2585
        %v2658 = vadd.f32 %v2498, %v2585
        %v2659 = vadd.f32 %v2499, %v2585
        %v2660 = vadd.f32 %v2500, %v2585
        %v2661 = vadd.f32 %v2501, %v2590
        %v2662 = vadd.f32 %v2502, %v2590
        %v2663 = vadd.f32 %v2503, %v2590
        %v2664 = vadd.f32 %v2504, %v2590
        %v2665 = vadd.f32 %v2505, %v2595
        %v2666 = vadd.f32 %v2506, %v2595
        %v2667 = vadd.f32 %v2507, %v2595
        %v2668 = vadd.f32 %v2508, %v2595
        %v2669 = vadd.f32 %v2509, %v2600
        %v2670 = vadd.f32 %v2510, %v2600
        %v2671 = vadd.f32 %v2511, %v2600
        %v2672 = vadd.f32 %v2512, %v2600
        %v2673 = vadd.f32 %v2513, %v2605
        %v2674 = vadd.f32 %v2514, %v2605
        %v2675 = vadd.f32 %v2515, %v2605
        %v2676 = vadd.f32 %v2516, %v2605
        %v2677 = vadd.f32 %v2517, %v2610
        %v2678 = vadd.f32 %v2518, %v2610
        %v2679 = vadd.f32 %v2519, %v2610
        %v2680 = vadd.f32 %v2520, %v2610
        %v2681 = vadd.f32 %v2521, %v2615
        %v2682 = vadd.f32 %v2522, %v2615
        %v2683 = vadd.f32 %v2523, %v2615
        %v2684 = vadd.f32 %v2524, %v2615
        %v2685 = vadd.f32 %v2525, %v2620
        %v2686 = vadd.f32 %v2526, %v2620
        %v2687 = vadd.f32 %v2527, %v2620
        %v2688 = vadd.f32 %v2528, %v2620
        %v2689 = vadd.f32 %v2529, %v2625
        %v2690 = vadd.f32 %v2530, %v2625
        %v2691 = vadd.f32 %v2531, %v2625
        %v2692 = vadd.f32 %v2532, %v2625
        %v2693 = vadd.f32 %v2533, %v2630
        %v2694 = vadd.f32 %v2534, %v2630
        %v2695 = vadd.f32 %v2535, %v2630
        %v2696 = vadd.f32 %v2536, %v2630
        %v2697 = vadd.f32 %v2537, %v2635
        %v2698 = vadd.f32 %v2538, %v2635
        %v2699 = vadd.f32 %v2539, %v2635
        %v2700 = vadd.f32 %v2540, %v2635
        %v2701 = vmul.f32 %v2637, %v2637
        %v2702 = vmul.f32 %v2638, %v2638
        %v2703 = vmul.f32 %v2639, %v2639
        %v2704 = vmul.f32 %v2640, %v2640
        %v2705 = vmul.f32 %v2641, %v2641
        %v2706 = vmul.f32 %v2642, %v2642
        %v2707 = vmul.f32 %v2643, %v2643
        %v2708 = vmul.f32 %v2644, %v2644
        %v2709 = vmul.f32 %v2645, %v2645
        %v2710 = vmul.f32 %v2646, %v2646
        %v2711 = vmul.f32 %v2647, %v2647
        %v2712 = vmul.f32 %v2648, %v2648
        %v2713 = vmul.f32 %v2649, %v2649
        %v2714 = vmul.f32 %v2650, %v2650
        %v2715 = vmul.f32 %v2651, %v2651
        %v2716 = vmul.f32 %v2652, %v2652
        %v2717 = vmul.f32 %v2653, %v2653
        %v2718 = vmul.f32 %v2654, %v2654
        %v2719 = vmul.f32 %v2655, %v2655
        %v2720 = vmul.f32 %v2656, %v2656
        %v2721 = vmul.f32 %v2657, %v2657
        %v2722 = vmul.f32 %v2658, %v2658
        %v2723 = vmul.f32 %v2659, %v2659
        %v2724 = vmul.f32 %v2660, %v2660
        %v2725 = vmul.f32 %v2661, %v2661
        %v2726 = vmul.f32 %v2662, %v2662
        %v2727 = vmul.f32 %v2663, %v2663
        %v2728 = vmul.f32 %v2664, %v2664
        %v2729 = vmul.f32 %v2665, %v2665
        %v2730 = vmul.f32 %v2666, %v2666
        %v2731 = vmul.f32 %v2667, %v2667
        %v2732 = vmul.f32 %v2668, %v2668
        %v2733 = vmul.f32 %v2669, %v2669
        %v2734 = vmul.f32 %v2670, %v2670
        %v2735 = vmul.f32 %v2671, %v2671
        %v2736 = vmul.f32 %v2672, %v2672
        %v2737 = vmul.f32 %v2673, %v2673
        %v2738 = vmul.f32 %v2674, %v2674
        %v2739 = vmul.f32 %v2675, %v2675
        %v2740 = vmul.f32 %v2676, %v2676
        %v2741 = vmul.f32 %v2677, %v2677
        %v2742 = vmul.f32 %v2678, %v2678
        %v2743 = vmul.f32 %v2679, %v2679
        %v2744 = vmul.f32 %v2680, %v2680
        %v2745 = vmul.f32 %v2681, %v2681
        %v2746 = vmul.f32 %v2682, %v2682
        %v2747 = vmul.f32 %v2683, %v2683
        %v2748 = vmul.f32 %v2684, %v2684
        %v2749 = vmul.f32 %v2685, %v2685
        %v2750 = vmul.f32 %v2686, %v2686
        %v2751 = vmul.f32 %v2687, %v2687
        %v2752 = vmul.f32 %v2688, %v2688
        %v2753 = vmul.f32 %v2689, %v2689
        %v2754 = vmul.f32 %v2690, %v2690
        %v2755 = vmul.f32 %v2691, %v2691
        %v2756 = vmul.f32 %v2692, %v2692
        %v2757 = vmul.f32 %v2693, %v2693
        %v2758 = vmul.f32 %v2694, %v2694
        %v2759 = vmul.f32 %v2695, %v2695
        %v2760 = vmul.f32 %v2696, %v2696
        %v2761 = vmul.f32 %v2697, %v2697
        %v2762 = vmul.f32 %v2698, %v2698
        %v2763 = vmul.f32 %v2699, %v2699
        %v2764 = vmul.f32 %v2700, %v2700
        %v2765 = vmul.f32 %v2637, %v2701
        %v2766 = vmul.f32 %v2638, %v2702
        %v2767 = vmul.f32 %v2639, %v2703
        %v2768 = vmul.f32 %v2640, %v2704
        %v2769 = vmul.f32 %v2641, %v2705
        %v2770 = vmul.f32 %v2642, %v2706
        %v2771 = vmul.f32 %v2643, %v2707
        %v2772 = vmul.f32 %v2644, %v2708
        %v2773 = vmul.f32 %v2645, %v2709
        %v2774 = vmul.f32 %v2646, %v2710
        %v2775 = vmul.f32 %v2647, %v2711
        %v2776 = vmul.f32 %v2648, %v2712
        %v2777 = vmul.f32 %v2649, %v2713
        %v2778 = vmul.f32 %v2650, %v2714
        %v2779 = vmul.f32 %v2651, %v2715
        %v2780 = vmul.f32 %v2652, %v2716
        %v2781 = vmul.f32 %v2653, %v2717
        %v2782 = vmul.f32 %v2654, %v2718
        %v2783 = vmul.f32 %v2655, %v2719
        %v2784 = vmul.f32 %v2656, %v2720
        %v2785 = vmul.f32 %v2657, %v2721
        %v2786 = vmul.f32 %v2658, %v2722
        %v2787 = vmul.f32 %v2659, %v2723
        %v2788 = vmul.f32 %v2660, %v2724
        %v2789 = vmul.f32 %v2661, %v2725
        %v2790 = vmul.f32 %v2662, %v2726
        %v2791 = vmul.f32 %v2663, %v2727
        %v2792 = vmul.f32 %v2664, %v2728
        %v2793 = vmul.f32 %v2665, %v2729
        %v2794 = vmul.f32 %v2666, %v2730
        %v2795 = vmul.f32 %v2667, %v2731
        %v2796 = vmul.f32 %v2668, %v2732
        %v2797 = vmul.f32 %v2669, %v2733
        %v2798 = vmul.f32 %v2670, %v2734
        %v2799 = vmul.f32 %v2671, %v2735
        %v2800 = vmul.f32 %v2672, %v2736
        %v2801 = vmul.f32 %v2673, %v2737
        %v2802 = vmul.f32 %v2674, %v2738
        %v2803 = vmul.f32 %v2675, %v2739
        %v2804 = vmul.f32 %v2676, %v2740
        %v2805 = vmul.f32 %v2677, %v2741
        %v2806 = vmul.f32 %v2678, %v2742
        %v2807 = vmul.f32 %v2679, %v2743
        %v2808 = vmul.f32 %v2680, %v2744
        %v2809 = vmul.f32 %v2681, %v2745
        %v2810 = vmul.f32 %v2682, %v2746
        %v2811 = vmul.f32 %v2683, %v2747
        %v2812 = vmul.f32 %v2684, %v2748
        %v2813 = vmul.f32 %v2685, %v2749
        %v2814 = vmul.f32 %v2686, %v2750
        %v2815 = vmul.f32 %v2687, %v2751
        %v2816 = vmul.f32 %v2688, %v2752
        %v2817 = vmul.f32 %v2689, %v2753
        %v2818 = vmul.f32 %v2690, %v2754
        %v2819 = vmul.f32 %v2691, %v2755
        %v2820 = vmul.f32 %v2692, %v2756
        %v2821 = vmul.f32 %v2693, %v2757
        %v2822 = vmul.f32 %v2694, %v2758
        %v2823 = vmul.f32 %v2695, %v2759
        %v2824 = vmul.f32 %v2696, %v2760
        %v2825 = vmul.f32 %v2697, %v2761
        %v2826 = vmul.f32 %v2698, %v2762
        %v2827 = vmul.f32 %v2699, %v2763
        %v2828 = vmul.f32 %v2700, %v2764
        %v2829 = vmul.f32 %v2765, 0.044715
        %v2830 = vmul.f32 %v2766, 0.044715
        %v2831 = vmul.f32 %v2767, 0.044715
        %v2832 = vmul.f32 %v2768, 0.044715
        %v2833 = vmul.f32 %v2769, 0.044715
        %v2834 = vmul.f32 %v2770, 0.044715
        %v2835 = vmul.f32 %v2771, 0.044715
        %v2836 = vmul.f32 %v2772, 0.044715
        %v2837 = vmul.f32 %v2773, 0.044715
        %v2838 = vmul.f32 %v2774, 0.044715
        %v2839 = vmul.f32 %v2775, 0.044715
        %v2840 = vmul.f32 %v2776, 0.044715
        %v2841 = vmul.f32 %v2777, 0.044715
        %v2842 = vmul.f32 %v2778, 0.044715
        %v2843 = vmul.f32 %v2779, 0.044715
        %v2844 = vmul.f32 %v2780, 0.044715
        %v2845 = vmul.f32 %v2781, 0.044715
        %v2846 = vmul.f32 %v2782, 0.044715
        %v2847 = vmul.f32 %v2783, 0.044715
        %v2848 = vmul.f32 %v2784, 0.044715
        %v2849 = vmul.f32 %v2785, 0.044715
        %v2850 = vmul.f32 %v2786, 0.044715
        %v2851 = vmul.f32 %v2787, 0.044715
        %v2852 = vmul.f32 %v2788, 0.044715
        %v2853 = vmul.f32 %v2789, 0.044715
        %v2854 = vmul.f32 %v2790, 0.044715
        %v2855 = vmul.f32 %v2791, 0.044715
        %v2856 = vmul.f32 %v2792, 0.044715
        %v2857 = vmul.f32 %v2793, 0.044715
        %v2858 = vmul.f32 %v2794, 0.044715
        %v2859 = vmul.f32 %v2795, 0.044715
        %v2860 = vmul.f32 %v2796, 0.044715
        %v2861 = vmul.f32 %v2797, 0.044715
        %v2862 = vmul.f32 %v2798, 0.044715
        %v2863 = vmul.f32 %v2799, 0.044715
        %v2864 = vmul.f32 %v2800, 0.044715
        %v2865 = vmul.f32 %v2801, 0.044715
        %v2866 = vmul.f32 %v2802, 0.044715
        %v2867 = vmul.f32 %v2803, 0.044715
        %v2868 = vmul.f32 %v2804, 0.044715
        %v2869 = vmul.f32 %v2805, 0.044715
        %v2870 = vmul.f32 %v2806, 0.044715
        %v2871 = vmul.f32 %v2807, 0.044715
        %v2872 = vmul.f32 %v2808, 0.044715
        %v2873 = vmul.f32 %v2809, 0.044715
        %v2874 = vmul.f32 %v2810, 0.044715
        %v2875 = vmul.f32 %v2811, 0.044715
        %v2876 = vmul.f32 %v2812, 0.044715
        %v2877 = vmul.f32 %v2813, 0.044715
        %v2878 = vmul.f32 %v2814, 0.044715
        %v2879 = vmul.f32 %v2815, 0.044715
        %v2880 = vmul.f32 %v2816, 0.044715
        %v2881 = vmul.f32 %v2817, 0.044715
        %v2882 = vmul.f32 %v2818, 0.044715
        %v2883 = vmul.f32 %v2819, 0.044715
        %v2884 = vmul.f32 %v2820, 0.044715
        %v2885 = vmul.f32 %v2821, 0.044715
        %v2886 = vmul.f32 %v2822, 0.044715
        %v2887 = vmul.f32 %v2823, 0.044715
        %v2888 = vmul.f32 %v2824, 0.044715
        %v2889 = vmul.f32 %v2825, 0.044715
        %v2890 = vmul.f32 %v2826, 0.044715
        %v2891 = vmul.f32 %v2827, 0.044715
        %v2892 = vmul.f32 %v2828, 0.044715
        %v2893 = vadd.f32 %v2637, %v2829
        %v2894 = vadd.f32 %v2638, %v2830
        %v2895 = vadd.f32 %v2639, %v2831
        %v2896 = vadd.f32 %v2640, %v2832
        %v2897 = vadd.f32 %v2641, %v2833
        %v2898 = vadd.f32 %v2642, %v2834
        %v2899 = vadd.f32 %v2643, %v2835
        %v2900 = vadd.f32 %v2644, %v2836
        %v2901 = vadd.f32 %v2645, %v2837
        %v2902 = vadd.f32 %v2646, %v2838
        %v2903 = vadd.f32 %v2647, %v2839
        %v2904 = vadd.f32 %v2648, %v2840
        %v2905 = vadd.f32 %v2649, %v2841
        %v2906 = vadd.f32 %v2650, %v2842
        %v2907 = vadd.f32 %v2651, %v2843
        %v2908 = vadd.f32 %v2652, %v2844
        %v2909 = vadd.f32 %v2653, %v2845
        %v2910 = vadd.f32 %v2654, %v2846
        %v2911 = vadd.f32 %v2655, %v2847
        %v2912 = vadd.f32 %v2656, %v2848
        %v2913 = vadd.f32 %v2657, %v2849
        %v2914 = vadd.f32 %v2658, %v2850
        %v2915 = vadd.f32 %v2659, %v2851
        %v2916 = vadd.f32 %v2660, %v2852
        %v2917 = vadd.f32 %v2661, %v2853
        %v2918 = vadd.f32 %v2662, %v2854
        %v2919 = vadd.f32 %v2663, %v2855
        %v2920 = vadd.f32 %v2664, %v2856
        %v2921 = vadd.f32 %v2665, %v2857
        %v2922 = vadd.f32 %v2666, %v2858
        %v2923 = vadd.f32 %v2667, %v2859
        %v2924 = vadd.f32 %v2668, %v2860
        %v2925 = vadd.f32 %v2669, %v2861
        %v2926 = vadd.f32 %v2670, %v2862
        %v2927 = vadd.f32 %v2671, %v2863
        %v2928 = vadd.f32 %v2672, %v2864
        %v2929 = vadd.f32 %v2673, %v2865
        %v2930 = vadd.f32 %v2674, %v2866
        %v2931 = vadd.f32 %v2675, %v2867
        %v2932 = vadd.f32 %v2676, %v2868
        %v2933 = vadd.f32 %v2677, %v2869
        %v2934 = vadd.f32 %v2678, %v2870
        %v2935 = vadd.f32 %v2679, %v2871
        %v2936 = vadd.f32 %v2680, %v2872
        %v2937 = vadd.f32 %v2681, %v2873
        %v2938 = vadd.f32 %v2682, %v2874
        %v2939 = vadd.f32 %v2683, %v2875
        %v2940 = vadd.f32 %v2684, %v2876
        %v2941 = vadd.f32 %v2685, %v2877
        %v2942 = vadd.f32 %v2686, %v2878
        %v2943 = vadd.f32 %v2687, %v2879
        %v2944 = vadd.f32 %v2688, %v2880
        %v2945 = vadd.f32 %v2689, %v2881
        %v2946 = vadd.f32 %v2690, %v2882
        %v2947 = vadd.f32 %v2691, %v2883
        %v2948 = vadd.f32 %v2692, %v2884
        %v2949 = vadd.f32 %v2693, %v2885
        %v2950 = vadd.f32 %v2694, %v2886
        %v2951 = vadd.f32 %v2695, %v2887
        %v2952 = vadd.f32 %v2696, %v2888
        %v2953 = vadd.f32 %v2697, %v2889
        %v2954 = vadd.f32 %v2698, %v2890
        %v2955 = vadd.f32 %v2699, %v2891
        %v2956 = vadd.f32 %v2700, %v2892
        %v2957 = vmul.f32 %v2893, 0.7978846
        %v2958 = vmul.f32 %v2894, 0.7978846
        %v2959 = vmul.f32 %v2895, 0.7978846
        %v2960 = vmul.f32 %v2896, 0.7978846
        %v2961 = vmul.f32 %v2897, 0.7978846
        %v2962 = vmul.f32 %v2898, 0.7978846
        %v2963 = vmul.f32 %v2899, 0.7978846
        %v2964 = vmul.f32 %v2900, 0.7978846
        %v2965 = vmul.f32 %v2901, 0.7978846
        %v2966 = vmul.f32 %v2902, 0.7978846
        %v2967 = vmul.f32 %v2903, 0.7978846
        %v2968 = vmul.f32 %v2904, 0.7978846
        %v2969 = vmul.f32 %v2905, 0.7978846
        %v2970 = vmul.f32 %v2906, 0.7978846
        %v2971 = vmul.f32 %v2907, 0.7978846
        %v2972 = vmul.f32 %v2908, 0.7978846
        %v2973 = vmul.f32 %v2909, 0.7978846
        %v2974 = vmul.f32 %v2910, 0.7978846
        %v2975 = vmul.f32 %v2911, 0.7978846
        %v2976 = vmul.f32 %v2912, 0.7978846
        %v2977 = vmul.f32 %v2913, 0.7978846
        %v2978 = vmul.f32 %v2914, 0.7978846
        %v2979 = vmul.f32 %v2915, 0.7978846
        %v2980 = vmul.f32 %v2916, 0.7978846
        %v2981 = vmul.f32 %v2917, 0.7978846
        %v2982 = vmul.f32 %v2918, 0.7978846
        %v2983 = vmul.f32 %v2919, 0.7978846
        %v2984 = vmul.f32 %v2920, 0.7978846
        %v2985 = vmul.f32 %v2921, 0.7978846
        %v2986 = vmul.f32 %v2922, 0.7978846
        %v2987 = vmul.f32 %v2923, 0.7978846
        %v2988 = vmul.f32 %v2924, 0.7978846
        %v2989 = vmul.f32 %v2925, 0.7978846
        %v2990 = vmul.f32 %v2926, 0.7978846
        %v2991 = vmul.f32 %v2927, 0.7978846
        %v2992 = vmul.f32 %v2928, 0.7978846
        %v2993 = vmul.f32 %v2929, 0.7978846
        %v2994 = vmul.f32 %v2930, 0.7978846
        %v2995 = vmul.f32 %v2931, 0.7978846
        %v2996 = vmul.f32 %v2932, 0.7978846
        %v2997 = vmul.f32 %v2933, 0.7978846
        %v2998 = vmul.f32 %v2934, 0.7978846
        %v2999 = vmul.f32 %v2935, 0.7978846
        %v3000 = vmul.f32 %v2936, 0.7978846
        %v3001 = vmul.f32 %v2937, 0.7978846
        %v3002 = vmul.f32 %v2938, 0.7978846
        %v3003 = vmul.f32 %v2939, 0.7978846
        %v3004 = vmul.f32 %v2940, 0.7978846
        %v3005 = vmul.f32 %v2941, 0.7978846
        %v3006 = vmul.f32 %v2942, 0.7978846
        %v3007 = vmul.f32 %v2943, 0.7978846
        %v3008 = vmul.f32 %v2944, 0.7978846
        %v3009 = vmul.f32 %v2945, 0.7978846
        %v3010 = vmul.f32 %v2946, 0.7978846
        %v3011 = vmul.f32 %v2947, 0.7978846
        %v3012 = vmul.f32 %v2948, 0.7978846
        %v3013 = vmul.f32 %v2949, 0.7978846
        %v3014 = vmul.f32 %v2950, 0.7978846
        %v3015 = vmul.f32 %v2951, 0.7978846
        %v3016 = vmul.f32 %v2952, 0.7978846
        %v3017 = vmul.f32 %v2953, 0.7978846
        %v3018 = vmul.f32 %v2954, 0.7978846
        %v3019 = vmul.f32 %v2955, 0.7978846
        %v3020 = vmul.f32 %v2956, 0.7978846
        %v3021 = vtanh.pop %v2957
        %v3022 = vtanh.pop %v2958
        %v3023 = vtanh.pop %v2959
        %v3024 = vtanh.pop %v2960
        %v3025 = vtanh.pop %v2961
        %v3026 = vtanh.pop %v2962
        %v3027 = vtanh.pop %v2963
        %v3028 = vtanh.pop %v2964
        %v3029 = vtanh.pop %v2965
        %v3030 = vtanh.pop %v2966
        %v3031 = vtanh.pop %v2967
        %v3032 = vtanh.pop %v2968
        %v3033 = vtanh.pop %v2969
        %v3034 = vtanh.pop %v2970
        %v3035 = vtanh.pop %v2971
        %v3036 = vtanh.pop %v2972
        %v3037 = vtanh.pop %v2973
        %v3038 = vtanh.pop %v2974
        %v3039 = vtanh.pop %v2975
        %v3040 = vtanh.pop %v2976
        %v3041 = vtanh.pop %v2977
        %v3042 = vtanh.pop %v2978
        %v3043 = vtanh.pop %v2979
        %v3044 = vtanh.pop %v2980
        %v3045 = vtanh.pop %v2981
        %v3046 = vtanh.pop %v2982
        %v3047 = vtanh.pop %v2983
        %v3048 = vtanh.pop %v2984
        %v3049 = vtanh.pop %v2985
        %v3050 = vtanh.pop %v2986
        %v3051 = vtanh.pop %v2987
        %v3052 = vtanh.pop %v2988
        %v3053 = vtanh.pop %v2989
        %v3054 = vtanh.pop %v2990
        %v3055 = vtanh.pop %v2991
        %v3056 = vtanh.pop %v2992
        %v3057 = vtanh.pop %v2993
        %v3058 = vtanh.pop %v2994
        %v3059 = vtanh.pop %v2995
        %v3060 = vtanh.pop %v2996
        %v3061 = vtanh.pop %v2997
        %v3062 = vtanh.pop %v2998
        %v3063 = vtanh.pop %v2999
        %v3064 = vtanh.pop %v3000
        %v3065 = vtanh.pop %v3001
        %v3066 = vtanh.pop %v3002
        %v3067 = vtanh.pop %v3003
        %v3068 = vtanh.pop %v3004
        %v3069 = vtanh.pop %v3005
        %v3070 = vtanh.pop %v3006
        %v3071 = vtanh.pop %v3007
        %v3072 = vtanh.pop %v3008
        %v3073 = vtanh.pop %v3009
        %v3074 = vtanh.pop %v3010
        %v3075 = vtanh.pop %v3011
        %v3076 = vtanh.pop %v3012
        %v3077 = vtanh.pop %v3013
        %v3078 = vtanh.pop %v3014
        %v3079 = vtanh.pop %v3015
        %v3080 = vtanh.pop %v3016
        %v3081 = vtanh.pop %v3017
        %v3082 = vtanh.pop %v3018
        %v3083 = vtanh.pop %v3019
        %v3084 = vtanh.pop %v3020
        %v3085 = vadd.f32 %v3021, 1.0
        %v3086 = vadd.f32 %v3022, 1.0
        %v3087 = vadd.f32 %v3023, 1.0
        %v3088 = vadd.f32 %v3024, 1.0
        %v3089 = vadd.f32 %v3025, 1.0
        %v3090 = vadd.f32 %v3026, 1.0
        %v3091 = vadd.f32 %v3027, 1.0
        %v3092 = vadd.f32 %v3028, 1.0
        %v3093 = vadd.f32 %v3029, 1.0
        %v3094 = vadd.f32 %v3030, 1.0
        %v3095 = vadd.f32 %v3031, 1.0
        %v3096 = vadd.f32 %v3032, 1.0
        %v3097 = vadd.f32 %v3033, 1.0
        %v3098 = vadd.f32 %v3034, 1.0
        %v3099 = vadd.f32 %v3035, 1.0
        %v3100 = vadd.f32 %v3036, 1.0
        %v3101 = vadd.f32 %v3037, 1.0
        %v3102 = vadd.f32 %v3038, 1.0
        %v3103 = vadd.f32 %v3039, 1.0
        %v3104 = vadd.f32 %v3040, 1.0
        %v3105 = vadd.f32 %v3041, 1.0
        %v3106 = vadd.f32 %v3042, 1.0
        %v3107 = vadd.f32 %v3043, 1.0
        %v3108 = vadd.f32 %v3044, 1.0
        %v3109 = vadd.f32 %v3045, 1.0
        %v3110 = vadd.f32 %v3046, 1.0
        %v3111 = vadd.f32 %v3047, 1.0
        %v3112 = vadd.f32 %v3048, 1.0
        %v3113 = vadd.f32 %v3049, 1.0
        %v3114 = vadd.f32 %v3050, 1.0
        %v3115 = vadd.f32 %v3051, 1.0
        %v3116 = vadd.f32 %v3052, 1.0
        %v3117 = vadd.f32 %v3053, 1.0
        %v3118 = vadd.f32 %v3054, 1.0
        %v3119 = vadd.f32 %v3055, 1.0
        %v3120 = vadd.f32 %v3056, 1.0
        %v3121 = vadd.f32 %v3057, 1.0
        %v3122 = vadd.f32 %v3058, 1.0
        %v3123 = vadd.f32 %v3059, 1.0
        %v3124 = vadd.f32 %v3060, 1.0
        %v3125 = vadd.f32 %v3061, 1.0
        %v3126 = vadd.f32 %v3062, 1.0
        %v3127 = vadd.f32 %v3063, 1.0
        %v3128 = vadd.f32 %v3064, 1.0
        %v3129 = vadd.f32 %v3065, 1.0
        %v3130 = vadd.f32 %v3066, 1.0
        %v3131 = vadd.f32 %v3067, 1.0
        %v3132 = vadd.f32 %v3068, 1.0
        %v3133 = vadd.f32 %v3069, 1.0
        %v3134 = vadd.f32 %v3070, 1.0
        %v3135 = vadd.f32 %v3071, 1.0
        %v3136 = vadd.f32 %v3072, 1.0
        %v3137 = vadd.f32 %v3073, 1.0
        %v3138 = vadd.f32 %v3074, 1.0
        %v3139 = vadd.f32 %v3075, 1.0
        %v3140 = vadd.f32 %v3076, 1.0
        %v3141 = vadd.f32 %v3077, 1.0
        %v3142 = vadd.f32 %v3078, 1.0
        %v3143 = vadd.f32 %v3079, 1.0
        %v3144 = vadd.f32 %v3080, 1.0
        %v3145 = vadd.f32 %v3081, 1.0
        %v3146 = vadd.f32 %v3082, 1.0
        %v3147 = vadd.f32 %v3083, 1.0
        %v3148 = vadd.f32 %v3084, 1.0
        %v3149 = vmul.f32 %v3085, 0.5
        %v3150 = vmul.f32 %v3086, 0.5
        %v3151 = vmul.f32 %v3087, 0.5
        %v3152 = vmul.f32 %v3088, 0.5
        %v3153 = vmul.f32 %v3089, 0.5
        %v3154 = vmul.f32 %v3090, 0.5
        %v3155 = vmul.f32 %v3091, 0.5
        %v3156 = vmul.f32 %v3092, 0.5
        %v3157 = vmul.f32 %v3093, 0.5
        %v3158 = vmul.f32 %v3094, 0.5
        %v3159 = vmul.f32 %v3095, 0.5
        %v3160 = vmul.f32 %v3096, 0.5
        %v3161 = vmul.f32 %v3097, 0.5
        %v3162 = vmul.f32 %v3098, 0.5
        %v3163 = vmul.f32 %v3099, 0.5
        %v3164 = vmul.f32 %v3100, 0.5
        %v3165 = vmul.f32 %v3101, 0.5
        %v3166 = vmul.f32 %v3102, 0.5
        %v3167 = vmul.f32 %v3103, 0.5
        %v3168 = vmul.f32 %v3104, 0.5
        %v3169 = vmul.f32 %v3105, 0.5
        %v3170 = vmul.f32 %v3106, 0.5
        %v3171 = vmul.f32 %v3107, 0.5
        %v3172 = vmul.f32 %v3108, 0.5
        %v3173 = vmul.f32 %v3109, 0.5
        %v3174 = vmul.f32 %v3110, 0.5
        %v3175 = vmul.f32 %v3111, 0.5
        %v3176 = vmul.f32 %v3112, 0.5
        %v3177 = vmul.f32 %v3113, 0.5
        %v3178 = vmul.f32 %v3114, 0.5
        %v3179 = vmul.f32 %v3115, 0.5
        %v3180 = vmul.f32 %v3116, 0.5
        %v3181 = vmul.f32 %v3117, 0.5
        %v3182 = vmul.f32 %v3118, 0.5
        %v3183 = vmul.f32 %v3119, 0.5
        %v3184 = vmul.f32 %v3120, 0.5
        %v3185 = vmul.f32 %v3121, 0.5
        %v3186 = vmul.f32 %v3122, 0.5
        %v3187 = vmul.f32 %v3123, 0.5
        %v3188 = vmul.f32 %v3124, 0.5
        %v3189 = vmul.f32 %v3125, 0.5
        %v3190 = vmul.f32 %v3126, 0.5
        %v3191 = vmul.f32 %v3127, 0.5
        %v3192 = vmul.f32 %v3128, 0.5
        %v3193 = vmul.f32 %v3129, 0.5
        %v3194 = vmul.f32 %v3130, 0.5
        %v3195 = vmul.f32 %v3131, 0.5
        %v3196 = vmul.f32 %v3132, 0.5
        %v3197 = vmul.f32 %v3133, 0.5
        %v3198 = vmul.f32 %v3134, 0.5
        %v3199 = vmul.f32 %v3135, 0.5
        %v3200 = vmul.f32 %v3136, 0.5
        %v3201 = vmul.f32 %v3137, 0.5
        %v3202 = vmul.f32 %v3138, 0.5
        %v3203 = vmul.f32 %v3139, 0.5
        %v3204 = vmul.f32 %v3140, 0.5
        %v3205 = vmul.f32 %v3141, 0.5
        %v3206 = vmul.f32 %v3142, 0.5
        %v3207 = vmul.f32 %v3143, 0.5
        %v3208 = vmul.f32 %v3144, 0.5
        %v3209 = vmul.f32 %v3145, 0.5
        %v3210 = vmul.f32 %v3146, 0.5
        %v3211 = vmul.f32 %v3147, 0.5
        %v3212 = vmul.f32 %v3148, 0.5
        %v3213 = vmul.f32 %v2637, %v3149
        %v3214 = vmul.f32 %v2638, %v3150
        %v3215 = vmul.f32 %v2639, %v3151
        %v3216 = vmul.f32 %v2640, %v3152
        %v3217 = vmul.f32 %v2641, %v3153
        %v3218 = vmul.f32 %v2642, %v3154
        %v3219 = vmul.f32 %v2643, %v3155
        %v3220 = vmul.f32 %v2644, %v3156
        %v3221 = vmul.f32 %v2645, %v3157
        %v3222 = vmul.f32 %v2646, %v3158
        %v3223 = vmul.f32 %v2647, %v3159
        %v3224 = vmul.f32 %v2648, %v3160
        %v3225 = vmul.f32 %v2649, %v3161
        %v3226 = vmul.f32 %v2650, %v3162
        %v3227 = vmul.f32 %v2651, %v3163
        %v3228 = vmul.f32 %v2652, %v3164
        %v3229 = vmul.f32 %v2653, %v3165
        %v3230 = vmul.f32 %v2654, %v3166
        %v3231 = vmul.f32 %v2655, %v3167
        %v3232 = vmul.f32 %v2656, %v3168
        %v3233 = vmul.f32 %v2657, %v3169
        %v3234 = vmul.f32 %v2658, %v3170
        %v3235 = vmul.f32 %v2659, %v3171
        %v3236 = vmul.f32 %v2660, %v3172
        %v3237 = vmul.f32 %v2661, %v3173
        %v3238 = vmul.f32 %v2662, %v3174
        %v3239 = vmul.f32 %v2663, %v3175
        %v3240 = vmul.f32 %v2664, %v3176
        %v3241 = vmul.f32 %v2665, %v3177
        %v3242 = vmul.f32 %v2666, %v3178
        %v3243 = vmul.f32 %v2667, %v3179
        %v3244 = vmul.f32 %v2668, %v3180
        %v3245 = vmul.f32 %v2669, %v3181
        %v3246 = vmul.f32 %v2670, %v3182
        %v3247 = vmul.f32 %v2671, %v3183
        %v3248 = vmul.f32 %v2672, %v3184
        %v3249 = vmul.f32 %v2673, %v3185
        %v3250 = vmul.f32 %v2674, %v3186
        %v3251 = vmul.f32 %v2675, %v3187
        %v3252 = vmul.f32 %v2676, %v3188
        %v3253 = vmul.f32 %v2677, %v3189
        %v3254 = vmul.f32 %v2678, %v3190
        %v3255 = vmul.f32 %v2679, %v3191
        %v3256 = vmul.f32 %v2680, %v3192
        %v3257 = vmul.f32 %v2681, %v3193
        %v3258 = vmul.f32 %v2682, %v3194
        %v3259 = vmul.f32 %v2683, %v3195
        %v3260 = vmul.f32 %v2684, %v3196
        %v3261 = vmul.f32 %v2685, %v3197
        %v3262 = vmul.f32 %v2686, %v3198
        %v3263 = vmul.f32 %v2687, %v3199
        %v3264 = vmul.f32 %v2688, %v3200
        %v3265 = vmul.f32 %v2689, %v3201
        %v3266 = vmul.f32 %v2690, %v3202
        %v3267 = vmul.f32 %v2691, %v3203
        %v3268 = vmul.f32 %v2692, %v3204
        %v3269 = vmul.f32 %v2693, %v3205
        %v3270 = vmul.f32 %v2694, %v3206
        %v3271 = vmul.f32 %v2695, %v3207
        %v3272 = vmul.f32 %v2696, %v3208
        %v3273 = vmul.f32 %v2697, %v3209
        %v3274 = vmul.f32 %v2698, %v3210
        %v3275 = vmul.f32 %v2699, %v3211
        %v3276 = vmul.f32 %v2700, %v3212
        %v3277 = vld [vmem:[%s14] sm:$0xf]
        %v3278 = vld [vmem:[%s14 + $0x4] sm:$0xf]
        %v3279 = vld [vmem:[%s14 + $0x8] sm:$0xf]
        %v3280 = vld [vmem:[%s14 + $0xc] sm:$0xf]
        %v3281 = vpack.c.bf16 %v3217, %v3213
        %v3282 = vpack.c.bf16 %v3218, %v3214
        %v3283 = vpack.c.bf16 %v3219, %v3215
        %v3284 = vpack.c.bf16 %v3220, %v3216
        %v3285 = vpack.c.bf16 %v3225, %v3221
        %v3286 = vpack.c.bf16 %v3226, %v3222
        %v3287 = vpack.c.bf16 %v3227, %v3223
        %v3288 = vpack.c.bf16 %v3228, %v3224
        %v3289 = vpack.c.bf16 %v3233, %v3229
        %v3290 = vpack.c.bf16 %v3234, %v3230
        %v3291 = vpack.c.bf16 %v3235, %v3231
        %v3292 = vpack.c.bf16 %v3236, %v3232
        %v3293 = vpack.c.bf16 %v3241, %v3237
        %v3294 = vpack.c.bf16 %v3242, %v3238
        %v3295 = vpack.c.bf16 %v3243, %v3239
        %v3296 = vpack.c.bf16 %v3244, %v3240
        %v3297 = vpack.c.bf16 %v3249, %v3245
        %v3298 = vpack.c.bf16 %v3250, %v3246
        %v3299 = vpack.c.bf16 %v3251, %v3247
        %v3300 = vpack.c.bf16 %v3252, %v3248
        %v3301 = vpack.c.bf16 %v3257, %v3253
        %v3302 = vpack.c.bf16 %v3258, %v3254
        %v3303 = vpack.c.bf16 %v3259, %v3255
        %v3304 = vpack.c.bf16 %v3260, %v3256
        %v3305 = vpack.c.bf16 %v3265, %v3261
        %v3306 = vpack.c.bf16 %v3266, %v3262
        %v3307 = vpack.c.bf16 %v3267, %v3263
        %v3308 = vpack.c.bf16 %v3268, %v3264
        %v3309 = vpack.c.bf16 %v3273, %v3269
        %v3310 = vpack.c.bf16 %v3274, %v3270
        %v3311 = vpack.c.bf16 %v3275, %v3271
        %v3312 = vpack.c.bf16 %v3276, %v3272
        %v3313 = vld [vmem:[%s15] sm:$0xff]
        %v3314 = vld [vmem:[%s15 + $0x8] sm:$0xff]
        %v3315 = vld [vmem:[%s15 + $0x10] sm:$0xff]
        %v3316 = vld [vmem:[%s15 + $0x18] sm:$0xff]
        %3318 = vset.pattern.permute.xlu0 0
        %3319 = vperm.xlu0 %3318, %v3313
        %v3320 = vpop.permute.xlu0 %3319
        %3323 = vset.pattern.permute.xlu0 0
        %3324 = vperm.xlu0 %3323, %v3314
        %v3325 = vpop.permute.xlu0 %3324
        %3328 = vset.pattern.permute.xlu0 0
        %3329 = vperm.xlu0 %3328, %v3315
        %v3330 = vpop.permute.xlu0 %3329
        %3333 = vset.pattern.permute.xlu0 0
        %3334 = vperm.xlu0 %3333, %v3316
        %v3335 = vpop.permute.xlu0 %3334
        %v3341 = vunpack.c.l.b16 %v3277
        %v3342 = vunpack.c.l.b16 %v3278
        %v3343 = vunpack.c.l.b16 %v3279
        %v3344 = vunpack.c.l.b16 %v3280
        %v3345 = vpack.c.b16 %v3342, %v3341
        %v3346 = vpack.c.b16 %v3344, %v3343
        %3349 = vmatprep.subr.bf16.mxu0 %v3310
        %3350 = vmatpush1.bf16.msra.mxu0 %v3309
        %3351 = vmatprep.subr.bf16.mxu0 %v3306
        %3352 = vmatpush1.bf16.msra.mxu0 %v3305
        %3353 = vmatprep.subr.bf16.mxu0 %v3302
        %3354 = vmatpush1.bf16.msra.mxu0 %v3301
        %3355 = vmatprep.subr.bf16.mxu0 %v3298
        %3356 = vmatpush1.bf16.msra.mxu0 %v3297
        %3357 = vmatprep.subr.bf16.mxu0 %v3294
        %3358 = vmatpush1.bf16.msra.mxu0 %v3293
        %3359 = vmatprep.subr.bf16.mxu0 %v3290
        %3360 = vmatpush1.bf16.msra.mxu0 %v3289
        %3361 = vmatprep.subr.bf16.mxu0 %v3286
        %3362 = vmatpush1.bf16.msra.mxu0 %v3285
        %3363 = vmatprep.subr.bf16.mxu0 %v3282
        %3364 = vmatpush1.bf16.msra.mxu0 %v3281
        %3365 = vmatprep.subr.bf16.mxu0 0
        %3366 = vmatpush2.bf16.msra.mxu0 0
        %3367 = vmatprep.subr.bf16.mxu0 0
        %3368 = vmatpush2.bf16.msra.mxu0 0
        %3369 = vmatprep.subr.bf16.mxu0 0
        %3370 = vmatpush2.bf16.msra.mxu0 0
        %3371 = vmatprep.subr.bf16.mxu0 0
        %3372 = vmatpush2.bf16.msra.mxu0 0
        %3373 = vmatprep.subr.bf16.mxu0 0
        %3374 = vmatpush2.bf16.msra.mxu0 0
        %3375 = vmatprep.subr.bf16.mxu0 0
        %3376 = vmatpush2.bf16.msra.mxu0 0
        %3377 = vmatprep.subr.bf16.mxu0 0
        %3378 = vmatpush2.bf16.msra.mxu0 0
        %3379 = vmatprep.subr.bf16.mxu0 0
        %3380 = vmatpush2.bf16.msra.mxu0 0
        %3381 = vmatprep.mubr.bf16.mxu0 0
        %3382 = vmatmul.mubr.bf16.gmra.mxu0 %v3345
        %v3383 = vpop.f32.mrf.mxu0
        %v3384 = vadd.f32 %v3320, %v3383
        %v3385 = vpop.f32.mrf.mxu0
        %v3386 = vadd.f32 %v3320, %v3385
        %v3387 = vpop.f32.mrf.mxu0
        %v3388 = vadd.f32 %v3325, %v3387
        %v3389 = vpop.f32.mrf.mxu0
        %v3390 = vadd.f32 %v3325, %v3389
        %3391 = vmatprep.mubr.bf16.mxu0 0
        %3392 = vmatmul.mubr.bf16.gmra.mxu0 %v3346
        %v3393 = vpop.f32.mrf.mxu0
        %v3394 = vadd.f32 %v3330, %v3393
        %v3395 = vpop.f32.mrf.mxu0
        %v3396 = vadd.f32 %v3330, %v3395
        %v3397 = vpop.f32.mrf.mxu0
        %v3398 = vadd.f32 %v3335, %v3397
        %v3399 = vpop.f32.mrf.mxu0
        %v3400 = vadd.f32 %v3335, %v3399
        %3401 = vdwg.mxu0
        %3402 = vmatprep.subr.bf16.mxu0 %v3312
        %3403 = vmatpush1.bf16.msra.mxu0 %v3311
        %3404 = vmatprep.subr.bf16.mxu0 %v3308
        %3405 = vmatpush1.bf16.msra.mxu0 %v3307
        %3406 = vmatprep.subr.bf16.mxu0 %v3304
        %3407 = vmatpush1.bf16.msra.mxu0 %v3303
        %3408 = vmatprep.subr.bf16.mxu0 %v3300
        %3409 = vmatpush1.bf16.msra.mxu0 %v3299
        %3410 = vmatprep.subr.bf16.mxu0 %v3296
        %3411 = vmatpush1.bf16.msra.mxu0 %v3295
        %3412 = vmatprep.subr.bf16.mxu0 %v3292
        %3413 = vmatpush1.bf16.msra.mxu0 %v3291
        %3414 = vmatprep.subr.bf16.mxu0 %v3288
        %3415 = vmatpush1.bf16.msra.mxu0 %v3287
        %3416 = vmatprep.subr.bf16.mxu0 %v3284
        %3417 = vmatpush1.bf16.msra.mxu0 %v3283
        %3418 = vmatprep.subr.bf16.mxu0 0
        %3419 = vmatpush2.bf16.msra.mxu0 0
        %3420 = vmatprep.subr.bf16.mxu0 0
        %3421 = vmatpush2.bf16.msra.mxu0 0
        %3422 = vmatprep.subr.bf16.mxu0 0
        %3423 = vmatpush2.bf16.msra.mxu0 0
        %3424 = vmatprep.subr.bf16.mxu0 0
        %3425 = vmatpush2.bf16.msra.mxu0 0
        %3426 = vmatprep.subr.bf16.mxu0 0
        %3427 = vmatpush2.bf16.msra.mxu0 0
        %3428 = vmatprep.subr.bf16.mxu0 0
        %3429 = vmatpush2.bf16.msra.mxu0 0
        %3430 = vmatprep.subr.bf16.mxu0 0
        %3431 = vmatpush2.bf16.msra.mxu0 0
        %3432 = vmatprep.subr.bf16.mxu0 0
        %3433 = vmatpush2.bf16.msra.mxu0 0
        %3434 = vmatprep.mubr.bf16.mxu0 0
        %3435 = vmatmul.mubr.bf16.gmra.mxu0 %v3345
        %v3436 = vpop.f32.mrf.mxu0
        %v3437 = vadd.f32 %v3320, %v3436
        %v3438 = vpop.f32.mrf.mxu0
        %v3439 = vadd.f32 %v3320, %v3438
        %v3440 = vpop.f32.mrf.mxu0
        %v3441 = vadd.f32 %v3325, %v3440
        %v3442 = vpop.f32.mrf.mxu0
        %v3443 = vadd.f32 %v3325, %v3442
        %3444 = vmatprep.mubr.bf16.mxu0 0
        %3445 = vmatmul.mubr.bf16.gmra.mxu0 %v3346
        %v3446 = vpop.f32.mrf.mxu0
        %v3447 = vadd.f32 %v3330, %v3446
        %v3448 = vpop.f32.mrf.mxu0
        %v3449 = vadd.f32 %v3330, %v3448
        %v3450 = vpop.f32.mrf.mxu0
        %v3451 = vadd.f32 %v3335, %v3450
        %v3452 = vpop.f32.mrf.mxu0
        %v3453 = vadd.f32 %v3335, %v3452
        %3454 = vdwg.mxu0
        %v3455 = vadd.f32 %v1163, %v2288
        %v3456 = vadd.f32 %v1164, %v2290
        %v3457 = vadd.f32 %v1165, %v2341
        %v3458 = vadd.f32 %v1166, %v2343
        %v3459 = vadd.f32 %v1167, %v2292
        %v3460 = vadd.f32 %v1168, %v2294
        %v3461 = vadd.f32 %v1169, %v2345
        %v3462 = vadd.f32 %v1170, %v2347
        %v3463 = vadd.f32 %v1171, %v2298
        %v3464 = vadd.f32 %v1172, %v2300
        %v3465 = vadd.f32 %v1173, %v2351
        %v3466 = vadd.f32 %v1174, %v2353
        %v3467 = vadd.f32 %v1175, %v2302
        %v3468 = vadd.f32 %v1176, %v2304
        %v3469 = vadd.f32 %v1177, %v2355
        %v3470 = vadd.f32 %v1178, %v2357
        %v3471 = vadd.f32 %v3455, %v3384
        %v3472 = vadd.f32 %v3456, %v3386
        %v3473 = vadd.f32 %v3457, %v3437
        %v3474 = vadd.f32 %v3458, %v3439
        %v3475 = vadd.f32 %v3459, %v3388
        %v3476 = vadd.f32 %v3460, %v3390
        %v3477 = vadd.f32 %v3461, %v3441
        %v3478 = vadd.f32 %v3462, %v3443
        %v3479 = vadd.f32 %v3463, %v3394
        %v3480 = vadd.f32 %v3464, %v3396
        %v3481 = vadd.f32 %v3465, %v3447
        %v3482 = vadd.f32 %v3466, %v3449
        %v3483 = vadd.f32 %v3467, %v3398
        %v3484 = vadd.f32 %v3468, %v3400
        %v3485 = vadd.f32 %v3469, %v3451
        %v3486 = vadd.f32 %v3470, %v3453
        %s3487 = smul.u32 %s44, 32
        %s3488 = scalar_lea.vmem %s5, %s3487
        %v3489 = vld [vmem:[%s3488] sm:$0xff]
        %v3490 = vld [vmem:[%s3488 + $0x8] sm:$0xff]
        %v3491 = vld [vmem:[%s3488 + $0x10] sm:$0xff]
        %v3492 = vld [vmem:[%s3488 + $0x18] sm:$0xff]
        %3494 = vset.pattern.permute.xlu0 0
        %3495 = vperm.xlu0 %3494, %v3489
        %v3496 = vpop.permute.xlu0 %3495
        %3499 = vset.pattern.permute.xlu0 0
        %3500 = vperm.xlu0 %3499, %v3490
        %v3501 = vpop.permute.xlu0 %3500
        %3504 = vset.pattern.permute.xlu0 0
        %3505 = vperm.xlu0 %3504, %v3491
        %v3506 = vpop.permute.xlu0 %3505
        %3509 = vset.pattern.permute.xlu0 0
        %3510 = vperm.xlu0 %3509, %v3492
        %v3511 = vpop.permute.xlu0 %3510
        %v3513 = vadd.f32 %v3471, %v3496
        %v3514 = vadd.f32 %v3472, %v3496
        %v3515 = vadd.f32 %v3473, %v3496
        %v3516 = vadd.f32 %v3474, %v3496
        %v3517 = vadd.f32 %v3475, %v3501
        %v3518 = vadd.f32 %v3476, %v3501
        %v3519 = vadd.f32 %v3477, %v3501
        %v3520 = vadd.f32 %v3478, %v3501
        %v3521 = vadd.f32 %v3479, %v3506
        %v3522 = vadd.f32 %v3480, %v3506
        %v3523 = vadd.f32 %v3481, %v3506
        %v3524 = vadd.f32 %v3482, %v3506
        %v3525 = vadd.f32 %v3483, %v3511
        %v3526 = vadd.f32 %v3484, %v3511
        %v3527 = vadd.f32 %v3485, %v3511
        %v3528 = vadd.f32 %v3486, %v3511
        %v3529 = vld [vmem:[%s16] sm:$0xf]
        %v3530 = vld [vmem:[%s16 + $0x4] sm:$0xf]
        %v3531 = vld [vmem:[%s16 + $0x8] sm:$0xf]
        %v3532 = vld [vmem:[%s16 + $0xc] sm:$0xf]
        %v3533 = vpack.c.bf16 %v3517, %v3513
        %v3534 = vpack.c.bf16 %v3518, %v3514
        %v3535 = vpack.c.bf16 %v3519, %v3515
        %v3536 = vpack.c.bf16 %v3520, %v3516
        %v3537 = vpack.c.bf16 %v3525, %v3521
        %v3538 = vpack.c.bf16 %v3526, %v3522
        %v3539 = vpack.c.bf16 %v3527, %v3523
        %v3540 = vpack.c.bf16 %v3528, %v3524
        %v3541 = vld [vmem:[%s17] sm:$0xff]
        %v3542 = vld [vmem:[%s17 + $0x8] sm:$0xff]
        %v3543 = vld [vmem:[%s17 + $0x10] sm:$0xff]
        %v3544 = vld [vmem:[%s17 + $0x18] sm:$0xff]
        %3546 = vset.pattern.permute.xlu0 0
        %3547 = vperm.xlu0 %3546, %v3541
        %v3548 = vpop.permute.xlu0 %3547
        %3551 = vset.pattern.permute.xlu0 0
        %3552 = vperm.xlu0 %3551, %v3542
        %v3553 = vpop.permute.xlu0 %3552
        %3556 = vset.pattern.permute.xlu0 0
        %3557 = vperm.xlu0 %3556, %v3543
        %v3558 = vpop.permute.xlu0 %3557
        %3561 = vset.pattern.permute.xlu0 0
        %3562 = vperm.xlu0 %3561, %v3544
        %v3563 = vpop.permute.xlu0 %3562
        %v3569 = vunpack.c.l.b16 %v3529
        %v3570 = vunpack.c.l.b16 %v3530
        %v3571 = vunpack.c.l.b16 %v3531
        %v3572 = vunpack.c.l.b16 %v3532
        %v3573 = vpack.c.b16 %v3570, %v3569
        %v3574 = vpack.c.b16 %v3572, %v3571
        %vm3575 = vcmask 261120
        %v3577 = vsel %vm3575, %v3573, 0
        %v3580 = vsel %vm3575, %v3574, 0
        %3582 = vmatprep.subr.bf16.mxu0 0
        %3583 = vmatpush1.bf16.msra.mxu0 0
        %3584 = vmatprep.subr.bf16.mxu0 0
        %3585 = vmatpush1.bf16.msra.mxu0 0
        %3586 = vmatprep.subr.bf16.mxu0 0
        %3587 = vmatpush1.bf16.msra.mxu0 0
        %3588 = vmatprep.subr.bf16.mxu0 0
        %3589 = vmatpush1.bf16.msra.mxu0 0
        %3590 = vmatprep.subr.bf16.mxu0 0
        %3591 = vmatpush1.bf16.msra.mxu0 0
        %3592 = vmatprep.subr.bf16.mxu0 0
        %3593 = vmatpush1.bf16.msra.mxu0 0
        %3594 = vmatprep.subr.bf16.mxu0 %v3538
        %3595 = vmatpush1.bf16.msra.mxu0 %v3537
        %3596 = vmatprep.subr.bf16.mxu0 %v3534
        %3597 = vmatpush1.bf16.msra.mxu0 %v3533
        %3598 = vmatprep.subr.bf16.mxu0 0
        %3599 = vmatpush2.bf16.msra.mxu0 0
        %3600 = vmatprep.subr.bf16.mxu0 0
        %3601 = vmatpush2.bf16.msra.mxu0 0
        %3602 = vmatprep.subr.bf16.mxu0 0
        %3603 = vmatpush2.bf16.msra.mxu0 0
        %3604 = vmatprep.subr.bf16.mxu0 0
        %3605 = vmatpush2.bf16.msra.mxu0 0
        %3606 = vmatprep.subr.bf16.mxu0 0
        %3607 = vmatpush2.bf16.msra.mxu0 0
        %3608 = vmatprep.subr.bf16.mxu0 0
        %3609 = vmatpush2.bf16.msra.mxu0 0
        %3610 = vmatprep.subr.bf16.mxu0 0
        %3611 = vmatpush2.bf16.msra.mxu0 0
        %3612 = vmatprep.subr.bf16.mxu0 0
        %3613 = vmatpush2.bf16.msra.mxu0 0
        %3614 = vmatprep.mubr.bf16.mxu0 0
        %3615 = vmatmul.mubr.bf16.gmra.mxu0 %v3577
        %v3616 = vpop.f32.mrf.mxu0
        %v3617 = vadd.f32 %v3548, %v3616
        %v3618 = vpop.f32.mrf.mxu0
        %v3619 = vadd.f32 %v3548, %v3618
        %v3620 = vpop.f32.mrf.mxu0
        %v3621 = vadd.f32 %v3553, %v3620
        %v3622 = vpop.f32.mrf.mxu0
        %v3623 = vadd.f32 %v3553, %v3622
        %3624 = vmatprep.mubr.bf16.mxu0 0
        %3625 = vmatmul.mubr.bf16.gmra.mxu0 %v3580
        %v3626 = vpop.f32.mrf.mxu0
        %v3627 = vadd.f32 %v3558, %v3626
        %v3628 = vpop.f32.mrf.mxu0
        %v3629 = vadd.f32 %v3558, %v3628
        %v3630 = vpop.f32.mrf.mxu0
        %v3631 = vadd.f32 %v3563, %v3630
        %v3632 = vpop.f32.mrf.mxu0
        %v3633 = vadd.f32 %v3563, %v3632
        %3634 = vdwg.mxu0
        %3635 = vmatprep.subr.bf16.mxu0 0
        %3636 = vmatpush1.bf16.msra.mxu0 0
        %3637 = vmatprep.subr.bf16.mxu0 0
        %3638 = vmatpush1.bf16.msra.mxu0 0
        %3639 = vmatprep.subr.bf16.mxu0 0
        %3640 = vmatpush1.bf16.msra.mxu0 0
        %3641 = vmatprep.subr.bf16.mxu0 0
        %3642 = vmatpush1.bf16.msra.mxu0 0
        %3643 = vmatprep.subr.bf16.mxu0 0
        %3644 = vmatpush1.bf16.msra.mxu0 0
        %3645 = vmatprep.subr.bf16.mxu0 0
        %3646 = vmatpush1.bf16.msra.mxu0 0
        %3647 = vmatprep.subr.bf16.mxu0 %v3540
        %3648 = vmatpush1.bf16.msra.mxu0 %v3539
        %3649 = vmatprep.subr.bf16.mxu0 %v3536
        %3650 = vmatpush1.bf16.msra.mxu0 %v3535
        %3651 = vmatprep.subr.bf16.mxu0 0
        %3652 = vmatpush2.bf16.msra.mxu0 0
        %3653 = vmatprep.subr.bf16.mxu0 0
        %3654 = vmatpush2.bf16.msra.mxu0 0
        %3655 = vmatprep.subr.bf16.mxu0 0
        %3656 = vmatpush2.bf16.msra.mxu0 0
        %3657 = vmatprep.subr.bf16.mxu0 0
        %3658 = vmatpush2.bf16.msra.mxu0 0
        %3659 = vmatprep.subr.bf16.mxu0 0
        %3660 = vmatpush2.bf16.msra.mxu0 0
        %3661 = vmatprep.subr.bf16.mxu0 0
        %3662 = vmatpush2.bf16.msra.mxu0 0
        %3663 = vmatprep.subr.bf16.mxu0 0
        %3664 = vmatpush2.bf16.msra.mxu0 0
        %3665 = vmatprep.subr.bf16.mxu0 0
        %3666 = vmatpush2.bf16.msra.mxu0 0
        %3667 = vmatprep.mubr.bf16.mxu0 0
        %3668 = vmatmul.mubr.bf16.gmra.mxu0 %v3577
        %v3669 = vpop.f32.mrf.mxu0
        %v3670 = vadd.f32 %v3548, %v3669
        %v3671 = vpop.f32.mrf.mxu0
        %v3672 = vadd.f32 %v3548, %v3671
        %v3673 = vpop.f32.mrf.mxu0
        %v3674 = vadd.f32 %v3553, %v3673
        %v3675 = vpop.f32.mrf.mxu0
        %v3676 = vadd.f32 %v3553, %v3675
        %3677 = vmatprep.mubr.bf16.mxu0 0
        %3678 = vmatmul.mubr.bf16.gmra.mxu0 %v3580
        %v3679 = vpop.f32.mrf.mxu0
        %v3680 = vadd.f32 %v3558, %v3679
        %v3681 = vpop.f32.mrf.mxu0
        %v3682 = vadd.f32 %v3558, %v3681
        %v3683 = vpop.f32.mrf.mxu0
        %v3684 = vadd.f32 %v3563, %v3683
        %v3685 = vpop.f32.mrf.mxu0
        %v3686 = vadd.f32 %v3563, %v3685
        %3687 = vdwg.mxu0
        %v3688 = vmul.f32 %v3617, %v3617
        %v3689 = vmul.f32 %v3619, %v3619
        %v3690 = vmul.f32 %v3670, %v3670
        %v3691 = vmul.f32 %v3672, %v3672
        %v3692 = vmul.f32 %v3621, %v3621
        %v3693 = vmul.f32 %v3623, %v3623
        %v3694 = vmul.f32 %v3674, %v3674
        %v3695 = vmul.f32 %v3676, %v3676
        %v3696 = vmul.f32 %v3627, %v3627
        %v3697 = vmul.f32 %v3629, %v3629
        %v3698 = vmul.f32 %v3680, %v3680
        %v3699 = vmul.f32 %v3682, %v3682
        %v3700 = vmul.f32 %v3631, %v3631
        %v3701 = vmul.f32 %v3633, %v3633
        %v3702 = vmul.f32 %v3684, %v3684
        %v3703 = vmul.f32 %v3686, %v3686
        %v3704 = vmul.f32 %v3617, %v3688
        %v3705 = vmul.f32 %v3619, %v3689
        %v3706 = vmul.f32 %v3670, %v3690
        %v3707 = vmul.f32 %v3672, %v3691
        %v3708 = vmul.f32 %v3621, %v3692
        %v3709 = vmul.f32 %v3623, %v3693
        %v3710 = vmul.f32 %v3674, %v3694
        %v3711 = vmul.f32 %v3676, %v3695
        %v3712 = vmul.f32 %v3627, %v3696
        %v3713 = vmul.f32 %v3629, %v3697
        %v3714 = vmul.f32 %v3680, %v3698
        %v3715 = vmul.f32 %v3682, %v3699
        %v3716 = vmul.f32 %v3631, %v3700
        %v3717 = vmul.f32 %v3633, %v3701
        %v3718 = vmul.f32 %v3684, %v3702
        %v3719 = vmul.f32 %v3686, %v3703
        %v3720 = vmul.f32 %v3704, 0.044715
        %v3721 = vmul.f32 %v3705, 0.044715
        %v3722 = vmul.f32 %v3706, 0.044715
        %v3723 = vmul.f32 %v3707, 0.044715
        %v3724 = vmul.f32 %v3708, 0.044715
        %v3725 = vmul.f32 %v3709, 0.044715
        %v3726 = vmul.f32 %v3710, 0.044715
        %v3727 = vmul.f32 %v3711, 0.044715
        %v3728 = vmul.f32 %v3712, 0.044715
        %v3729 = vmul.f32 %v3713, 0.044715
        %v3730 = vmul.f32 %v3714, 0.044715
        %v3731 = vmul.f32 %v3715, 0.044715
        %v3732 = vmul.f32 %v3716, 0.044715
        %v3733 = vmul.f32 %v3717, 0.044715
        %v3734 = vmul.f32 %v3718, 0.044715
        %v3735 = vmul.f32 %v3719, 0.044715
        %v3736 = vadd.f32 %v3617, %v3720
        %v3737 = vadd.f32 %v3619, %v3721
        %v3738 = vadd.f32 %v3670, %v3722
        %v3739 = vadd.f32 %v3672, %v3723
        %v3740 = vadd.f32 %v3621, %v3724
        %v3741 = vadd.f32 %v3623, %v3725
        %v3742 = vadd.f32 %v3674, %v3726
        %v3743 = vadd.f32 %v3676, %v3727
        %v3744 = vadd.f32 %v3627, %v3728
        %v3745 = vadd.f32 %v3629, %v3729
        %v3746 = vadd.f32 %v3680, %v3730
        %v3747 = vadd.f32 %v3682, %v3731
        %v3748 = vadd.f32 %v3631, %v3732
        %v3749 = vadd.f32 %v3633, %v3733
        %v3750 = vadd.f32 %v3684, %v3734
        %v3751 = vadd.f32 %v3686, %v3735
        %v3752 = vmul.f32 %v3736, 0.7978846
        %v3753 = vmul.f32 %v3737, 0.7978846
        %v3754 = vmul.f32 %v3738, 0.7978846
        %v3755 = vmul.f32 %v3739, 0.7978846
        %v3756 = vmul.f32 %v3740, 0.7978846
        %v3757 = vmul.f32 %v3741, 0.7978846
        %v3758 = vmul.f32 %v3742, 0.7978846
        %v3759 = vmul.f32 %v3743, 0.7978846
        %v3760 = vmul.f32 %v3744, 0.7978846
        %v3761 = vmul.f32 %v3745, 0.7978846
        %v3762 = vmul.f32 %v3746, 0.7978846
        %v3763 = vmul.f32 %v3747, 0.7978846
        %v3764 = vmul.f32 %v3748, 0.7978846
        %v3765 = vmul.f32 %v3749, 0.7978846
        %v3766 = vmul.f32 %v3750, 0.7978846
        %v3767 = vmul.f32 %v3751, 0.7978846
        %v3768 = vtanh.pop %v3752
        %v3769 = vtanh.pop %v3753
        %v3770 = vtanh.pop %v3754
        %v3771 = vtanh.pop %v3755
        %v3772 = vtanh.pop %v3756
        %v3773 = vtanh.pop %v3757
        %v3774 = vtanh.pop %v3758
        %v3775 = vtanh.pop %v3759
        %v3776 = vtanh.pop %v3760
        %v3777 = vtanh.pop %v3761
        %v3778 = vtanh.pop %v3762
        %v3779 = vtanh.pop %v3763
        %v3780 = vtanh.pop %v3764
        %v3781 = vtanh.pop %v3765
        %v3782 = vtanh.pop %v3766
        %v3783 = vtanh.pop %v3767
        %v3784 = vadd.f32 %v3768, 1.0
        %v3785 = vadd.f32 %v3769, 1.0
        %v3786 = vadd.f32 %v3770, 1.0
        %v3787 = vadd.f32 %v3771, 1.0
        %v3788 = vadd.f32 %v3772, 1.0
        %v3789 = vadd.f32 %v3773, 1.0
        %v3790 = vadd.f32 %v3774, 1.0
        %v3791 = vadd.f32 %v3775, 1.0
        %v3792 = vadd.f32 %v3776, 1.0
        %v3793 = vadd.f32 %v3777, 1.0
        %v3794 = vadd.f32 %v3778, 1.0
        %v3795 = vadd.f32 %v3779, 1.0
        %v3796 = vadd.f32 %v3780, 1.0
        %v3797 = vadd.f32 %v3781, 1.0
        %v3798 = vadd.f32 %v3782, 1.0
        %v3799 = vadd.f32 %v3783, 1.0
        %v3800 = vmul.f32 %v3784, 0.5
        %v3801 = vmul.f32 %v3785, 0.5
        %v3802 = vmul.f32 %v3786, 0.5
        %v3803 = vmul.f32 %v3787, 0.5
        %v3804 = vmul.f32 %v3788, 0.5
        %v3805 = vmul.f32 %v3789, 0.5
        %v3806 = vmul.f32 %v3790, 0.5
        %v3807 = vmul.f32 %v3791, 0.5
        %v3808 = vmul.f32 %v3792, 0.5
        %v3809 = vmul.f32 %v3793, 0.5
        %v3810 = vmul.f32 %v3794, 0.5
        %v3811 = vmul.f32 %v3795, 0.5
        %v3812 = vmul.f32 %v3796, 0.5
        %v3813 = vmul.f32 %v3797, 0.5
        %v3814 = vmul.f32 %v3798, 0.5
        %v3815 = vmul.f32 %v3799, 0.5
        %v3816 = vmul.f32 %v3617, %v3800
        %v3817 = vmul.f32 %v3619, %v3801
        %v3818 = vmul.f32 %v3670, %v3802
        %v3819 = vmul.f32 %v3672, %v3803
        %v3820 = vmul.f32 %v3621, %v3804
        %v3821 = vmul.f32 %v3623, %v3805
        %v3822 = vmul.f32 %v3674, %v3806
        %v3823 = vmul.f32 %v3676, %v3807
        %v3824 = vmul.f32 %v3627, %v3808
        %v3825 = vmul.f32 %v3629, %v3809
        %v3826 = vmul.f32 %v3680, %v3810
        %v3827 = vmul.f32 %v3682, %v3811
        %v3828 = vmul.f32 %v3631, %v3812
        %v3829 = vmul.f32 %v3633, %v3813
        %v3830 = vmul.f32 %v3684, %v3814
        %v3831 = vmul.f32 %v3686, %v3815
        %v3832 = vld [vmem:[%s18] sm:$0xf]
        %v3833 = vld [vmem:[%s18 + $0x4] sm:$0xf]
        %v3834 = vpack.c.bf16 %v3820, %v3816
        %v3835 = vpack.c.bf16 %v3821, %v3817
        %v3836 = vpack.c.bf16 %v3822, %v3818
        %v3837 = vpack.c.bf16 %v3823, %v3819
        %v3838 = vpack.c.bf16 %v3828, %v3824
        %v3839 = vpack.c.bf16 %v3829, %v3825
        %v3840 = vpack.c.bf16 %v3830, %v3826
        %v3841 = vpack.c.bf16 %v3831, %v3827
        %v3842 = vld [vmem:[%s19] sm:$0xff]
        %v3843 = vld [vmem:[%s19 + $0x8] sm:$0xff]
        %3845 = vset.pattern.permute.xlu0 0
        %3846 = vperm.xlu0 %3845, %v3842
        %v3847 = vpop.permute.xlu0 %3846
        %3850 = vset.pattern.permute.xlu0 0
        %3851 = vperm.xlu0 %3850, %v3843
        %v3852 = vpop.permute.xlu0 %3851
        %v3856 = vunpack.c.l.b16 %v3832
        %v3857 = vunpack.c.l.b16 %v3833
        %v3858 = vpack.c.b16 %v3857, %v3856
        %v3860 = vsel %vm3575, %v3858, 0
        %3862 = vmatprep.subr.bf16.mxu0 0
        %3863 = vmatpush1.bf16.msra.mxu0 0
        %3864 = vmatprep.subr.bf16.mxu0 0
        %3865 = vmatpush1.bf16.msra.mxu0 0
        %3866 = vmatprep.subr.bf16.mxu0 0
        %3867 = vmatpush1.bf16.msra.mxu0 0
        %3868 = vmatprep.subr.bf16.mxu0 0
        %3869 = vmatpush1.bf16.msra.mxu0 0
        %3870 = vmatprep.subr.bf16.mxu0 0
        %3871 = vmatpush1.bf16.msra.mxu0 0
        %3872 = vmatprep.subr.bf16.mxu0 0
        %3873 = vmatpush1.bf16.msra.mxu0 0
        %3874 = vmatprep.subr.bf16.mxu0 %v3839
        %3875 = vmatpush1.bf16.msra.mxu0 %v3838
        %3876 = vmatprep.subr.bf16.mxu0 %v3835
        %3877 = vmatpush1.bf16.msra.mxu0 %v3834
        %3878 = vmatprep.subr.bf16.mxu0 0
        %3879 = vmatpush2.bf16.msra.mxu0 0
        %3880 = vmatprep.subr.bf16.mxu0 0
        %3881 = vmatpush2.bf16.msra.mxu0 0
        %3882 = vmatprep.subr.bf16.mxu0 0
        %3883 = vmatpush2.bf16.msra.mxu0 0
        %3884 = vmatprep.subr.bf16.mxu0 0
        %3885 = vmatpush2.bf16.msra.mxu0 0
        %3886 = vmatprep.subr.bf16.mxu0 0
        %3887 = vmatpush2.bf16.msra.mxu0 0
        %3888 = vmatprep.subr.bf16.mxu0 0
        %3889 = vmatpush2.bf16.msra.mxu0 0
        %3890 = vmatprep.subr.bf16.mxu0 0
        %3891 = vmatpush2.bf16.msra.mxu0 0
        %3892 = vmatprep.subr.bf16.mxu0 0
        %3893 = vmatpush2.bf16.msra.mxu0 0
        %3894 = vmatprep.mubr.bf16.mxu0 0
        %3895 = vmatmul.mubr.bf16.gmra.mxu0 %v3860
        %v3896 = vpop.f32.mrf.mxu0
        %v3897 = vadd.f32 %v3847, %v3896
        %v3898 = vpop.f32.mrf.mxu0
        %v3899 = vadd.f32 %v3847, %v3898
        %v3900 = vpop.f32.mrf.mxu0
        %v3901 = vadd.f32 %v3852, %v3900
        %v3902 = vpop.f32.mrf.mxu0
        %v3903 = vadd.f32 %v3852, %v3902
        %3904 = vdwg.mxu0
        %3905 = vmatprep.subr.bf16.mxu0 0
        %3906 = vmatpush1.bf16.msra.mxu0 0
        %3907 = vmatprep.subr.bf16.mxu0 0
        %3908 = vmatpush1.bf16.msra.mxu0 0
        %3909 = vmatprep.subr.bf16.mxu0 0
        %3910 = vmatpush1.bf16.msra.mxu0 0
        %3911 = vmatprep.subr.bf16.mxu0 0
        %3912 = vmatpush1.bf16.msra.mxu0 0
        %3913 = vmatprep.subr.bf16.mxu0 0
        %3914 = vmatpush1.bf16.msra.mxu0 0
        %3915 = vmatprep.subr.bf16.mxu0 0
        %3916 = vmatpush1.bf16.msra.mxu0 0
        %3917 = vmatprep.subr.bf16.mxu0 %v3841
        %3918 = vmatpush1.bf16.msra.mxu0 %v3840
        %3919 = vmatprep.subr.bf16.mxu0 %v3837
        %3920 = vmatpush1.bf16.msra.mxu0 %v3836
        %3921 = vmatprep.subr.bf16.mxu0 0
        %3922 = vmatpush2.bf16.msra.mxu0 0
        %3923 = vmatprep.subr.bf16.mxu0 0
        %3924 = vmatpush2.bf16.msra.mxu0 0
        %3925 = vmatprep.subr.bf16.mxu0 0
        %3926 = vmatpush2.bf16.msra.mxu0 0
        %3927 = vmatprep.subr.bf16.mxu0 0
        %3928 = vmatpush2.bf16.msra.mxu0 0
        %3929 = vmatprep.subr.bf16.mxu0 0
        %3930 = vmatpush2.bf16.msra.mxu0 0
        %3931 = vmatprep.subr.bf16.mxu0 0
        %3932 = vmatpush2.bf16.msra.mxu0 0
        %3933 = vmatprep.subr.bf16.mxu0 0
        %3934 = vmatpush2.bf16.msra.mxu0 0
        %3935 = vmatprep.subr.bf16.mxu0 0
        %3936 = vmatpush2.bf16.msra.mxu0 0
        %3937 = vmatprep.mubr.bf16.mxu0 0
        %3938 = vmatmul.mubr.bf16.gmra.mxu0 %v3860
        %v3939 = vpop.f32.mrf.mxu0
        %v3940 = vadd.f32 %v3847, %v3939
        %v3941 = vpop.f32.mrf.mxu0
        %v3942 = vadd.f32 %v3847, %v3941
        %v3943 = vpop.f32.mrf.mxu0
        %v3944 = vadd.f32 %v3852, %v3943
        %v3945 = vpop.f32.mrf.mxu0
        %v3946 = vadd.f32 %v3852, %v3945
        %3947 = vdwg.mxu0
        %3948 = vst [vmem:[%s777] sm:$0xff] %v3897
        %3949 = vst [vmem:[%s777 + $0x8] sm:$0xff] %v3899
        %3950 = vst [vmem:[%s777 + $0x10] sm:$0xff] %v3940
        %3951 = vst [vmem:[%s777 + $0x18] sm:$0xff] %v3942
        %3952 = vst [vmem:[%s777 + $0x20] sm:$0xff] %v3901
        %3953 = vst [vmem:[%s777 + $0x28] sm:$0xff] %v3903
        %3954 = vst [vmem:[%s777 + $0x30] sm:$0xff] %v3944
        %3955 = vst [vmem:[%s777 + $0x38] sm:$0xff] %v3946
        %s3956 = sand.u32 %s510, 1
        %s3957 = scalar_lea.sflag [#allocation3], %s3956
        %s3958 = sand.u32 %s510, 1
        %s3959 = smul.addr %s3958, 64
        %s3960 = scalar_lea.vmem [#allocation5], %s3959
        %s3961 = sand.u32 %s538, 1
        %s3962 = scalar_lea.sflag [#allocation7], %s3961
        %s3963 = sand.u32 %s538, 1
        %s3964 = smul.addr %s3963, 64
        %s3965 = scalar_lea.vmem [#allocation6], %s3964
        // Predicated region
        $region105: #{tpu_custom_call.1} parent=99 // pred_check
          %p3966 = pneg %p520
        $region106: #{tpu_custom_call.1} parent=99 // pred_check_branch
          %3968 = sbr.rel (%p3966) target = $region108
        $region107: #{tpu_custom_call.1} parent=99 // pred_region
          %s3969 = smul.u32 4, %s45
          %s3971 = ssub.s32 1024, 1024
          %3972 = vsyncadd %s3957, %s3971
          %s3973 = smul.addr %s44, 8
          %s3974 = sadd.s32 %s3969, %s3973
          %s3975 = smul.addr %s3974, 128
          %s3976 = scalar_lea.hbm %s20, %s3975
          %s3977 = sshll.u32 %s3960, 4
          %s3978 = int_to_ptr.vmem [resolvable:$true] %s3977
          %3983 = dma.vmem_to_hbm [thread:$0]  %s3978, 1024, %s3976, %s3957, 512, 512, 32
        $region108: #{tpu_custom_call.1} parent=99 // pred_fallthru
          _
        // Predicated region
        $region109: #{tpu_custom_call.1} parent=99 // pred_check
          %p3984 = pneg %p548
        $region110: #{tpu_custom_call.1} parent=99 // pred_check_branch
          %3986 = sbr.rel (%p3984) target = $region112
        $region111: #{tpu_custom_call.1} parent=99 // pred_region
          %s3987 = smul.u32 4, %s45
          %s3989 = ssub.s32 1024, 1024
          %3990 = vsyncadd %s3962, %s3989
          %s3991 = smul.addr %s44, 8
          %s3992 = sadd.s32 %s3987, %s3991
          %s3993 = smul.addr %s3992, 128
          %s3994 = scalar_lea.hbm %s21, %s3993
          %s3995 = sshll.u32 %s3965, 4
          %s3996 = int_to_ptr.vmem [resolvable:$true] %s3995
          %4001 = dma.vmem_to_hbm [thread:$0]  %s3996, 1024, %s3994, %s3962, 512, 512, 32
        $region112: #{tpu_custom_call.1} parent=99 // pred_fallthru
          _
      $region100: #{tpu_custom_call.1} parent=5 // pred_fallthru
        _
      %p4002 = scmp.le.s32.totalorder 2, %s35
      // Predicated region
      $region113: #{tpu_custom_call.1} parent=5 // pred_check
        %p4003 = pneg %p4002
      $region114: #{tpu_custom_call.1} parent=5 // pred_check_branch
        %4005 = sbr.rel (%p4003) target = $region116
      $region115: #{tpu_custom_call.1} parent=5 // pred_region
        %s4006 = ssub.s32 %s35, 2
        // Predicated region
        $region117: #{tpu_custom_call.1} parent=115 // pred_check
          %p4007 = pneg %p526
        $region118: #{tpu_custom_call.1} parent=115 // pred_check_branch
          %4009 = sbr.rel (%p4007) target = $region120
        $region119: #{tpu_custom_call.1} parent=115 // pred_region
          %s4010 = sand.u32 %s511, 1
          %s4011 = scalar_lea.sflag [#allocation3], %s4010
          %s4012 = sand.u32 %s511, 1
          %s4013 = smul.addr %s4012, 64
          %s4014 = scalar_lea.vmem [#allocation5], %s4013
          %4015 = dma.done %s4011, 1024
        $region120: #{tpu_custom_call.1} parent=115 // pred_fallthru
          _
        // Predicated region
        $region121: #{tpu_custom_call.1} parent=115 // pred_check
          %p4016 = pneg %p554
        $region122: #{tpu_custom_call.1} parent=115 // pred_check_branch
          %4018 = sbr.rel (%p4016) target = $region124
        $region123: #{tpu_custom_call.1} parent=115 // pred_region
          %s4019 = sand.u32 %s539, 1
          %s4020 = scalar_lea.sflag [#allocation7], %s4019
          %s4021 = sand.u32 %s539, 1
          %s4022 = smul.addr %s4021, 64
          %s4023 = scalar_lea.vmem [#allocation6], %s4022
          %4024 = dma.done %s4020, 1024
        $region124: #{tpu_custom_call.1} parent=115 // pred_fallthru
          _
      $region116: #{tpu_custom_call.1} parent=5 // pred_fallthru
        _
    $region6: #{tpu_custom_call.1} parent=1 // loop_footer
      %s39 = sadd.s32 1, %s35
    $region7: #{tpu_custom_call.1} parent=1 // loop_footer_branch
      %34 = sbr.rel target = $region3
    $region8: #{tpu_custom_call.1} parent=1 // loop_exit
      _
    %4025 = vsyncpa [#allocation3], 1
    %s4026 = scalar_lea.sflag [#allocation3], 1
    %4027 = vsyncpa %s4026, 1
    %4028 = vsyncpa [#allocation7], 1
    %s4029 = scalar_lea.sflag [#allocation7], 1
    %4030 = vsyncpa %s4029, 1
    %4031 = vsyncpa [#allocation4], 1
    %s4032 = scalar_lea.sflag [#allocation4], 1
    %4033 = vsyncpa %s4032, 1

</llo_original>
